<compile_context>
chip_gen: v7x
topology: tpu7x:2x2x1
jax: 0.10.0
libtpu: 0.0.40
codegen_flags: <defaults>
</compile_context>

<pallas_src>
import functools

import numpy as np
import jax
import jax.numpy as jnp
from jax import lax
from jax.experimental import pallas as pl
from jax.experimental.pallas import tpu as pltpu

PAD = 0
LN_EPS = 1e-5
NEG_INF = -1e9
APPROX_SOFTMAX_RECIP = True   # set False for an exact-divide softmax (bit-level validation)


# ----------------------------- kernel helpers -------------------------------- #

def _layer_norm(y, ln):
    """LayerNorm(eps=1e-5) with gamma=ln[0], beta=ln[1] (each (1, Dm))."""
    g = ln[0:1]
    b = ln[1:2]
    mean = jnp.mean(y, axis=-1, keepdims=True)
    var = jnp.mean(jnp.square(y - mean), axis=-1, keepdims=True)
    return (y - mean) * lax.rsqrt(var + LN_EPS) * g + b


def _softmax(s):
    s = s - jnp.max(s, axis=-1, keepdims=True)
    e = jnp.exp(s)
    d = jnp.sum(e, axis=-1, keepdims=True)
    if APPROX_SOFTMAX_RECIP:
        return e * pl.reciprocal(d, approx=True)     # EUP slot
    return e / d


def _attend_row(q_r, k_r, v_r, bias_r, *, n_head, d_k, d_v):
    """Multi-head attention for one batch row.

    q_r (Lq, H*dk), k_r (Lk, H*dk), v_r (Lk, H*dv) in head-major lane layout; bias_r additive
    ((Lq or 1), Lk).  Returns head-concatenated context (Lq, H*dv) — the output projection is done
    once, outside, over all rows and heads.
    """
    inv_temp = 1.0 / float(np.sqrt(d_k))
    heads = []
    for h in range(n_head):
        qh = q_r[:, h * d_k:(h + 1) * d_k]
        kh = k_r[:, h * d_k:(h + 1) * d_k]
        vh = v_r[:, h * d_v:(h + 1) * d_v]
        s = lax.dot_general(qh, kh, (((1,), (1,)), ((), ())),
                            preferred_element_type=jnp.float32) * inv_temp + bias_r
        p = _softmax(s)
        heads.append(jnp.dot(p.astype(jnp.bfloat16), vh.astype(jnp.bfloat16),
                             preferred_element_type=jnp.float32))
    return jnp.concatenate(heads, axis=-1)


# ----------------------------- Pallas kernel -------------------------------- #

def _decoder_kernel(dec_in_ref, enc_kv_ref, tgt_kpad_ref, src_kpad_ref, npm_ref,
                    s_wqkv_ref, s_wo_ref, e_wq_ref, e_wkv_ref, e_wo_ref,
                    f_w1_ref, f_w2_ref, small_ref, sel_ref,
                    out_ref, x_sc,
                    *, n_head, d_k, d_v, d_model, d_inner, pool, bb, lq):
    """One grid step = one decoder layer applied to a block of `bb` batch rows."""
    l = pl.program_id(1)
    n_layer = pl.num_programs(1)
    H, dk, dv, Dm, Di = n_head, d_k, d_v, d_model, d_inner
    bf16 = jnp.bfloat16

    @pl.when(l == 0)
    def _():
        # flatten (bb, Lq, Dm) -> (bb*Lq, Dm) via a layout-trivial sublane concat (no reshape)
        x_sc[...] = jnp.concatenate([dec_in_ref[r] for r in range(bb)], axis=0)

    x = x_sc[...]                                                      # (bb*Lq, Dm) f32
    npm = jnp.concatenate([npm_ref[r] for r in range(bb)], axis=0)     # (bb*Lq, 1)

    # coalesced per-layer bias / LayerNorm slab (one DMA)
    sm = small_ref[0]                                                  # (13, W) f32
    s_bqkv = sm[0:1, :H * (2 * dk + dv)]
    s_bo, s_ln = sm[1:2, :Dm], sm[2:4, :Dm]
    e_bq = sm[4:5, :H * dk]
    e_bkv = sm[5:6, :H * (dk + dv)]
    e_bo, e_ln = sm[6:7, :Dm], sm[7:9, :Dm]
    f_b1 = sm[9:10, :Di]
    f_b2, f_ln = sm[10:11, :Dm], sm[11:13, :Dm]

    # causal (subsequent-position) additive bias generated in-kernel (never streamed from HBM)
    rows = lax.broadcasted_iota(jnp.int32, (lq, lq), 0)
    cols = lax.broadcasted_iota(jnp.int32, (lq, lq), 1)
    causal = jnp.where(cols > rows, NEG_INF, 0.0)

    attend = functools.partial(_attend_row, n_head=H, d_k=dk, d_v=dv)

    # --- masked self-attention + residual + LayerNorm + non-pad mask ---
    qkv = jnp.dot(x.astype(bf16), s_wqkv_ref[0],
                  preferred_element_type=jnp.float32) + s_bqkv         # (bb*Lq, H*(2dk+dv))
    tgt_kpad = tgt_kpad_ref[...]                                       # (bb, 1, Lq) additive
    ctx = []
    for r in range(bb):
        sl = slice(r * lq, (r + 1) * lq)
        ctx.append(attend(qkv[sl, :H * dk],
                          qkv[sl, H * dk:2 * H * dk],
                          qkv[sl, 2 * H * dk:],
                          causal + tgt_kpad[r]))
    ctx = jnp.concatenate(ctx, axis=0)                                 # (bb*Lq, H*dv)
    a = jnp.dot(ctx.astype(bf16), s_wo_ref[0], preferred_element_type=jnp.float32) + s_bo
    x = _layer_norm(a + x, s_ln) * npm

    # --- encoder-decoder attention (keys/values include feature embeddings) ---
    q_all = jnp.dot(x.astype(bf16), e_wq_ref[0],
                    preferred_element_type=jnp.float32) + e_bq         # (bb*Lq, H*dk)
    src_kpad = src_kpad_ref[...]                                       # (bb, 1, Ls) additive
    ctx = []
    for r in range(bb):
        kvp = jnp.dot(enc_kv_ref[r].astype(bf16), e_wkv_ref[0],
                      preferred_element_type=jnp.float32) + e_bkv      # (Ls, H*(dk+dv))
        ctx.append(attend(q_all[r * lq:(r + 1) * lq, :],
                          kvp[:, :H * dk], kvp[:, H * dk:],
                          src_kpad[r]))
    ctx = jnp.concatenate(ctx, axis=0)
    a = jnp.dot(ctx.astype(bf16), e_wo_ref[0], preferred_element_type=jnp.float32) + e_bo
    x = _layer_norm(a + x, e_ln) * npm

    # --- position-wise FFN (conv1d k=1 == matmul) + residual + LayerNorm + non-pad mask ---
    h1 = jnp.maximum(jnp.dot(x.astype(bf16), f_w1_ref[0],
                             preferred_element_type=jnp.float32) + f_b1, 0.0)
    o = jnp.dot(h1.astype(bf16), f_w2_ref[0], preferred_element_type=jnp.float32) + f_b2
    x = _layer_norm(o + x, f_ln) * npm

    x_sc[...] = x

    # --- final MaxOut fused into the last layer's epilogue (exact f32 selection matmuls) ---
    @pl.when(l == n_layer - 1)
    def _():
        m = jnp.dot(x, sel_ref[0], preferred_element_type=jnp.float32)
        for p in range(1, pool):
            m = jnp.maximum(m, jnp.dot(x, sel_ref[p], preferred_element_type=jnp.float32))
        for r in range(bb):
            out_ref[r] = m[r * lq:(r + 1) * lq, :]
        # note: at production sizes Do = d_model // pool >= 128, so this store is lane-dense.


# ----------------------------- Pallas wrapper ------------------------------- #

def _pick_batch_block(B, Lq, max_rows=512):
    """Largest batch block that divides B, keeps >= 2 batch-grid steps (v7x megacore),
    keeps bb*Lq rows within a VMEM-friendly cap, and keeps the in-kernel sublane concats
    tile-aligned (Lq % 8 == 0 required for bb > 1)."""
    best = 1
    for d in range(1, B + 1):
        if B % d != 0:
            continue
        if d > 1 and Lq % 8 != 0:
            continue
        if d * Lq > max_rows:
            continue
        if B >= 2 and B // d < 2:
            continue
        best = d
    return best


def fused_transf_decoder(dec_in, enc_kv, tgt_kpad, src_kpad, npm, stacked, maxout_sel, cfg):
    B, Lq, Dm = dec_in.shape
    Ls, Dkv = enc_kv.shape[1], enc_kv.shape[2]
    NL = cfg['n_layer']
    H, dk, dv, Di = cfg['n_head'], cfg['d_k'], cfg['d_v'], cfg['d_inner']
    pool = cfg['maxout_pool_size']
    Do = Dm // pool
    Bb = _pick_batch_block(B, Lq)
    (s_wqkv, s_wo, e_wq, e_wkv, e_wo, f_w1, f_w2, small) = stacked

    act = lambda bc, l: (bc, 0, 0)     # per-batch-chunk blocks, constant across layers (resident)
    lyr = lambda bc, l: (l, 0, 0)      # per-layer stacked weight blocks
    cst = lambda bc, l: (0, 0, 0)      # whole-array resident blocks

    # explicit VMEM budget: double-buffered per-layer weights (bf16) + per-step activation blocks,
    # ~2x headroom, clamped so it stays inside v7x's 64 MiB/TC (128 MiB on v5e/v6e).
    wq_w, kv_w = H * (2 * dk + dv), H * (dk + dv)
    per_layer_w = 2 * (Dm * wq_w + H * dv * Dm + Dm * H * dk + Dkv * kv_w + H * dv * Dm
                       + Dm * Di + Di * Dm) + 4 * small.shape[1] * small.shape[2]
    per_step_act = 4 * Bb * (Lq * Dm + Ls * Dkv + Lq + Ls + Lq + Lq * Do)
    resident = 4 * (pool * Dm * Do + Bb * Lq * Dm)
    vmem_need = 2 * (per_layer_w + per_step_act) + resident
    vmem_limit = int(min(max(2 * vmem_need, 32 * 1024 * 1024), 60 * 1024 * 1024))

    kernel = functools.partial(_decoder_kernel, n_head=H, d_k=dk, d_v=dv,
                               d_model=Dm, d_inner=Di, pool=pool, bb=Bb, lq=Lq)
    return pl.pallas_call(
        kernel,
        out_shape=jax.ShapeDtypeStruct((B, Lq, Do), jnp.float32),
        grid=(B // Bb, NL),
        in_specs=[
            pl.BlockSpec((Bb, Lq, Dm), act),                    # dec_in (word + pos emb)
            pl.BlockSpec((Bb, Ls, Dkv), act),                   # enc_kv (enc out + feat emb)
            pl.BlockSpec((Bb, 1, Lq), act),                     # tgt key-pad additive bias
            pl.BlockSpec((Bb, 1, Ls), act),                     # src key-pad additive bias
            pl.BlockSpec((Bb, Lq, 1), act),                     # non-pad mask
            pl.BlockSpec((1, Dm, wq_w), lyr),                   # slf fused Wqkv (bf16)
            pl.BlockSpec((1, H * dv, Dm), lyr),                 # slf Wo (bf16)
            pl.BlockSpec((1, Dm, H * dk), lyr),                 # enc Wq (bf16)
            pl.BlockSpec((1, Dkv, kv_w), lyr),                  # enc fused Wkv (bf16)
            pl.BlockSpec((1, H * dv, Dm), lyr),                 # enc Wo (bf16)
            pl.BlockSpec((1, Dm, Di), lyr),                     # ffn W1 (bf16)
            pl.BlockSpec((1, Di, Dm), lyr),                     # ffn W2 (bf16)
            pl.BlockSpec((1, small.shape[1], small.shape[2]), lyr),  # coalesced biases + LN
            pl.BlockSpec((pool, Dm, Do), cst),                  # maxout selection matrices
        ],
        out_specs=pl.BlockSpec((Bb, Lq, Do), act),
        scratch_shapes=[pltpu.VMEM((Bb * Lq, Dm), jnp.float32)],   # running activation
        compiler_params=pltpu.CompilerParams(
            dimension_semantics=("parallel", "arbitrary"),
            vmem_limit_bytes=vmem_limit),
    )(dec_in, enc_kv, tgt_kpad, src_kpad, npm,
      s_wqkv, s_wo, e_wq, e_wkv, e_wo, f_w1, f_w2, small, maxout_sel)


# ----------------------------- Parameter setup ------------------------------ #

def get_sinusoid_encoding_table(n_position, d_hid, padding_idx=None):
    position = np.arange(n_position)[:, None].astype(np.float64)
    hid = np.arange(d_hid)[None, :]
    angle = position / np.power(10000, 2 * (hid // 2) / d_hid)
    table = np.zeros((n_position, d_hid), np.float32)
    table[:, 0::2] = np.sin(angle[:, 0::2])
    table[:, 1::2] = np.cos(angle[:, 1::2])
    if padding_idx is not None:
        table[padding_idx] = 0.0
    return jnp.asarray(table)


def init_mha_params(key, d_q_in, d_kv_in, d_model, n_head, d_k, d_v):
    ks = jax.random.split(key, 8)

    def n(k, shape, fan_in):
        return (1.0 / np.sqrt(fan_in)) * jax.random.normal(k, shape, jnp.float32)

    return {
        'wq': n(ks[0], (n_head, d_q_in, d_k), d_q_in),
        'bq': 0.01 * jax.random.normal(ks[1], (n_head, 1, d_k), dtype=jnp.float32),
        'wk': n(ks[2], (n_head, d_kv_in, d_k), d_kv_in),
        'bk': 0.01 * jax.random.normal(ks[3], (n_head, 1, d_k), dtype=jnp.float32),
        'wv': n(ks[4], (n_head, d_kv_in, d_v), d_kv_in),
        'bv': 0.01 * jax.random.normal(ks[5], (n_head, 1, d_v), dtype=jnp.float32),
        'wfc': n(ks[6], (n_head * d_v, d_model), n_head * d_v),
        'bfc': 0.01 * jax.random.normal(ks[7], (1, d_model), dtype=jnp.float32),
        'ln_g': jnp.ones((1, d_model), jnp.float32),
        'ln_b': jnp.zeros((1, d_model), jnp.float32),
    }


def init_ffn_params(key, d_model, d_inner):
    ks = jax.random.split(key, 4)
    return {
        'w1': (1.0 / np.sqrt(d_model)) * jax.random.normal(ks[0], (d_model, d_inner), jnp.float32),
        'b1': 0.01 * jax.random.normal(ks[1], (1, d_inner), dtype=jnp.float32),
        'w2': (1.0 / np.sqrt(d_inner)) * jax.random.normal(ks[2], (d_inner, d_model), jnp.float32),
        'b2': 0.01 * jax.random.normal(ks[3], (1, d_model), dtype=jnp.float32),
        'ln_g': jnp.ones((1, d_model), jnp.float32),
        'ln_b': jnp.zeros((1, d_model), jnp.float32),
    }


def _pack_layer_stack(layers):
    """Fuse per-head weights lane-dense, stack over layers (bf16), and coalesce all small
    per-layer tensors (biases + LayerNorm params) into one f32 (n_layer, 13, W) slab."""
    def fuse_w(*ws):                      # each (H, Din, d) -> (Din, H*d), concat over tensors
        parts = []
        for w in ws:
            H, Din, d = w.shape
            parts.append(jnp.transpose(w, (1, 0, 2)).reshape(Din, H * d))
        return jnp.concatenate(parts, axis=-1)

    def fuse_b(*bs):                      # each (H, 1, d) -> (1, H*d), concat over tensors
        parts = []
        for b in bs:
            H, _, d = b.shape
            parts.append(jnp.transpose(b, (1, 0, 2)).reshape(1, H * d))
        return jnp.concatenate(parts, axis=-1)

    wqkv, wo_s, wq_e, wkv_e, wo_e, w1, w2, small = [], [], [], [], [], [], [], []
    for layer in layers:
        slf, enc, ffn = layer['slf'], layer['enc'], layer['ffn']
        wqkv.append(fuse_w(slf['wq'], slf['wk'], slf['wv']))
        wo_s.append(slf['wfc'])
        wq_e.append(fuse_w(enc['wq']))
        wkv_e.append(fuse_w(enc['wk'], enc['wv']))
        wo_e.append(enc['wfc'])
        w1.append(ffn['w1'])
        w2.append(ffn['w2'])
        rows = [fuse_b(slf['bq'], slf['bk'], slf['bv']),            # 0  s_bqkv
                slf['bfc'], slf['ln_g'], slf['ln_b'],               # 1-3
                fuse_b(enc['bq']),                                  # 4  e_bq
                fuse_b(enc['bk'], enc['bv']),                       # 5  e_bkv
                enc['bfc'], enc['ln_g'], enc['ln_b'],               # 6-8
                ffn['b1'], ffn['b2'], ffn['ln_g'], ffn['ln_b']]     # 9-12
        W = max(r.shape[-1] for r in rows)
        small.append(jnp.concatenate(
            [jnp.pad(r, ((0, 0), (0, W - r.shape[-1]))) for r in rows], axis=0))

    wstack = lambda xs: jnp.stack(xs, axis=0).astype(jnp.bfloat16)
    return (wstack(wqkv), wstack(wo_s), wstack(wq_e), wstack(wkv_e), wstack(wo_e),
            wstack(w1), wstack(w2), jnp.stack(small, axis=0).astype(jnp.float32))


def init_params(key, cfg):
    d_model = cfg['d_model']
    d_feat = len(cfg['feat_vocab']) * cfg['d_feat_vec'] if cfg['feature'] else 0
    keys = jax.random.split(key, 2 + cfg['n_layer'])

    word_emb = 0.1 * jax.random.normal(keys[0], (cfg['n_vocab'], cfg['d_word_vec']), jnp.float32)
    word_emb = word_emb.at[PAD].set(0.0)
    pos_table = get_sinusoid_encoding_table(cfg['len_max_seq'] + 5, cfg['d_word_vec'],
                                            padding_idx=PAD)

    feat_embs = []
    if cfg['feature']:
        fkeys = jax.random.split(keys[1], len(cfg['feat_vocab']))
        for fk, nv in zip(fkeys, cfg['feat_vocab']):
            e = 0.1 * jax.random.normal(fk, (nv, cfg['d_feat_vec']), jnp.float32)
            feat_embs.append(e.at[PAD].set(0.0))

    layers = []
    for li in range(cfg['n_layer']):
        lk = jax.random.split(keys[2 + li], 3)
        layers.append({
            'slf': init_mha_params(lk[0], d_model, d_model, d_model,
                                   cfg['n_head'], cfg['d_k'], cfg['d_v']),
            'enc': init_mha_params(lk[1], d_model, d_model + d_feat, d_model,
                                   cfg['n_head'], cfg['d_k'], cfg['d_v']),
            'ffn': init_ffn_params(lk[2], d_model, cfg['d_inner']),
        })

    pool = cfg['maxout_pool_size']
    sel = np.zeros((pool, d_model, d_model // pool), np.float32)
    for p in range(pool):
        sel[p, np.arange(d_model // pool) * pool + p, np.arange(d_model // pool)] = 1.0

    return {'word_emb': word_emb, 'pos_table': pos_table, 'feat_embs': feat_embs,
            'stacked': _pack_layer_stack(layers), 'maxout_sel': jnp.asarray(sel)}


# ------------------------------- Forward pass ------------------------------- #

def transf_decoder_forward(params, cfg, tgt_seq, tgt_pos, feat_seqs, src_seq, enc_output):
    f32 = jnp.float32

    # masks: only compressed per-row key-pad additive biases are streamed; the causal
    # (subsequent-position) mask is generated inside the kernel with broadcasted_iota.
    non_pad_mask = (tgt_seq != PAD).astype(f32)[:, :, None]                     # (B, Lq, 1)
    tgt_kpad = jnp.where(tgt_seq == PAD, NEG_INF, 0.0).astype(f32)[:, None, :]  # (B, 1, Lq)
    src_kpad = jnp.where(src_seq == PAD, NEG_INF, 0.0).astype(f32)[:, None, :]  # (B, 1, Ls)

    # TODO(synk): layer_attn=True branch (stack enc layer outputs, tile src mask) not implemented.

    # feature embeddings concatenated to the encoder output (enc-dec attn keys/values)
    if cfg['feature']:
        feat_inputs = jnp.concatenate(
            [params['feat_embs'][i][feat_seqs[i]] for i in range(len(feat_seqs))], axis=2)
        enc_kv = jnp.concatenate([enc_output, feat_inputs], axis=2)
    else:
        enc_kv = enc_output

    # word + positional embeddings (glue gathers)
    dec_in = params['word_emb'][tgt_seq] + params['pos_table'][tgt_pos]

    # fused decoder stack + maxout (single Pallas kernel)
    pred = fused_transf_decoder(dec_in, enc_kv, tgt_kpad, src_kpad, non_pad_mask,
                                params['stacked'], params['maxout_sel'], cfg)
    return {'pred': pred}


# ----------------------------------- main ----------------------------------- #

if __name__ == "__main__":
    cfg = dict(n_vocab=50, len_max_seq=20, d_word_vec=32, d_model=32, n_layer=2,
               d_inner=64, n_head=4, d_k=8, d_v=8, layer_attn=False, n_enc_layer=1,
               feat_vocab=[7, 5], d_feat_vec=8, maxout_pool_size=2, dropout=0.1)
    cfg['feature'] = bool(cfg['feat_vocab'])

    key = jax.random.PRNGKey(0)
    pkey, dkey = jax.random.split(key)
    params = init_params(pkey, cfg)

    B, Lq, Ls = 4, 8, 10          # B=4 exercises the batch-block path (Bb=2, batch grid=2)
    k1, k2, k3, k4 = jax.random.split(dkey, 4)

    # target sequence with a padded tail; positions are 1..len then 0 (PAD)
    tgt_len = jnp.array([8, 6, 7, 5])
    qpos = jnp.arange(1, Lq + 1)[None, :]
    qvalid = qpos <= tgt_len[:, None]
    tgt_seq = jnp.where(qvalid, jax.random.randint(k1, (B, Lq), 1, cfg['n_vocab']), 0).astype(jnp.int32)
    tgt_pos = jnp.where(qvalid, qpos, 0).astype(jnp.int32)

    # source sequence with a padded tail
    src_len = jnp.array([10, 7, 9, 10])
    spos = jnp.arange(1, Ls + 1)[None, :]
    svalid = spos <= src_len[:, None]
    src_seq = jnp.where(svalid, jax.random.randint(k2, (B, Ls), 1, cfg['n_vocab']), 0).astype(jnp.int32)

    enc_output = jax.random.normal(k3, (B, Ls, cfg['d_model']), jnp.float32)
    fkeys = jax.random.split(k4, len(cfg['feat_vocab']))
    feat_seqs = [jnp.where(svalid, jax.random.randint(fk, (B, Ls), 1, nv), 0).astype(jnp.int32)
                 for fk, nv in zip(fkeys, cfg['feat_vocab'])]

    fwd = jax.jit(lambda p, ts, tp, fs, ss, eo: transf_decoder_forward(p, cfg, ts, tp, fs, ss, eo))
    out = fwd(params, tgt_seq, tgt_pos, feat_seqs, src_seq, enc_output)
    pred = jax.block_until_ready(out['pred'])
    assert pred.shape == (B, Lq, cfg['d_model'] // cfg['maxout_pool_size'])
    assert bool(jnp.all(jnp.isfinite(pred)))
    print("KERNEL_OK")
</pallas_src>

<mosaic_0001>
module attributes {stable_mosaic.version = 11 : i64} {
  func.func @_decoder_kernel(%arg0: i32, %arg1: i32, %arg2: memref<2x8x32xf32, #tpu.memory_space<vmem>>, %arg3: memref<2x10x48xf32, #tpu.memory_space<vmem>>, %arg4: memref<2x1x8xf32, #tpu.memory_space<vmem>>, %arg5: memref<2x1x10xf32, #tpu.memory_space<vmem>>, %arg6: memref<2x8x1xf32, #tpu.memory_space<vmem>>, %arg7: memref<1x32x96xbf16, #tpu.memory_space<vmem>>, %arg8: memref<1x32x32xbf16, #tpu.memory_space<vmem>>, %arg9: memref<1x32x32xbf16, #tpu.memory_space<vmem>>, %arg10: memref<1x48x64xbf16, #tpu.memory_space<vmem>>, %arg11: memref<1x32x32xbf16, #tpu.memory_space<vmem>>, %arg12: memref<1x32x64xbf16, #tpu.memory_space<vmem>>, %arg13: memref<1x64x32xbf16, #tpu.memory_space<vmem>>, %arg14: memref<1x13x96xf32, #tpu.memory_space<vmem>>, %arg15: memref<2x32x16xf32, #tpu.memory_space<vmem>>, %arg16: memref<2x8x16xf32, #tpu.memory_space<vmem>>, %arg17: memref<16x32xf32, #tpu.memory_space<vmem>>) attributes {dimension_semantics = [#tpu.dimension_semantics<parallel>, #tpu.dimension_semantics<arbitrary>], iteration_bounds = array<i64: 2, 2>, scalar_prefetch = 0 : i64, scratch_operands = 1 : i64, tpu.core_type = #tpu.core_type<tc>, window_params = [{transform_indices = @transform_0, window_bounds = array<i64: 2, 8, 32>}, {transform_indices = @transform_1, window_bounds = array<i64: 2, 10, 48>}, {transform_indices = @transform_2, window_bounds = array<i64: 2, 1, 8>}, {transform_indices = @transform_3, window_bounds = array<i64: 2, 1, 10>}, {transform_indices = @transform_4, window_bounds = array<i64: 2, 8, 1>}, {transform_indices = @transform_5, window_bounds = array<i64: 1, 32, 96>}, {transform_indices = @transform_6, window_bounds = array<i64: 1, 32, 32>}, {transform_indices = @transform_7, window_bounds = array<i64: 1, 32, 32>}, {transform_indices = @transform_8, window_bounds = array<i64: 1, 48, 64>}, {transform_indices = @transform_9, window_bounds = array<i64: 1, 32, 32>}, {transform_indices = @transform_10, window_bounds = array<i64: 1, 32, 64>}, {transform_indices = @transform_11, window_bounds = array<i64: 1, 64, 32>}, {transform_indices = @transform_12, window_bounds = array<i64: 1, 13, 96>}, {pipeline_mode = #tpu.pipeline_mode<synchronous>, transform_indices = @transform_13, window_bounds = array<i64: 2, 32, 16>}, {transform_indices = @transform_14, window_bounds = array<i64: 2, 8, 16>}]} {
    %c0_i32 = arith.constant 0 : i32
    %0 = arith.cmpi eq, %arg1, %c0_i32 : i32
    %1 = arith.extui %0 : i1 to i32
    %c0_i32_0 = arith.constant 0 : i32
    %2 = arith.cmpi ne, %1, %c0_i32_0 : i32
    scf.if %2 {
      %c0_154 = arith.constant 0 : index
      %c0_155 = arith.constant 0 : index
      %c0_156 = arith.constant 0 : index
      %526 = vector.load %arg2[%c0_154, %c0_155, %c0_156] : memref<2x8x32xf32, #tpu.memory_space<vmem>>, vector<1x8x32xf32>
      %527 = vector.shape_cast %526 : vector<1x8x32xf32> to vector<8x32xf32>
      %c1_157 = arith.constant 1 : index
      %c0_158 = arith.constant 0 : index
      %c0_159 = arith.constant 0 : index
      %528 = vector.load %arg2[%c1_157, %c0_158, %c0_159] : memref<2x8x32xf32, #tpu.memory_space<vmem>>, vector<1x8x32xf32>
      %529 = vector.shape_cast %528 : vector<1x8x32xf32> to vector<8x32xf32>
      %530 = tpu.concatenate %527, %529 in 0 : vector<8x32xf32>, vector<8x32xf32> -> vector<16x32xf32>
      %c0_160 = arith.constant 0 : index
      %c0_161 = arith.constant 0 : index
      %531 = vector.load %arg17[%c0_160, %c0_161] : memref<16x32xf32, #tpu.memory_space<vmem>>, vector<16x32xf32>
      tpu.vector_store %arg17[%c0_160, %c0_161], %530 {strides = array<i32>} : memref<16x32xf32, #tpu.memory_space<vmem>>, vector<16x32xf32>,
    } else {
    }
    %c0 = arith.constant 0 : index
    %c0_1 = arith.constant 0 : index
    %3 = vector.load %arg17[%c0, %c0_1] : memref<16x32xf32, #tpu.memory_space<vmem>>, vector<16x32xf32>
    %c0_2 = arith.constant 0 : index
    %c0_3 = arith.constant 0 : index
    %c0_4 = arith.constant 0 : index
    %4 = vector.load %arg6[%c0_2, %c0_3, %c0_4] : memref<2x8x1xf32, #tpu.memory_space<vmem>>, vector<1x8x1xf32>
    %5 = vector.shape_cast %4 : vector<1x8x1xf32> to vector<8x1xf32>
    %c1 = arith.constant 1 : index
    %c0_5 = arith.constant 0 : index
    %c0_6 = arith.constant 0 : index
    %6 = vector.load %arg6[%c1, %c0_5, %c0_6] : memref<2x8x1xf32, #tpu.memory_space<vmem>>, vector<1x8x1xf32>
    %7 = vector.shape_cast %6 : vector<1x8x1xf32> to vector<8x1xf32>
    %8 = tpu.concatenate %5, %7 in 0 : vector<8x1xf32>, vector<8x1xf32> -> vector<16x1xf32>
    %c0_7 = arith.constant 0 : index
    %c0_8 = arith.constant 0 : index
    %c0_9 = arith.constant 0 : index
    %9 = vector.load %arg14[%c0_7, %c0_8, %c0_9] : memref<1x13x96xf32, #tpu.memory_space<vmem>>, vector<1x13x96xf32>
    %10 = vector.shape_cast %9 : vector<1x13x96xf32> to vector<13x96xf32>
    %11 = vector.extract_strided_slice %10 {offsets = [0, 0], sizes = [1, 96], strides = [1, 1]} : vector<13x96xf32> to vector<1x96xf32>
    %12 = vector.extract_strided_slice %10 {offsets = [1, 0], sizes = [1, 32], strides = [1, 1]} : vector<13x96xf32> to vector<1x32xf32>
    %13 = vector.extract_strided_slice %10 {offsets = [2, 0], sizes = [2, 32], strides = [1, 1]} : vector<13x96xf32> to vector<2x32xf32>
    %14 = vector.extract_strided_slice %10 {offsets = [4, 0], sizes = [1, 32], strides = [1, 1]} : vector<13x96xf32> to vector<1x32xf32>
    %15 = vector.extract_strided_slice %10 {offsets = [5, 0], sizes = [1, 64], strides = [1, 1]} : vector<13x96xf32> to vector<1x64xf32>
    %16 = vector.extract_strided_slice %10 {offsets = [6, 0], sizes = [1, 32], strides = [1, 1]} : vector<13x96xf32> to vector<1x32xf32>
    %17 = vector.extract_strided_slice %10 {offsets = [7, 0], sizes = [2, 32], strides = [1, 1]} : vector<13x96xf32> to vector<2x32xf32>
    %18 = vector.extract_strided_slice %10 {offsets = [9, 0], sizes = [1, 64], strides = [1, 1]} : vector<13x96xf32> to vector<1x64xf32>
    %19 = vector.extract_strided_slice %10 {offsets = [10, 0], sizes = [1, 32], strides = [1, 1]} : vector<13x96xf32> to vector<1x32xf32>
    %20 = vector.extract_strided_slice %10 {offsets = [11, 0], sizes = [2, 32], strides = [1, 1]} : vector<13x96xf32> to vector<2x32xf32>
    %21 = tpu.iota {dimensions = array<i32: 0>} : vector<8x8xi32>
    %22 = tpu.iota {dimensions = array<i32: 1>} : vector<8x8xi32>
    %23 = arith.cmpi sgt, %22, %21 : vector<8x8xi32>
    %cst = arith.constant -1.000000e+09 : f32
    %cst_10 = arith.constant 0.000000e+00 : f32
    %24 = vector.broadcast %cst : f32 to vector<8x8xf32>
    %25 = vector.broadcast %cst_10 : f32 to vector<8x8xf32>
    %26 = arith.select %23, %24, %25 : vector<8x8xi1>, vector<8x8xf32>
    %27 = arith.truncf %3 : vector<16x32xf32> to vector<16x32xbf16>
    %c0_11 = arith.constant 0 : index
    %c0_12 = arith.constant 0 : index
    %c0_13 = arith.constant 0 : index
    %28 = vector.load %arg7[%c0_11, %c0_12, %c0_13] : memref<1x32x96xbf16, #tpu.memory_space<vmem>>, vector<1x32x96xbf16>
    %29 = vector.shape_cast %28 : vector<1x32x96xbf16> to vector<32x96xbf16>
    %cst_14 = arith.constant dense<0.000000e+00> : vector<16x96xf32>
    %30 = tpu.matmul %27, %29, %cst_14 {dimension_numbers = #tpu.dot_dimension_numbers<[1], [0], [0], [1], [0, 0, 1, 1], [], []>} : vector<16x32xbf16>, vector<32x96xbf16>, vector<16x96xf32> -> vector<16x96xf32>
    %31 = vector.broadcast %11 : vector<1x96xf32> to vector<16x96xf32>
    %32 = arith.addf %30, %31 : vector<16x96xf32>
    %c0_15 = arith.constant 0 : index
    %c0_16 = arith.constant 0 : index
    %c0_17 = arith.constant 0 : index
    %33 = vector.load %arg4[%c0_15, %c0_16, %c0_17] : memref<2x1x8xf32, #tpu.memory_space<vmem>>, vector<2x1x8xf32>
    %34 = vector.extract_strided_slice %32 {offsets = [0, 0], sizes = [8, 32], strides = [1, 1]} : vector<16x96xf32> to vector<8x32xf32>
    %35 = vector.extract_strided_slice %32 {offsets = [0, 32], sizes = [8, 32], strides = [1, 1]} : vector<16x96xf32> to vector<8x32xf32>
    %36 = vector.extract_strided_slice %32 {offsets = [0, 64], sizes = [8, 32], strides = [1, 1]} : vector<16x96xf32> to vector<8x32xf32>
    %37 = vector.extract_strided_slice %33 {offsets = [0, 0, 0], sizes = [1, 1, 8], strides = [1, 1, 1]} : vector<2x1x8xf32> to vector<1x1x8xf32>
    %38 = vector.shape_cast %37 : vector<1x1x8xf32> to vector<1x8xf32>
    %39 = vector.broadcast %38 : vector<1x8xf32> to vector<8x8xf32>
    %40 = arith.addf %26, %39 : vector<8x8xf32>
    %41 = vector.extract_strided_slice %34 {offsets = [0, 0], sizes = [8, 8], strides = [1, 1]} : vector<8x32xf32> to vector<8x8xf32>
    %42 = vector.extract_strided_slice %35 {offsets = [0, 0], sizes = [8, 8], strides = [1, 1]} : vector<8x32xf32> to vector<8x8xf32>
    %43 = vector.extract_strided_slice %36 {offsets = [0, 0], sizes = [8, 8], strides = [1, 1]} : vector<8x32xf32> to vector<8x8xf32>
    %cst_18 = arith.constant dense<0.000000e+00> : vector<8x8xf32>
    %44 = tpu.matmul %41, %42, %cst_18 {dimension_numbers = #tpu.dot_dimension_numbers<[1], [1], [0], [0], [0, 0, 1, 0], [], []>} : vector<8x8xf32>, vector<8x8xf32>, vector<8x8xf32> -> vector<8x8xf32>
    %cst_19 = arith.constant 0.353553385 : f32
    %45 = vector.broadcast %cst_19 : f32 to vector<8x8xf32>
    %46 = arith.mulf %44, %45 : vector<8x8xf32>
    %47 = arith.addf %46, %40 : vector<8x8xf32>
    %cst_20 = arith.constant dense<0xFF800000> : vector<8xf32>
    %48 = vector.multi_reduction <maximumf>, %47, %cst_20 [1] : vector<8x8xf32> to vector<8xf32>
    %49 = vector.shape_cast %48 : vector<8xf32> to vector<8x1xf32>
    %50 = vector.broadcast %49 : vector<8x1xf32> to vector<8x8xf32>
    %51 = arith.subf %47, %50 : vector<8x8xf32>
    %52 = math.exp %51 : vector<8x8xf32>
    %cst_21 = arith.constant dense<0.000000e+00> : vector<8xf32>
    %53 = vector.multi_reduction <add>, %52, %cst_21 [1] : vector<8x8xf32> to vector<8xf32>
    %54 = vector.shape_cast %53 : vector<8xf32> to vector<8x1xf32>
    %55 = tpu.reciprocal %54 {approx = true} : vector<8x1xf32> -> vector<8x1xf32>
    %56 = vector.broadcast %55 : vector<8x1xf32> to vector<8x8xf32>
    %57 = arith.mulf %52, %56 : vector<8x8xf32>
    %58 = arith.truncf %57 : vector<8x8xf32> to vector<8x8xbf16>
    %59 = arith.truncf %43 : vector<8x8xf32> to vector<8x8xbf16>
    %cst_22 = arith.constant dense<0.000000e+00> : vector<8x8xf32>
    %60 = tpu.matmul %58, %59, %cst_22 {dimension_numbers = #tpu.dot_dimension_numbers<[1], [0], [0], [1], [0, 0, 1, 1], [], []>} : vector<8x8xbf16>, vector<8x8xbf16>, vector<8x8xf32> -> vector<8x8xf32>
    %61 = vector.extract_strided_slice %34 {offsets = [0, 8], sizes = [8, 8], strides = [1, 1]} : vector<8x32xf32> to vector<8x8xf32>
    %62 = vector.extract_strided_slice %35 {offsets = [0, 8], sizes = [8, 8], strides = [1, 1]} : vector<8x32xf32> to vector<8x8xf32>
    %63 = vector.extract_strided_slice %36 {offsets = [0, 8], sizes = [8, 8], strides = [1, 1]} : vector<8x32xf32> to vector<8x8xf32>
    %cst_23 = arith.constant dense<0.000000e+00> : vector<8x8xf32>
    %64 = tpu.matmul %61, %62, %cst_23 {dimension_numbers = #tpu.dot_dimension_numbers<[1], [1], [0], [0], [0, 0, 1, 0], [], []>} : vector<8x8xf32>, vector<8x8xf32>, vector<8x8xf32> -> vector<8x8xf32>
    %cst_24 = arith.constant 0.353553385 : f32
    %65 = vector.broadcast %cst_24 : f32 to vector<8x8xf32>
    %66 = arith.mulf %64, %65 : vector<8x8xf32>
    %67 = arith.addf %66, %40 : vector<8x8xf32>
    %cst_25 = arith.constant dense<0xFF800000> : vector<8xf32>
    %68 = vector.multi_reduction <maximumf>, %67, %cst_25 [1] : vector<8x8xf32> to vector<8xf32>
    %69 = vector.shape_cast %68 : vector<8xf32> to vector<8x1xf32>
    %70 = vector.broadcast %69 : vector<8x1xf32> to vector<8x8xf32>
    %71 = arith.subf %67, %70 : vector<8x8xf32>
    %72 = math.exp %71 : vector<8x8xf32>
    %cst_26 = arith.constant dense<0.000000e+00> : vector<8xf32>
    %73 = vector.multi_reduction <add>, %72, %cst_26 [1] : vector<8x8xf32> to vector<8xf32>
    %74 = vector.shape_cast %73 : vector<8xf32> to vector<8x1xf32>
    %75 = tpu.reciprocal %74 {approx = true} : vector<8x1xf32> -> vector<8x1xf32>
    %76 = vector.broadcast %75 : vector<8x1xf32> to vector<8x8xf32>
    %77 = arith.mulf %72, %76 : vector<8x8xf32>
    %78 = arith.truncf %77 : vector<8x8xf32> to vector<8x8xbf16>
    %79 = arith.truncf %63 : vector<8x8xf32> to vector<8x8xbf16>
    %cst_27 = arith.constant dense<0.000000e+00> : vector<8x8xf32>
    %80 = tpu.matmul %78, %79, %cst_27 {dimension_numbers = #tpu.dot_dimension_numbers<[1], [0], [0], [1], [0, 0, 1, 1], [], []>} : vector<8x8xbf16>, vector<8x8xbf16>, vector<8x8xf32> -> vector<8x8xf32>
    %81 = vector.extract_strided_slice %34 {offsets = [0, 16], sizes = [8, 8], strides = [1, 1]} : vector<8x32xf32> to vector<8x8xf32>
    %82 = vector.extract_strided_slice %35 {offsets = [0, 16], sizes = [8, 8], strides = [1, 1]} : vector<8x32xf32> to vector<8x8xf32>
    %83 = vector.extract_strided_slice %36 {offsets = [0, 16], sizes = [8, 8], strides = [1, 1]} : vector<8x32xf32> to vector<8x8xf32>
    %cst_28 = arith.constant dense<0.000000e+00> : vector<8x8xf32>
    %84 = tpu.matmul %81, %82, %cst_28 {dimension_numbers = #tpu.dot_dimension_numbers<[1], [1], [0], [0], [0, 0, 1, 0], [], []>} : vector<8x8xf32>, vector<8x8xf32>, vector<8x8xf32> -> vector<8x8xf32>
    %cst_29 = arith.constant 0.353553385 : f32
    %85 = vector.broadcast %cst_29 : f32 to vector<8x8xf32>
    %86 = arith.mulf %84, %85 : vector<8x8xf32>
    %87 = arith.addf %86, %40 : vector<8x8xf32>
    %cst_30 = arith.constant dense<0xFF800000> : vector<8xf32>
    %88 = vector.multi_reduction <maximumf>, %87, %cst_30 [1] : vector<8x8xf32> to vector<8xf32>
    %89 = vector.shape_cast %88 : vector<8xf32> to vector<8x1xf32>
    %90 = vector.broadcast %89 : vector<8x1xf32> to vector<8x8xf32>
    %91 = arith.subf %87, %90 : vector<8x8xf32>
    %92 = math.exp %91 : vector<8x8xf32>
    %cst_31 = arith.constant dense<0.000000e+00> : vector<8xf32>
    %93 = vector.multi_reduction <add>, %92, %cst_31 [1] : vector<8x8xf32> to vector<8xf32>
    %94 = vector.shape_cast %93 : vector<8xf32> to vector<8x1xf32>
    %95 = tpu.reciprocal %94 {approx = true} : vector<8x1xf32> -> vector<8x1xf32>
    %96 = vector.broadcast %95 : vector<8x1xf32> to vector<8x8xf32>
    %97 = arith.mulf %92, %96 : vector<8x8xf32>
    %98 = arith.truncf %97 : vector<8x8xf32> to vector<8x8xbf16>
    %99 = arith.truncf %83 : vector<8x8xf32> to vector<8x8xbf16>
    %cst_32 = arith.constant dense<0.000000e+00> : vector<8x8xf32>
    %100 = tpu.matmul %98, %99, %cst_32 {dimension_numbers = #tpu.dot_dimension_numbers<[1], [0], [0], [1], [0, 0, 1, 1], [], []>} : vector<8x8xbf16>, vector<8x8xbf16>, vector<8x8xf32> -> vector<8x8xf32>
    %101 = vector.extract_strided_slice %34 {offsets = [0, 24], sizes = [8, 8], strides = [1, 1]} : vector<8x32xf32> to vector<8x8xf32>
    %102 = vector.extract_strided_slice %35 {offsets = [0, 24], sizes = [8, 8], strides = [1, 1]} : vector<8x32xf32> to vector<8x8xf32>
    %103 = vector.extract_strided_slice %36 {offsets = [0, 24], sizes = [8, 8], strides = [1, 1]} : vector<8x32xf32> to vector<8x8xf32>
    %cst_33 = arith.constant dense<0.000000e+00> : vector<8x8xf32>
    %104 = tpu.matmul %101, %102, %cst_33 {dimension_numbers = #tpu.dot_dimension_numbers<[1], [1], [0], [0], [0, 0, 1, 0], [], []>} : vector<8x8xf32>, vector<8x8xf32>, vector<8x8xf32> -> vector<8x8xf32>
    %cst_34 = arith.constant 0.353553385 : f32
    %105 = vector.broadcast %cst_34 : f32 to vector<8x8xf32>
    %106 = arith.mulf %104, %105 : vector<8x8xf32>
    %107 = arith.addf %106, %40 : vector<8x8xf32>
    %cst_35 = arith.constant dense<0xFF800000> : vector<8xf32>
    %108 = vector.multi_reduction <maximumf>, %107, %cst_35 [1] : vector<8x8xf32> to vector<8xf32>
    %109 = vector.shape_cast %108 : vector<8xf32> to vector<8x1xf32>
    %110 = vector.broadcast %109 : vector<8x1xf32> to vector<8x8xf32>
    %111 = arith.subf %107, %110 : vector<8x8xf32>
    %112 = math.exp %111 : vector<8x8xf32>
    %cst_36 = arith.constant dense<0.000000e+00> : vector<8xf32>
    %113 = vector.multi_reduction <add>, %112, %cst_36 [1] : vector<8x8xf32> to vector<8xf32>
    %114 = vector.shape_cast %113 : vector<8xf32> to vector<8x1xf32>
    %115 = tpu.reciprocal %114 {approx = true} : vector<8x1xf32> -> vector<8x1xf32>
    %116 = vector.broadcast %115 : vector<8x1xf32> to vector<8x8xf32>
    %117 = arith.mulf %112, %116 : vector<8x8xf32>
    %118 = arith.truncf %117 : vector<8x8xf32> to vector<8x8xbf16>
    %119 = arith.truncf %103 : vector<8x8xf32> to vector<8x8xbf16>
    %cst_37 = arith.constant dense<0.000000e+00> : vector<8x8xf32>
    %120 = tpu.matmul %118, %119, %cst_37 {dimension_numbers = #tpu.dot_dimension_numbers<[1], [0], [0], [1], [0, 0, 1, 1], [], []>} : vector<8x8xbf16>, vector<8x8xbf16>, vector<8x8xf32> -> vector<8x8xf32>
    %121 = tpu.concatenate %60, %80, %100, %120 in 1 : vector<8x8xf32>, vector<8x8xf32>, vector<8x8xf32>, vector<8x8xf32> -> vector<8x32xf32>
    %122 = vector.extract_strided_slice %32 {offsets = [8, 0], sizes = [8, 32], strides = [1, 1]} : vector<16x96xf32> to vector<8x32xf32>
    %123 = vector.extract_strided_slice %32 {offsets = [8, 32], sizes = [8, 32], strides = [1, 1]} : vector<16x96xf32> to vector<8x32xf32>
    %124 = vector.extract_strided_slice %32 {offsets = [8, 64], sizes = [8, 32], strides = [1, 1]} : vector<16x96xf32> to vector<8x32xf32>
    %125 = vector.extract_strided_slice %33 {offsets = [1, 0, 0], sizes = [1, 1, 8], strides = [1, 1, 1]} : vector<2x1x8xf32> to vector<1x1x8xf32>
    %126 = vector.shape_cast %125 : vector<1x1x8xf32> to vector<1x8xf32>
    %127 = vector.broadcast %126 : vector<1x8xf32> to vector<8x8xf32>
    %128 = arith.addf %26, %127 : vector<8x8xf32>
    %129 = vector.extract_strided_slice %122 {offsets = [0, 0], sizes = [8, 8], strides = [1, 1]} : vector<8x32xf32> to vector<8x8xf32>
    %130 = vector.extract_strided_slice %123 {offsets = [0, 0], sizes = [8, 8], strides = [1, 1]} : vector<8x32xf32> to vector<8x8xf32>
    %131 = vector.extract_strided_slice %124 {offsets = [0, 0], sizes = [8, 8], strides = [1, 1]} : vector<8x32xf32> to vector<8x8xf32>
    %cst_38 = arith.constant dense<0.000000e+00> : vector<8x8xf32>
    %132 = tpu.matmul %129, %130, %cst_38 {dimension_numbers = #tpu.dot_dimension_numbers<[1], [1], [0], [0], [0, 0, 1, 0], [], []>} : vector<8x8xf32>, vector<8x8xf32>, vector<8x8xf32> -> vector<8x8xf32>
    %cst_39 = arith.constant 0.353553385 : f32
    %133 = vector.broadcast %cst_39 : f32 to vector<8x8xf32>
    %134 = arith.mulf %132, %133 : vector<8x8xf32>
    %135 = arith.addf %134, %128 : vector<8x8xf32>
    %cst_40 = arith.constant dense<0xFF800000> : vector<8xf32>
    %136 = vector.multi_reduction <maximumf>, %135, %cst_40 [1] : vector<8x8xf32> to vector<8xf32>
    %137 = vector.shape_cast %136 : vector<8xf32> to vector<8x1xf32>
    %138 = vector.broadcast %137 : vector<8x1xf32> to vector<8x8xf32>
    %139 = arith.subf %135, %138 : vector<8x8xf32>
    %140 = math.exp %139 : vector<8x8xf32>
    %cst_41 = arith.constant dense<0.000000e+00> : vector<8xf32>
    %141 = vector.multi_reduction <add>, %140, %cst_41 [1] : vector<8x8xf32> to vector<8xf32>
    %142 = vector.shape_cast %141 : vector<8xf32> to vector<8x1xf32>
    %143 = tpu.reciprocal %142 {approx = true} : vector<8x1xf32> -> vector<8x1xf32>
    %144 = vector.broadcast %143 : vector<8x1xf32> to vector<8x8xf32>
    %145 = arith.mulf %140, %144 : vector<8x8xf32>
    %146 = arith.truncf %145 : vector<8x8xf32> to vector<8x8xbf16>
    %147 = arith.truncf %131 : vector<8x8xf32> to vector<8x8xbf16>
    %cst_42 = arith.constant dense<0.000000e+00> : vector<8x8xf32>
    %148 = tpu.matmul %146, %147, %cst_42 {dimension_numbers = #tpu.dot_dimension_numbers<[1], [0], [0], [1], [0, 0, 1, 1], [], []>} : vector<8x8xbf16>, vector<8x8xbf16>, vector<8x8xf32> -> vector<8x8xf32>
    %149 = vector.extract_strided_slice %122 {offsets = [0, 8], sizes = [8, 8], strides = [1, 1]} : vector<8x32xf32> to vector<8x8xf32>
    %150 = vector.extract_strided_slice %123 {offsets = [0, 8], sizes = [8, 8], strides = [1, 1]} : vector<8x32xf32> to vector<8x8xf32>
    %151 = vector.extract_strided_slice %124 {offsets = [0, 8], sizes = [8, 8], strides = [1, 1]} : vector<8x32xf32> to vector<8x8xf32>
    %cst_43 = arith.constant dense<0.000000e+00> : vector<8x8xf32>
    %152 = tpu.matmul %149, %150, %cst_43 {dimension_numbers = #tpu.dot_dimension_numbers<[1], [1], [0], [0], [0, 0, 1, 0], [], []>} : vector<8x8xf32>, vector<8x8xf32>, vector<8x8xf32> -> vector<8x8xf32>
    %cst_44 = arith.constant 0.353553385 : f32
    %153 = vector.broadcast %cst_44 : f32 to vector<8x8xf32>
    %154 = arith.mulf %152, %153 : vector<8x8xf32>
    %155 = arith.addf %154, %128 : vector<8x8xf32>
    %cst_45 = arith.constant dense<0xFF800000> : vector<8xf32>
    %156 = vector.multi_reduction <maximumf>, %155, %cst_45 [1] : vector<8x8xf32> to vector<8xf32>
    %157 = vector.shape_cast %156 : vector<8xf32> to vector<8x1xf32>
    %158 = vector.broadcast %157 : vector<8x1xf32> to vector<8x8xf32>
    %159 = arith.subf %155, %158 : vector<8x8xf32>
    %160 = math.exp %159 : vector<8x8xf32>
    %cst_46 = arith.constant dense<0.000000e+00> : vector<8xf32>
    %161 = vector.multi_reduction <add>, %160, %cst_46 [1] : vector<8x8xf32> to vector<8xf32>
    %162 = vector.shape_cast %161 : vector<8xf32> to vector<8x1xf32>
    %163 = tpu.reciprocal %162 {approx = true} : vector<8x1xf32> -> vector<8x1xf32>
    %164 = vector.broadcast %163 : vector<8x1xf32> to vector<8x8xf32>
    %165 = arith.mulf %160, %164 : vector<8x8xf32>
    %166 = arith.truncf %165 : vector<8x8xf32> to vector<8x8xbf16>
    %167 = arith.truncf %151 : vector<8x8xf32> to vector<8x8xbf16>
    %cst_47 = arith.constant dense<0.000000e+00> : vector<8x8xf32>
    %168 = tpu.matmul %166, %167, %cst_47 {dimension_numbers = #tpu.dot_dimension_numbers<[1], [0], [0], [1], [0, 0, 1, 1], [], []>} : vector<8x8xbf16>, vector<8x8xbf16>, vector<8x8xf32> -> vector<8x8xf32>
    %169 = vector.extract_strided_slice %122 {offsets = [0, 16], sizes = [8, 8], strides = [1, 1]} : vector<8x32xf32> to vector<8x8xf32>
    %170 = vector.extract_strided_slice %123 {offsets = [0, 16], sizes = [8, 8], strides = [1, 1]} : vector<8x32xf32> to vector<8x8xf32>
    %171 = vector.extract_strided_slice %124 {offsets = [0, 16], sizes = [8, 8], strides = [1, 1]} : vector<8x32xf32> to vector<8x8xf32>
    %cst_48 = arith.constant dense<0.000000e+00> : vector<8x8xf32>
    %172 = tpu.matmul %169, %170, %cst_48 {dimension_numbers = #tpu.dot_dimension_numbers<[1], [1], [0], [0], [0, 0, 1, 0], [], []>} : vector<8x8xf32>, vector<8x8xf32>, vector<8x8xf32> -> vector<8x8xf32>
    %cst_49 = arith.constant 0.353553385 : f32
    %173 = vector.broadcast %cst_49 : f32 to vector<8x8xf32>
    %174 = arith.mulf %172, %173 : vector<8x8xf32>
    %175 = arith.addf %174, %128 : vector<8x8xf32>
    %cst_50 = arith.constant dense<0xFF800000> : vector<8xf32>
    %176 = vector.multi_reduction <maximumf>, %175, %cst_50 [1] : vector<8x8xf32> to vector<8xf32>
    %177 = vector.shape_cast %176 : vector<8xf32> to vector<8x1xf32>
    %178 = vector.broadcast %177 : vector<8x1xf32> to vector<8x8xf32>
    %179 = arith.subf %175, %178 : vector<8x8xf32>
    %180 = math.exp %179 : vector<8x8xf32>
    %cst_51 = arith.constant dense<0.000000e+00> : vector<8xf32>
    %181 = vector.multi_reduction <add>, %180, %cst_51 [1] : vector<8x8xf32> to vector<8xf32>
    %182 = vector.shape_cast %181 : vector<8xf32> to vector<8x1xf32>
    %183 = tpu.reciprocal %182 {approx = true} : vector<8x1xf32> -> vector<8x1xf32>
    %184 = vector.broadcast %183 : vector<8x1xf32> to vector<8x8xf32>
    %185 = arith.mulf %180, %184 : vector<8x8xf32>
    %186 = arith.truncf %185 : vector<8x8xf32> to vector<8x8xbf16>
    %187 = arith.truncf %171 : vector<8x8xf32> to vector<8x8xbf16>
    %cst_52 = arith.constant dense<0.000000e+00> : vector<8x8xf32>
    %188 = tpu.matmul %186, %187, %cst_52 {dimension_numbers = #tpu.dot_dimension_numbers<[1], [0], [0], [1], [0, 0, 1, 1], [], []>} : vector<8x8xbf16>, vector<8x8xbf16>, vector<8x8xf32> -> vector<8x8xf32>
    %189 = vector.extract_strided_slice %122 {offsets = [0, 24], sizes = [8, 8], strides = [1, 1]} : vector<8x32xf32> to vector<8x8xf32>
    %190 = vector.extract_strided_slice %123 {offsets = [0, 24], sizes = [8, 8], strides = [1, 1]} : vector<8x32xf32> to vector<8x8xf32>
    %191 = vector.extract_strided_slice %124 {offsets = [0, 24], sizes = [8, 8], strides = [1, 1]} : vector<8x32xf32> to vector<8x8xf32>
    %cst_53 = arith.constant dense<0.000000e+00> : vector<8x8xf32>
    %192 = tpu.matmul %189, %190, %cst_53 {dimension_numbers = #tpu.dot_dimension_numbers<[1], [1], [0], [0], [0, 0, 1, 0], [], []>} : vector<8x8xf32>, vector<8x8xf32>, vector<8x8xf32> -> vector<8x8xf32>
    %cst_54 = arith.constant 0.353553385 : f32
    %193 = vector.broadcast %cst_54 : f32 to vector<8x8xf32>
    %194 = arith.mulf %192, %193 : vector<8x8xf32>
    %195 = arith.addf %194, %128 : vector<8x8xf32>
    %cst_55 = arith.constant dense<0xFF800000> : vector<8xf32>
    %196 = vector.multi_reduction <maximumf>, %195, %cst_55 [1] : vector<8x8xf32> to vector<8xf32>
    %197 = vector.shape_cast %196 : vector<8xf32> to vector<8x1xf32>
    %198 = vector.broadcast %197 : vector<8x1xf32> to vector<8x8xf32>
    %199 = arith.subf %195, %198 : vector<8x8xf32>
    %200 = math.exp %199 : vector<8x8xf32>
    %cst_56 = arith.constant dense<0.000000e+00> : vector<8xf32>
    %201 = vector.multi_reduction <add>, %200, %cst_56 [1] : vector<8x8xf32> to vector<8xf32>
    %202 = vector.shape_cast %201 : vector<8xf32> to vector<8x1xf32>
    %203 = tpu.reciprocal %202 {approx = true} : vector<8x1xf32> -> vector<8x1xf32>
    %204 = vector.broadcast %203 : vector<8x1xf32> to vector<8x8xf32>
    %205 = arith.mulf %200, %204 : vector<8x8xf32>
    %206 = arith.truncf %205 : vector<8x8xf32> to vector<8x8xbf16>
    %207 = arith.truncf %191 : vector<8x8xf32> to vector<8x8xbf16>
    %cst_57 = arith.constant dense<0.000000e+00> : vector<8x8xf32>
    %208 = tpu.matmul %206, %207, %cst_57 {dimension_numbers = #tpu.dot_dimension_numbers<[1], [0], [0], [1], [0, 0, 1, 1], [], []>} : vector<8x8xbf16>, vector<8x8xbf16>, vector<8x8xf32> -> vector<8x8xf32>
    %209 = tpu.concatenate %148, %168, %188, %208 in 1 : vector<8x8xf32>, vector<8x8xf32>, vector<8x8xf32>, vector<8x8xf32> -> vector<8x32xf32>
    %210 = tpu.concatenate %121, %209 in 0 : vector<8x32xf32>, vector<8x32xf32> -> vector<16x32xf32>
    %211 = arith.truncf %210 : vector<16x32xf32> to vector<16x32xbf16>
    %c0_58 = arith.constant 0 : index
    %c0_59 = arith.constant 0 : index
    %c0_60 = arith.constant 0 : index
    %212 = vector.load %arg8[%c0_58, %c0_59, %c0_60] : memref<1x32x32xbf16, #tpu.memory_space<vmem>>, vector<1x32x32xbf16>
    %213 = vector.shape_cast %212 : vector<1x32x32xbf16> to vector<32x32xbf16>
    %cst_61 = arith.constant dense<0.000000e+00> : vector<16x32xf32>
    %214 = tpu.matmul %211, %213, %cst_61 {dimension_numbers = #tpu.dot_dimension_numbers<[1], [0], [0], [1], [0, 0, 1, 1], [], []>} : vector<16x32xbf16>, vector<32x32xbf16>, vector<16x32xf32> -> vector<16x32xf32>
    %215 = vector.broadcast %12 : vector<1x32xf32> to vector<16x32xf32>
    %216 = arith.addf %214, %215 : vector<16x32xf32>
    %217 = arith.addf %216, %3 : vector<16x32xf32>
    %218 = vector.extract_strided_slice %13 {offsets = [0, 0], sizes = [1, 32], strides = [1, 1]} : vector<2x32xf32> to vector<1x32xf32>
    %219 = vector.extract_strided_slice %13 {offsets = [1, 0], sizes = [1, 32], strides = [1, 1]} : vector<2x32xf32> to vector<1x32xf32>
    %cst_62 = arith.constant dense<0.000000e+00> : vector<16xf32>
    %220 = vector.multi_reduction <add>, %217, %cst_62 [1] : vector<16x32xf32> to vector<16xf32>
    %221 = vector.shape_cast %220 : vector<16xf32> to vector<16x1xf32>
    %cst_63 = arith.constant 3.200000e+01 : f32
    %222 = vector.broadcast %cst_63 : f32 to vector<16x1xf32>
    %223 = arith.divf %221, %222 : vector<16x1xf32>
    %224 = vector.broadcast %223 : vector<16x1xf32> to vector<16x32xf32>
    %225 = arith.subf %217, %224 : vector<16x32xf32>
    %226 = arith.mulf %225, %225 : vector<16x32xf32>
    %cst_64 = arith.constant dense<0.000000e+00> : vector<16xf32>
    %227 = vector.multi_reduction <add>, %226, %cst_64 [1] : vector<16x32xf32> to vector<16xf32>
    %228 = vector.shape_cast %227 : vector<16xf32> to vector<16x1xf32>
    %cst_65 = arith.constant 3.200000e+01 : f32
    %229 = vector.broadcast %cst_65 : f32 to vector<16x1xf32>
    %230 = arith.divf %228, %229 : vector<16x1xf32>
    %231 = vector.broadcast %223 : vector<16x1xf32> to vector<16x32xf32>
    %232 = arith.subf %217, %231 : vector<16x32xf32>
    %cst_66 = arith.constant 9.99999974E-6 : f32
    %233 = vector.broadcast %cst_66 : f32 to vector<16x1xf32>
    %234 = arith.addf %230, %233 : vector<16x1xf32>
    %235 = math.rsqrt %234 : vector<16x1xf32>
    %236 = vector.broadcast %235 : vector<16x1xf32> to vector<16x32xf32>
    %237 = arith.mulf %232, %236 : vector<16x32xf32>
    %238 = vector.broadcast %218 : vector<1x32xf32> to vector<16x32xf32>
    %239 = arith.mulf %237, %238 : vector<16x32xf32>
    %240 = vector.broadcast %219 : vector<1x32xf32> to vector<16x32xf32>
    %241 = arith.addf %239, %240 : vector<16x32xf32>
    %242 = vector.broadcast %8 : vector<16x1xf32> to vector<16x32xf32>
    %243 = arith.mulf %241, %242 : vector<16x32xf32>
    %244 = arith.truncf %243 : vector<16x32xf32> to vector<16x32xbf16>
    %c0_67 = arith.constant 0 : index
    %c0_68 = arith.constant 0 : index
    %c0_69 = arith.constant 0 : index
    %245 = vector.load %arg9[%c0_67, %c0_68, %c0_69] : memref<1x32x32xbf16, #tpu.memory_space<vmem>>, vector<1x32x32xbf16>
    %246 = vector.shape_cast %245 : vector<1x32x32xbf16> to vector<32x32xbf16>
    %cst_70 = arith.constant dense<0.000000e+00> : vector<16x32xf32>
    %247 = tpu.matmul %244, %246, %cst_70 {dimension_numbers = #tpu.dot_dimension_numbers<[1], [0], [0], [1], [0, 0, 1, 1], [], []>} : vector<16x32xbf16>, vector<32x32xbf16>, vector<16x32xf32> -> vector<16x32xf32>
    %248 = vector.broadcast %14 : vector<1x32xf32> to vector<16x32xf32>
    %249 = arith.addf %247, %248 : vector<16x32xf32>
    %c0_71 = arith.constant 0 : index
    %c0_72 = arith.constant 0 : index
    %c0_73 = arith.constant 0 : index
    %250 = vector.load %arg5[%c0_71, %c0_72, %c0_73] : memref<2x1x10xf32, #tpu.memory_space<vmem>>, vector<2x1x10xf32>
    %c0_74 = arith.constant 0 : index
    %c0_75 = arith.constant 0 : index
    %c0_76 = arith.constant 0 : index
    %251 = vector.load %arg3[%c0_74, %c0_75, %c0_76] : memref<2x10x48xf32, #tpu.memory_space<vmem>>, vector<1x10x48xf32>
    %252 = vector.shape_cast %251 : vector<1x10x48xf32> to vector<10x48xf32>
    %253 = arith.truncf %252 : vector<10x48xf32> to vector<10x48xbf16>
    %c0_77 = arith.constant 0 : index
    %c0_78 = arith.constant 0 : index
    %c0_79 = arith.constant 0 : index
    %254 = vector.load %arg10[%c0_77, %c0_78, %c0_79] : memref<1x48x64xbf16, #tpu.memory_space<vmem>>, vector<1x48x64xbf16>
    %255 = vector.shape_cast %254 : vector<1x48x64xbf16> to vector<48x64xbf16>
    %cst_80 = arith.constant dense<0.000000e+00> : vector<10x64xf32>
    %256 = tpu.matmul %253, %255, %cst_80 {dimension_numbers = #tpu.dot_dimension_numbers<[1], [0], [0], [1], [0, 0, 1, 1], [], []>} : vector<10x48xbf16>, vector<48x64xbf16>, vector<10x64xf32> -> vector<10x64xf32>
    %257 = vector.broadcast %15 : vector<1x64xf32> to vector<10x64xf32>
    %258 = arith.addf %256, %257 : vector<10x64xf32>
    %259 = vector.extract_strided_slice %249 {offsets = [0, 0], sizes = [8, 32], strides = [1, 1]} : vector<16x32xf32> to vector<8x32xf32>
    %260 = vector.extract_strided_slice %258 {offsets = [0, 0], sizes = [10, 32], strides = [1, 1]} : vector<10x64xf32> to vector<10x32xf32>
    %261 = vector.extract_strided_slice %258 {offsets = [0, 32], sizes = [10, 32], strides = [1, 1]} : vector<10x64xf32> to vector<10x32xf32>
    %262 = vector.extract_strided_slice %250 {offsets = [0, 0, 0], sizes = [1, 1, 10], strides = [1, 1, 1]} : vector<2x1x10xf32> to vector<1x1x10xf32>
    %263 = vector.shape_cast %262 : vector<1x1x10xf32> to vector<1x10xf32>
    %264 = vector.extract_strided_slice %259 {offsets = [0, 0], sizes = [8, 8], strides = [1, 1]} : vector<8x32xf32> to vector<8x8xf32>
    %265 = vector.extract_strided_slice %260 {offsets = [0, 0], sizes = [10, 8], strides = [1, 1]} : vector<10x32xf32> to vector<10x8xf32>
    %266 = vector.extract_strided_slice %261 {offsets = [0, 0], sizes = [10, 8], strides = [1, 1]} : vector<10x32xf32> to vector<10x8xf32>
    %cst_81 = arith.constant dense<0.000000e+00> : vector<8x10xf32>
    %267 = tpu.matmul %264, %265, %cst_81 {dimension_numbers = #tpu.dot_dimension_numbers<[1], [1], [0], [0], [0, 0, 1, 0], [], []>} : vector<8x8xf32>, vector<10x8xf32>, vector<8x10xf32> -> vector<8x10xf32>
    %cst_82 = arith.constant 0.353553385 : f32
    %268 = vector.broadcast %cst_82 : f32 to vector<8x10xf32>
    %269 = arith.mulf %267, %268 : vector<8x10xf32>
    %270 = vector.broadcast %263 : vector<1x10xf32> to vector<8x10xf32>
    %271 = arith.addf %269, %270 : vector<8x10xf32>
    %cst_83 = arith.constant dense<0xFF800000> : vector<8xf32>
    %272 = vector.multi_reduction <maximumf>, %271, %cst_83 [1] : vector<8x10xf32> to vector<8xf32>
    %273 = vector.shape_cast %272 : vector<8xf32> to vector<8x1xf32>
    %274 = vector.broadcast %273 : vector<8x1xf32> to vector<8x10xf32>
    %275 = arith.subf %271, %274 : vector<8x10xf32>
    %276 = math.exp %275 : vector<8x10xf32>
    %cst_84 = arith.constant dense<0.000000e+00> : vector<8xf32>
    %277 = vector.multi_reduction <add>, %276, %cst_84 [1] : vector<8x10xf32> to vector<8xf32>
    %278 = vector.shape_cast %277 : vector<8xf32> to vector<8x1xf32>
    %279 = tpu.reciprocal %278 {approx = true} : vector<8x1xf32> -> vector<8x1xf32>
    %280 = vector.broadcast %279 : vector<8x1xf32> to vector<8x10xf32>
    %281 = arith.mulf %276, %280 : vector<8x10xf32>
    %282 = arith.truncf %281 : vector<8x10xf32> to vector<8x10xbf16>
    %283 = arith.truncf %266 : vector<10x8xf32> to vector<10x8xbf16>
    %cst_85 = arith.constant dense<0.000000e+00> : vector<8x8xf32>
    %284 = tpu.matmul %282, %283, %cst_85 {dimension_numbers = #tpu.dot_dimension_numbers<[1], [0], [0], [1], [0, 0, 1, 1], [], []>} : vector<8x10xbf16>, vector<10x8xbf16>, vector<8x8xf32> -> vector<8x8xf32>
    %285 = vector.extract_strided_slice %259 {offsets = [0, 8], sizes = [8, 8], strides = [1, 1]} : vector<8x32xf32> to vector<8x8xf32>
    %286 = vector.extract_strided_slice %260 {offsets = [0, 8], sizes = [10, 8], strides = [1, 1]} : vector<10x32xf32> to vector<10x8xf32>
    %287 = vector.extract_strided_slice %261 {offsets = [0, 8], sizes = [10, 8], strides = [1, 1]} : vector<10x32xf32> to vector<10x8xf32>
    %cst_86 = arith.constant dense<0.000000e+00> : vector<8x10xf32>
    %288 = tpu.matmul %285, %286, %cst_86 {dimension_numbers = #tpu.dot_dimension_numbers<[1], [1], [0], [0], [0, 0, 1, 0], [], []>} : vector<8x8xf32>, vector<10x8xf32>, vector<8x10xf32> -> vector<8x10xf32>
    %cst_87 = arith.constant 0.353553385 : f32
    %289 = vector.broadcast %cst_87 : f32 to vector<8x10xf32>
    %290 = arith.mulf %288, %289 : vector<8x10xf32>
    %291 = vector.broadcast %263 : vector<1x10xf32> to vector<8x10xf32>
    %292 = arith.addf %290, %291 : vector<8x10xf32>
    %cst_88 = arith.constant dense<0xFF800000> : vector<8xf32>
    %293 = vector.multi_reduction <maximumf>, %292, %cst_88 [1] : vector<8x10xf32> to vector<8xf32>
    %294 = vector.shape_cast %293 : vector<8xf32> to vector<8x1xf32>
    %295 = vector.broadcast %294 : vector<8x1xf32> to vector<8x10xf32>
    %296 = arith.subf %292, %295 : vector<8x10xf32>
    %297 = math.exp %296 : vector<8x10xf32>
    %cst_89 = arith.constant dense<0.000000e+00> : vector<8xf32>
    %298 = vector.multi_reduction <add>, %297, %cst_89 [1] : vector<8x10xf32> to vector<8xf32>
    %299 = vector.shape_cast %298 : vector<8xf32> to vector<8x1xf32>
    %300 = tpu.reciprocal %299 {approx = true} : vector<8x1xf32> -> vector<8x1xf32>
    %301 = vector.broadcast %300 : vector<8x1xf32> to vector<8x10xf32>
    %302 = arith.mulf %297, %301 : vector<8x10xf32>
    %303 = arith.truncf %302 : vector<8x10xf32> to vector<8x10xbf16>
    %304 = arith.truncf %287 : vector<10x8xf32> to vector<10x8xbf16>
    %cst_90 = arith.constant dense<0.000000e+00> : vector<8x8xf32>
    %305 = tpu.matmul %303, %304, %cst_90 {dimension_numbers = #tpu.dot_dimension_numbers<[1], [0], [0], [1], [0, 0, 1, 1], [], []>} : vector<8x10xbf16>, vector<10x8xbf16>, vector<8x8xf32> -> vector<8x8xf32>
    %306 = vector.extract_strided_slice %259 {offsets = [0, 16], sizes = [8, 8], strides = [1, 1]} : vector<8x32xf32> to vector<8x8xf32>
    %307 = vector.extract_strided_slice %260 {offsets = [0, 16], sizes = [10, 8], strides = [1, 1]} : vector<10x32xf32> to vector<10x8xf32>
    %308 = vector.extract_strided_slice %261 {offsets = [0, 16], sizes = [10, 8], strides = [1, 1]} : vector<10x32xf32> to vector<10x8xf32>
    %cst_91 = arith.constant dense<0.000000e+00> : vector<8x10xf32>
    %309 = tpu.matmul %306, %307, %cst_91 {dimension_numbers = #tpu.dot_dimension_numbers<[1], [1], [0], [0], [0, 0, 1, 0], [], []>} : vector<8x8xf32>, vector<10x8xf32>, vector<8x10xf32> -> vector<8x10xf32>
    %cst_92 = arith.constant 0.353553385 : f32
    %310 = vector.broadcast %cst_92 : f32 to vector<8x10xf32>
    %311 = arith.mulf %309, %310 : vector<8x10xf32>
    %312 = vector.broadcast %263 : vector<1x10xf32> to vector<8x10xf32>
    %313 = arith.addf %311, %312 : vector<8x10xf32>
    %cst_93 = arith.constant dense<0xFF800000> : vector<8xf32>
    %314 = vector.multi_reduction <maximumf>, %313, %cst_93 [1] : vector<8x10xf32> to vector<8xf32>
    %315 = vector.shape_cast %314 : vector<8xf32> to vector<8x1xf32>
    %316 = vector.broadcast %315 : vector<8x1xf32> to vector<8x10xf32>
    %317 = arith.subf %313, %316 : vector<8x10xf32>
    %318 = math.exp %317 : vector<8x10xf32>
    %cst_94 = arith.constant dense<0.000000e+00> : vector<8xf32>
    %319 = vector.multi_reduction <add>, %318, %cst_94 [1] : vector<8x10xf32> to vector<8xf32>
    %320 = vector.shape_cast %319 : vector<8xf32> to vector<8x1xf32>
    %321 = tpu.reciprocal %320 {approx = true} : vector<8x1xf32> -> vector<8x1xf32>
    %322 = vector.broadcast %321 : vector<8x1xf32> to vector<8x10xf32>
    %323 = arith.mulf %318, %322 : vector<8x10xf32>
    %324 = arith.truncf %323 : vector<8x10xf32> to vector<8x10xbf16>
    %325 = arith.truncf %308 : vector<10x8xf32> to vector<10x8xbf16>
    %cst_95 = arith.constant dense<0.000000e+00> : vector<8x8xf32>
    %326 = tpu.matmul %324, %325, %cst_95 {dimension_numbers = #tpu.dot_dimension_numbers<[1], [0], [0], [1], [0, 0, 1, 1], [], []>} : vector<8x10xbf16>, vector<10x8xbf16>, vector<8x8xf32> -> vector<8x8xf32>
    %327 = vector.extract_strided_slice %259 {offsets = [0, 24], sizes = [8, 8], strides = [1, 1]} : vector<8x32xf32> to vector<8x8xf32>
    %328 = vector.extract_strided_slice %260 {offsets = [0, 24], sizes = [10, 8], strides = [1, 1]} : vector<10x32xf32> to vector<10x8xf32>
    %329 = vector.extract_strided_slice %261 {offsets = [0, 24], sizes = [10, 8], strides = [1, 1]} : vector<10x32xf32> to vector<10x8xf32>
    %cst_96 = arith.constant dense<0.000000e+00> : vector<8x10xf32>
    %330 = tpu.matmul %327, %328, %cst_96 {dimension_numbers = #tpu.dot_dimension_numbers<[1], [1], [0], [0], [0, 0, 1, 0], [], []>} : vector<8x8xf32>, vector<10x8xf32>, vector<8x10xf32> -> vector<8x10xf32>
    %cst_97 = arith.constant 0.353553385 : f32
    %331 = vector.broadcast %cst_97 : f32 to vector<8x10xf32>
    %332 = arith.mulf %330, %331 : vector<8x10xf32>
    %333 = vector.broadcast %263 : vector<1x10xf32> to vector<8x10xf32>
    %334 = arith.addf %332, %333 : vector<8x10xf32>
    %cst_98 = arith.constant dense<0xFF800000> : vector<8xf32>
    %335 = vector.multi_reduction <maximumf>, %334, %cst_98 [1] : vector<8x10xf32> to vector<8xf32>
    %336 = vector.shape_cast %335 : vector<8xf32> to vector<8x1xf32>
    %337 = vector.broadcast %336 : vector<8x1xf32> to vector<8x10xf32>
    %338 = arith.subf %334, %337 : vector<8x10xf32>
    %339 = math.exp %338 : vector<8x10xf32>
    %cst_99 = arith.constant dense<0.000000e+00> : vector<8xf32>
    %340 = vector.multi_reduction <add>, %339, %cst_99 [1] : vector<8x10xf32> to vector<8xf32>
    %341 = vector.shape_cast %340 : vector<8xf32> to vector<8x1xf32>
    %342 = tpu.reciprocal %341 {approx = true} : vector<8x1xf32> -> vector<8x1xf32>
    %343 = vector.broadcast %342 : vector<8x1xf32> to vector<8x10xf32>
    %344 = arith.mulf %339, %343 : vector<8x10xf32>
    %345 = arith.truncf %344 : vector<8x10xf32> to vector<8x10xbf16>
    %346 = arith.truncf %329 : vector<10x8xf32> to vector<10x8xbf16>
    %cst_100 = arith.constant dense<0.000000e+00> : vector<8x8xf32>
    %347 = tpu.matmul %345, %346, %cst_100 {dimension_numbers = #tpu.dot_dimension_numbers<[1], [0], [0], [1], [0, 0, 1, 1], [], []>} : vector<8x10xbf16>, vector<10x8xbf16>, vector<8x8xf32> -> vector<8x8xf32>
    %348 = tpu.concatenate %284, %305, %326, %347 in 1 : vector<8x8xf32>, vector<8x8xf32>, vector<8x8xf32>, vector<8x8xf32> -> vector<8x32xf32>
    %c1_101 = arith.constant 1 : index
    %c0_102 = arith.constant 0 : index
    %c0_103 = arith.constant 0 : index
    %349 = vector.load %arg3[%c1_101, %c0_102, %c0_103] : memref<2x10x48xf32, #tpu.memory_space<vmem>>, vector<1x10x48xf32>
    %350 = vector.shape_cast %349 : vector<1x10x48xf32> to vector<10x48xf32>
    %351 = arith.truncf %350 : vector<10x48xf32> to vector<10x48xbf16>
    %c0_104 = arith.constant 0 : index
    %c0_105 = arith.constant 0 : index
    %c0_106 = arith.constant 0 : index
    %352 = vector.load %arg10[%c0_104, %c0_105, %c0_106] : memref<1x48x64xbf16, #tpu.memory_space<vmem>>, vector<1x48x64xbf16>
    %353 = vector.shape_cast %352 : vector<1x48x64xbf16> to vector<48x64xbf16>
    %cst_107 = arith.constant dense<0.000000e+00> : vector<10x64xf32>
    %354 = tpu.matmul %351, %353, %cst_107 {dimension_numbers = #tpu.dot_dimension_numbers<[1], [0], [0], [1], [0, 0, 1, 1], [], []>} : vector<10x48xbf16>, vector<48x64xbf16>, vector<10x64xf32> -> vector<10x64xf32>
    %355 = vector.broadcast %15 : vector<1x64xf32> to vector<10x64xf32>
    %356 = arith.addf %354, %355 : vector<10x64xf32>
    %357 = vector.extract_strided_slice %249 {offsets = [8, 0], sizes = [8, 32], strides = [1, 1]} : vector<16x32xf32> to vector<8x32xf32>
    %358 = vector.extract_strided_slice %356 {offsets = [0, 0], sizes = [10, 32], strides = [1, 1]} : vector<10x64xf32> to vector<10x32xf32>
    %359 = vector.extract_strided_slice %356 {offsets = [0, 32], sizes = [10, 32], strides = [1, 1]} : vector<10x64xf32> to vector<10x32xf32>
    %360 = vector.extract_strided_slice %250 {offsets = [1, 0, 0], sizes = [1, 1, 10], strides = [1, 1, 1]} : vector<2x1x10xf32> to vector<1x1x10xf32>
    %361 = vector.shape_cast %360 : vector<1x1x10xf32> to vector<1x10xf32>
    %362 = vector.extract_strided_slice %357 {offsets = [0, 0], sizes = [8, 8], strides = [1, 1]} : vector<8x32xf32> to vector<8x8xf32>
    %363 = vector.extract_strided_slice %358 {offsets = [0, 0], sizes = [10, 8], strides = [1, 1]} : vector<10x32xf32> to vector<10x8xf32>
    %364 = vector.extract_strided_slice %359 {offsets = [0, 0], sizes = [10, 8], strides = [1, 1]} : vector<10x32xf32> to vector<10x8xf32>
    %cst_108 = arith.constant dense<0.000000e+00> : vector<8x10xf32>
    %365 = tpu.matmul %362, %363, %cst_108 {dimension_numbers = #tpu.dot_dimension_numbers<[1], [1], [0], [0], [0, 0, 1, 0], [], []>} : vector<8x8xf32>, vector<10x8xf32>, vector<8x10xf32> -> vector<8x10xf32>
    %cst_109 = arith.constant 0.353553385 : f32
    %366 = vector.broadcast %cst_109 : f32 to vector<8x10xf32>
    %367 = arith.mulf %365, %366 : vector<8x10xf32>
    %368 = vector.broadcast %361 : vector<1x10xf32> to vector<8x10xf32>
    %369 = arith.addf %367, %368 : vector<8x10xf32>
    %cst_110 = arith.constant dense<0xFF800000> : vector<8xf32>
    %370 = vector.multi_reduction <maximumf>, %369, %cst_110 [1] : vector<8x10xf32> to vector<8xf32>
    %371 = vector.shape_cast %370 : vector<8xf32> to vector<8x1xf32>
    %372 = vector.broadcast %371 : vector<8x1xf32> to vector<8x10xf32>
    %373 = arith.subf %369, %372 : vector<8x10xf32>
    %374 = math.exp %373 : vector<8x10xf32>
    %cst_111 = arith.constant dense<0.000000e+00> : vector<8xf32>
    %375 = vector.multi_reduction <add>, %374, %cst_111 [1] : vector<8x10xf32> to vector<8xf32>
    %376 = vector.shape_cast %375 : vector<8xf32> to vector<8x1xf32>
    %377 = tpu.reciprocal %376 {approx = true} : vector<8x1xf32> -> vector<8x1xf32>
    %378 = vector.broadcast %377 : vector<8x1xf32> to vector<8x10xf32>
    %379 = arith.mulf %374, %378 : vector<8x10xf32>
    %380 = arith.truncf %379 : vector<8x10xf32> to vector<8x10xbf16>
    %381 = arith.truncf %364 : vector<10x8xf32> to vector<10x8xbf16>
    %cst_112 = arith.constant dense<0.000000e+00> : vector<8x8xf32>
    %382 = tpu.matmul %380, %381, %cst_112 {dimension_numbers = #tpu.dot_dimension_numbers<[1], [0], [0], [1], [0, 0, 1, 1], [], []>} : vector<8x10xbf16>, vector<10x8xbf16>, vector<8x8xf32> -> vector<8x8xf32>
    %383 = vector.extract_strided_slice %357 {offsets = [0, 8], sizes = [8, 8], strides = [1, 1]} : vector<8x32xf32> to vector<8x8xf32>
    %384 = vector.extract_strided_slice %358 {offsets = [0, 8], sizes = [10, 8], strides = [1, 1]} : vector<10x32xf32> to vector<10x8xf32>
    %385 = vector.extract_strided_slice %359 {offsets = [0, 8], sizes = [10, 8], strides = [1, 1]} : vector<10x32xf32> to vector<10x8xf32>
    %cst_113 = arith.constant dense<0.000000e+00> : vector<8x10xf32>
    %386 = tpu.matmul %383, %384, %cst_113 {dimension_numbers = #tpu.dot_dimension_numbers<[1], [1], [0], [0], [0, 0, 1, 0], [], []>} : vector<8x8xf32>, vector<10x8xf32>, vector<8x10xf32> -> vector<8x10xf32>
    %cst_114 = arith.constant 0.353553385 : f32
    %387 = vector.broadcast %cst_114 : f32 to vector<8x10xf32>
    %388 = arith.mulf %386, %387 : vector<8x10xf32>
    %389 = vector.broadcast %361 : vector<1x10xf32> to vector<8x10xf32>
    %390 = arith.addf %388, %389 : vector<8x10xf32>
    %cst_115 = arith.constant dense<0xFF800000> : vector<8xf32>
    %391 = vector.multi_reduction <maximumf>, %390, %cst_115 [1] : vector<8x10xf32> to vector<8xf32>
    %392 = vector.shape_cast %391 : vector<8xf32> to vector<8x1xf32>
    %393 = vector.broadcast %392 : vector<8x1xf32> to vector<8x10xf32>
    %394 = arith.subf %390, %393 : vector<8x10xf32>
    %395 = math.exp %394 : vector<8x10xf32>
    %cst_116 = arith.constant dense<0.000000e+00> : vector<8xf32>
    %396 = vector.multi_reduction <add>, %395, %cst_116 [1] : vector<8x10xf32> to vector<8xf32>
    %397 = vector.shape_cast %396 : vector<8xf32> to vector<8x1xf32>
    %398 = tpu.reciprocal %397 {approx = true} : vector<8x1xf32> -> vector<8x1xf32>
    %399 = vector.broadcast %398 : vector<8x1xf32> to vector<8x10xf32>
    %400 = arith.mulf %395, %399 : vector<8x10xf32>
    %401 = arith.truncf %400 : vector<8x10xf32> to vector<8x10xbf16>
    %402 = arith.truncf %385 : vector<10x8xf32> to vector<10x8xbf16>
    %cst_117 = arith.constant dense<0.000000e+00> : vector<8x8xf32>
    %403 = tpu.matmul %401, %402, %cst_117 {dimension_numbers = #tpu.dot_dimension_numbers<[1], [0], [0], [1], [0, 0, 1, 1], [], []>} : vector<8x10xbf16>, vector<10x8xbf16>, vector<8x8xf32> -> vector<8x8xf32>
    %404 = vector.extract_strided_slice %357 {offsets = [0, 16], sizes = [8, 8], strides = [1, 1]} : vector<8x32xf32> to vector<8x8xf32>
    %405 = vector.extract_strided_slice %358 {offsets = [0, 16], sizes = [10, 8], strides = [1, 1]} : vector<10x32xf32> to vector<10x8xf32>
    %406 = vector.extract_strided_slice %359 {offsets = [0, 16], sizes = [10, 8], strides = [1, 1]} : vector<10x32xf32> to vector<10x8xf32>
    %cst_118 = arith.constant dense<0.000000e+00> : vector<8x10xf32>
    %407 = tpu.matmul %404, %405, %cst_118 {dimension_numbers = #tpu.dot_dimension_numbers<[1], [1], [0], [0], [0, 0, 1, 0], [], []>} : vector<8x8xf32>, vector<10x8xf32>, vector<8x10xf32> -> vector<8x10xf32>
    %cst_119 = arith.constant 0.353553385 : f32
    %408 = vector.broadcast %cst_119 : f32 to vector<8x10xf32>
    %409 = arith.mulf %407, %408 : vector<8x10xf32>
    %410 = vector.broadcast %361 : vector<1x10xf32> to vector<8x10xf32>
    %411 = arith.addf %409, %410 : vector<8x10xf32>
    %cst_120 = arith.constant dense<0xFF800000> : vector<8xf32>
    %412 = vector.multi_reduction <maximumf>, %411, %cst_120 [1] : vector<8x10xf32> to vector<8xf32>
    %413 = vector.shape_cast %412 : vector<8xf32> to vector<8x1xf32>
    %414 = vector.broadcast %413 : vector<8x1xf32> to vector<8x10xf32>
    %415 = arith.subf %411, %414 : vector<8x10xf32>
    %416 = math.exp %415 : vector<8x10xf32>
    %cst_121 = arith.constant dense<0.000000e+00> : vector<8xf32>
    %417 = vector.multi_reduction <add>, %416, %cst_121 [1] : vector<8x10xf32> to vector<8xf32>
    %418 = vector.shape_cast %417 : vector<8xf32> to vector<8x1xf32>
    %419 = tpu.reciprocal %418 {approx = true} : vector<8x1xf32> -> vector<8x1xf32>
    %420 = vector.broadcast %419 : vector<8x1xf32> to vector<8x10xf32>
    %421 = arith.mulf %416, %420 : vector<8x10xf32>
    %422 = arith.truncf %421 : vector<8x10xf32> to vector<8x10xbf16>
    %423 = arith.truncf %406 : vector<10x8xf32> to vector<10x8xbf16>
    %cst_122 = arith.constant dense<0.000000e+00> : vector<8x8xf32>
    %424 = tpu.matmul %422, %423, %cst_122 {dimension_numbers = #tpu.dot_dimension_numbers<[1], [0], [0], [1], [0, 0, 1, 1], [], []>} : vector<8x10xbf16>, vector<10x8xbf16>, vector<8x8xf32> -> vector<8x8xf32>
    %425 = vector.extract_strided_slice %357 {offsets = [0, 24], sizes = [8, 8], strides = [1, 1]} : vector<8x32xf32> to vector<8x8xf32>
    %426 = vector.extract_strided_slice %358 {offsets = [0, 24], sizes = [10, 8], strides = [1, 1]} : vector<10x32xf32> to vector<10x8xf32>
    %427 = vector.extract_strided_slice %359 {offsets = [0, 24], sizes = [10, 8], strides = [1, 1]} : vector<10x32xf32> to vector<10x8xf32>
    %cst_123 = arith.constant dense<0.000000e+00> : vector<8x10xf32>
    %428 = tpu.matmul %425, %426, %cst_123 {dimension_numbers = #tpu.dot_dimension_numbers<[1], [1], [0], [0], [0, 0, 1, 0], [], []>} : vector<8x8xf32>, vector<10x8xf32>, vector<8x10xf32> -> vector<8x10xf32>
    %cst_124 = arith.constant 0.353553385 : f32
    %429 = vector.broadcast %cst_124 : f32 to vector<8x10xf32>
    %430 = arith.mulf %428, %429 : vector<8x10xf32>
    %431 = vector.broadcast %361 : vector<1x10xf32> to vector<8x10xf32>
    %432 = arith.addf %430, %431 : vector<8x10xf32>
    %cst_125 = arith.constant dense<0xFF800000> : vector<8xf32>
    %433 = vector.multi_reduction <maximumf>, %432, %cst_125 [1] : vector<8x10xf32> to vector<8xf32>
    %434 = vector.shape_cast %433 : vector<8xf32> to vector<8x1xf32>
    %435 = vector.broadcast %434 : vector<8x1xf32> to vector<8x10xf32>
    %436 = arith.subf %432, %435 : vector<8x10xf32>
    %437 = math.exp %436 : vector<8x10xf32>
    %cst_126 = arith.constant dense<0.000000e+00> : vector<8xf32>
    %438 = vector.multi_reduction <add>, %437, %cst_126 [1] : vector<8x10xf32> to vector<8xf32>
    %439 = vector.shape_cast %438 : vector<8xf32> to vector<8x1xf32>
    %440 = tpu.reciprocal %439 {approx = true} : vector<8x1xf32> -> vector<8x1xf32>
    %441 = vector.broadcast %440 : vector<8x1xf32> to vector<8x10xf32>
    %442 = arith.mulf %437, %441 : vector<8x10xf32>
    %443 = arith.truncf %442 : vector<8x10xf32> to vector<8x10xbf16>
    %444 = arith.truncf %427 : vector<10x8xf32> to vector<10x8xbf16>
    %cst_127 = arith.constant dense<0.000000e+00> : vector<8x8xf32>
    %445 = tpu.matmul %443, %444, %cst_127 {dimension_numbers = #tpu.dot_dimension_numbers<[1], [0], [0], [1], [0, 0, 1, 1], [], []>} : vector<8x10xbf16>, vector<10x8xbf16>, vector<8x8xf32> -> vector<8x8xf32>
    %446 = tpu.concatenate %382, %403, %424, %445 in 1 : vector<8x8xf32>, vector<8x8xf32>, vector<8x8xf32>, vector<8x8xf32> -> vector<8x32xf32>
    %447 = tpu.concatenate %348, %446 in 0 : vector<8x32xf32>, vector<8x32xf32> -> vector<16x32xf32>
    %448 = arith.truncf %447 : vector<16x32xf32> to vector<16x32xbf16>
    %c0_128 = arith.constant 0 : index
    %c0_129 = arith.constant 0 : index
    %c0_130 = arith.constant 0 : index
    %449 = vector.load %arg11[%c0_128, %c0_129, %c0_130] : memref<1x32x32xbf16, #tpu.memory_space<vmem>>, vector<1x32x32xbf16>
    %450 = vector.shape_cast %449 : vector<1x32x32xbf16> to vector<32x32xbf16>
    %cst_131 = arith.constant dense<0.000000e+00> : vector<16x32xf32>
    %451 = tpu.matmul %448, %450, %cst_131 {dimension_numbers = #tpu.dot_dimension_numbers<[1], [0], [0], [1], [0, 0, 1, 1], [], []>} : vector<16x32xbf16>, vector<32x32xbf16>, vector<16x32xf32> -> vector<16x32xf32>
    %452 = vector.broadcast %16 : vector<1x32xf32> to vector<16x32xf32>
    %453 = arith.addf %451, %452 : vector<16x32xf32>
    %454 = arith.addf %453, %243 : vector<16x32xf32>
    %455 = vector.extract_strided_slice %17 {offsets = [0, 0], sizes = [1, 32], strides = [1, 1]} : vector<2x32xf32> to vector<1x32xf32>
    %456 = vector.extract_strided_slice %17 {offsets = [1, 0], sizes = [1, 32], strides = [1, 1]} : vector<2x32xf32> to vector<1x32xf32>
    %cst_132 = arith.constant dense<0.000000e+00> : vector<16xf32>
    %457 = vector.multi_reduction <add>, %454, %cst_132 [1] : vector<16x32xf32> to vector<16xf32>
    %458 = vector.shape_cast %457 : vector<16xf32> to vector<16x1xf32>
    %cst_133 = arith.constant 3.200000e+01 : f32
    %459 = vector.broadcast %cst_133 : f32 to vector<16x1xf32>
    %460 = arith.divf %458, %459 : vector<16x1xf32>
    %461 = vector.broadcast %460 : vector<16x1xf32> to vector<16x32xf32>
    %462 = arith.subf %454, %461 : vector<16x32xf32>
    %463 = arith.mulf %462, %462 : vector<16x32xf32>
    %cst_134 = arith.constant dense<0.000000e+00> : vector<16xf32>
    %464 = vector.multi_reduction <add>, %463, %cst_134 [1] : vector<16x32xf32> to vector<16xf32>
    %465 = vector.shape_cast %464 : vector<16xf32> to vector<16x1xf32>
    %cst_135 = arith.constant 3.200000e+01 : f32
    %466 = vector.broadcast %cst_135 : f32 to vector<16x1xf32>
    %467 = arith.divf %465, %466 : vector<16x1xf32>
    %468 = vector.broadcast %460 : vector<16x1xf32> to vector<16x32xf32>
    %469 = arith.subf %454, %468 : vector<16x32xf32>
    %cst_136 = arith.constant 9.99999974E-6 : f32
    %470 = vector.broadcast %cst_136 : f32 to vector<16x1xf32>
    %471 = arith.addf %467, %470 : vector<16x1xf32>
    %472 = math.rsqrt %471 : vector<16x1xf32>
    %473 = vector.broadcast %472 : vector<16x1xf32> to vector<16x32xf32>
    %474 = arith.mulf %469, %473 : vector<16x32xf32>
    %475 = vector.broadcast %455 : vector<1x32xf32> to vector<16x32xf32>
    %476 = arith.mulf %474, %475 : vector<16x32xf32>
    %477 = vector.broadcast %456 : vector<1x32xf32> to vector<16x32xf32>
    %478 = arith.addf %476, %477 : vector<16x32xf32>
    %479 = vector.broadcast %8 : vector<16x1xf32> to vector<16x32xf32>
    %480 = arith.mulf %478, %479 : vector<16x32xf32>
    %481 = arith.truncf %480 : vector<16x32xf32> to vector<16x32xbf16>
    %c0_137 = arith.constant 0 : index
    %c0_138 = arith.constant 0 : index
    %c0_139 = arith.constant 0 : index
    %482 = vector.load %arg12[%c0_137, %c0_138, %c0_139] : memref<1x32x64xbf16, #tpu.memory_space<vmem>>, vector<1x32x64xbf16>
    %483 = vector.shape_cast %482 : vector<1x32x64xbf16> to vector<32x64xbf16>
    %cst_140 = arith.constant dense<0.000000e+00> : vector<16x64xf32>
    %484 = tpu.matmul %481, %483, %cst_140 {dimension_numbers = #tpu.dot_dimension_numbers<[1], [0], [0], [1], [0, 0, 1, 1], [], []>} : vector<16x32xbf16>, vector<32x64xbf16>, vector<16x64xf32> -> vector<16x64xf32>
    %485 = vector.broadcast %18 : vector<1x64xf32> to vector<16x64xf32>
    %486 = arith.addf %484, %485 : vector<16x64xf32>
    %cst_141 = arith.constant 0.000000e+00 : f32
    %487 = vector.broadcast %cst_141 : f32 to vector<16x64xf32>
    %488 = arith.maximumf %486, %487 : vector<16x64xf32>
    %489 = arith.truncf %488 : vector<16x64xf32> to vector<16x64xbf16>
    %c0_142 = arith.constant 0 : index
    %c0_143 = arith.constant 0 : index
    %c0_144 = arith.constant 0 : index
    %490 = vector.load %arg13[%c0_142, %c0_143, %c0_144] : memref<1x64x32xbf16, #tpu.memory_space<vmem>>, vector<1x64x32xbf16>
    %491 = vector.shape_cast %490 : vector<1x64x32xbf16> to vector<64x32xbf16>
    %cst_145 = arith.constant dense<0.000000e+00> : vector<16x32xf32>
    %492 = tpu.matmul %489, %491, %cst_145 {dimension_numbers = #tpu.dot_dimension_numbers<[1], [0], [0], [1], [0, 0, 1, 1], [], []>} : vector<16x64xbf16>, vector<64x32xbf16>, vector<16x32xf32> -> vector<16x32xf32>
    %493 = vector.broadcast %19 : vector<1x32xf32> to vector<16x32xf32>
    %494 = arith.addf %492, %493 : vector<16x32xf32>
    %495 = arith.addf %494, %480 : vector<16x32xf32>
    %496 = vector.extract_strided_slice %20 {offsets = [0, 0], sizes = [1, 32], strides = [1, 1]} : vector<2x32xf32> to vector<1x32xf32>
    %497 = vector.extract_strided_slice %20 {offsets = [1, 0], sizes = [1, 32], strides = [1, 1]} : vector<2x32xf32> to vector<1x32xf32>
    %cst_146 = arith.constant dense<0.000000e+00> : vector<16xf32>
    %498 = vector.multi_reduction <add>, %495, %cst_146 [1] : vector<16x32xf32> to vector<16xf32>
    %499 = vector.shape_cast %498 : vector<16xf32> to vector<16x1xf32>
    %cst_147 = arith.constant 3.200000e+01 : f32
    %500 = vector.broadcast %cst_147 : f32 to vector<16x1xf32>
    %501 = arith.divf %499, %500 : vector<16x1xf32>
    %502 = vector.broadcast %501 : vector<16x1xf32> to vector<16x32xf32>
    %503 = arith.subf %495, %502 : vector<16x32xf32>
    %504 = arith.mulf %503, %503 : vector<16x32xf32>
    %cst_148 = arith.constant dense<0.000000e+00> : vector<16xf32>
    %505 = vector.multi_reduction <add>, %504, %cst_148 [1] : vector<16x32xf32> to vector<16xf32>
    %506 = vector.shape_cast %505 : vector<16xf32> to vector<16x1xf32>
    %cst_149 = arith.constant 3.200000e+01 : f32
    %507 = vector.broadcast %cst_149 : f32 to vector<16x1xf32>
    %508 = arith.divf %506, %507 : vector<16x1xf32>
    %509 = vector.broadcast %501 : vector<16x1xf32> to vector<16x32xf32>
    %510 = arith.subf %495, %509 : vector<16x32xf32>
    %cst_150 = arith.constant 9.99999974E-6 : f32
    %511 = vector.broadcast %cst_150 : f32 to vector<16x1xf32>
    %512 = arith.addf %508, %511 : vector<16x1xf32>
    %513 = math.rsqrt %512 : vector<16x1xf32>
    %514 = vector.broadcast %513 : vector<16x1xf32> to vector<16x32xf32>
    %515 = arith.mulf %510, %514 : vector<16x32xf32>
    %516 = vector.broadcast %496 : vector<1x32xf32> to vector<16x32xf32>
    %517 = arith.mulf %515, %516 : vector<16x32xf32>
    %518 = vector.broadcast %497 : vector<1x32xf32> to vector<16x32xf32>
    %519 = arith.addf %517, %518 : vector<16x32xf32>
    %520 = vector.broadcast %8 : vector<16x1xf32> to vector<16x32xf32>
    %521 = arith.mulf %519, %520 : vector<16x32xf32>
    %c0_151 = arith.constant 0 : index
    %c0_152 = arith.constant 0 : index
    %522 = vector.load %arg17[%c0_151, %c0_152] : memref<16x32xf32, #tpu.memory_space<vmem>>, vector<16x32xf32>
    tpu.vector_store %arg17[%c0_151, %c0_152], %521 {strides = array<i32>} : memref<16x32xf32, #tpu.memory_space<vmem>>, vector<16x32xf32>,
    %c1_i32 = arith.constant 1 : i32
    %523 = arith.cmpi eq, %arg1, %c1_i32 : i32
    %524 = arith.extui %523 : i1 to i32
    %c0_i32_153 = arith.constant 0 : i32
    %525 = arith.cmpi ne, %524, %c0_i32_153 : i32
    scf.if %525 {
      %c0_154 = arith.constant 0 : index
      %c0_155 = arith.constant 0 : index
      %c0_156 = arith.constant 0 : index
      %526 = vector.load %arg15[%c0_154, %c0_155, %c0_156] : memref<2x32x16xf32, #tpu.memory_space<vmem>>, vector<1x32x16xf32>
      %527 = vector.shape_cast %526 : vector<1x32x16xf32> to vector<32x16xf32>
      %cst_157 = arith.constant dense<0.000000e+00> : vector<16x16xf32>
      %528 = tpu.matmul %521, %527, %cst_157 {dimension_numbers = #tpu.dot_dimension_numbers<[1], [0], [0], [1], [0, 0, 1, 1], [], []>} : vector<16x32xf32>, vector<32x16xf32>, vector<16x16xf32> -> vector<16x16xf32>
      %c1_158 = arith.constant 1 : index
      %c0_159 = arith.constant 0 : index
      %c0_160 = arith.constant 0 : index
      %529 = vector.load %arg15[%c1_158, %c0_159, %c0_160] : memref<2x32x16xf32, #tpu.memory_space<vmem>>, vector<1x32x16xf32>
      %530 = vector.shape_cast %529 : vector<1x32x16xf32> to vector<32x16xf32>
      %cst_161 = arith.constant dense<0.000000e+00> : vector<16x16xf32>
      %531 = tpu.matmul %521, %530, %cst_161 {dimension_numbers = #tpu.dot_dimension_numbers<[1], [0], [0], [1], [0, 0, 1, 1], [], []>} : vector<16x32xf32>, vector<32x16xf32>, vector<16x16xf32> -> vector<16x16xf32>
      %532 = arith.maximumf %528, %531 : vector<16x16xf32>
      %533 = vector.extract_strided_slice %532 {offsets = [0, 0], sizes = [8, 16], strides = [1, 1]} : vector<16x16xf32> to vector<8x16xf32>
      %c0_162 = arith.constant 0 : index
      %c0_163 = arith.constant 0 : index
      %c0_164 = arith.constant 0 : index
      %534 = vector.load %arg16[%c0_162, %c0_163, %c0_164] : memref<2x8x16xf32, #tpu.memory_space<vmem>>, vector<1x8x16xf32>
      %535 = vector.shape_cast %534 : vector<1x8x16xf32> to vector<8x16xf32>
      %536 = vector.shape_cast %533 : vector<8x16xf32> to vector<1x8x16xf32>
      tpu.vector_store %arg16[%c0_162, %c0_163, %c0_164], %536 {strides = array<i32>} : memref<2x8x16xf32, #tpu.memory_space<vmem>>, vector<1x8x16xf32>,
      %537 = vector.extract_strided_slice %532 {offsets = [8, 0], sizes = [8, 16], strides = [1, 1]} : vector<16x16xf32> to vector<8x16xf32>
      %c1_165 = arith.constant 1 : index
      %c0_166 = arith.constant 0 : index
      %c0_167 = arith.constant 0 : index
      %538 = vector.load %arg16[%c1_165, %c0_166, %c0_167] : memref<2x8x16xf32, #tpu.memory_space<vmem>>, vector<1x8x16xf32>
      %539 = vector.shape_cast %538 : vector<1x8x16xf32> to vector<8x16xf32>
      %540 = vector.shape_cast %537 : vector<8x16xf32> to vector<1x8x16xf32>
      tpu.vector_store %arg16[%c1_165, %c0_166, %c0_167], %540 {strides = array<i32>} : memref<2x8x16xf32, #tpu.memory_space<vmem>>, vector<1x8x16xf32>,
    } else {
    }
    return
  }
  func.func @transform_0(%arg0: i32, %arg1: i32) -> (i32, i32, i32) {
    %c0_i32 = arith.constant 0 : i32
    %c0_i32_0 = arith.constant 0 : i32
    %c0_i32_1 = arith.constant 0 : i32
    return %arg0, %c0_i32, %c0_i32_0 : i32, i32, i32
  }
  func.func @transform_1(%arg0: i32, %arg1: i32) -> (i32, i32, i32) {
    %c0_i32 = arith.constant 0 : i32
    %c0_i32_0 = arith.constant 0 : i32
    %c0_i32_1 = arith.constant 0 : i32
    return %arg0, %c0_i32, %c0_i32_0 : i32, i32, i32
  }
  func.func @transform_2(%arg0: i32, %arg1: i32) -> (i32, i32, i32) {
    %c0_i32 = arith.constant 0 : i32
    %c0_i32_0 = arith.constant 0 : i32
    %c0_i32_1 = arith.constant 0 : i32
    return %arg0, %c0_i32, %c0_i32_0 : i32, i32, i32
  }
  func.func @transform_3(%arg0: i32, %arg1: i32) -> (i32, i32, i32) {
    %c0_i32 = arith.constant 0 : i32
    %c0_i32_0 = arith.constant 0 : i32
    %c0_i32_1 = arith.constant 0 : i32
    return %arg0, %c0_i32, %c0_i32_0 : i32, i32, i32
  }
  func.func @transform_4(%arg0: i32, %arg1: i32) -> (i32, i32, i32) {
    %c0_i32 = arith.constant 0 : i32
    %c0_i32_0 = arith.constant 0 : i32
    %c0_i32_1 = arith.constant 0 : i32
    return %arg0, %c0_i32, %c0_i32_0 : i32, i32, i32
  }
  func.func @transform_5(%arg0: i32, %arg1: i32) -> (i32, i32, i32) {
    %c0_i32 = arith.constant 0 : i32
    %c0_i32_0 = arith.constant 0 : i32
    %c0_i32_1 = arith.constant 0 : i32
    return %arg1, %c0_i32, %c0_i32_0 : i32, i32, i32
  }
  func.func @transform_6(%arg0: i32, %arg1: i32) -> (i32, i32, i32) {
    %c0_i32 = arith.constant 0 : i32
    %c0_i32_0 = arith.constant 0 : i32
    %c0_i32_1 = arith.constant 0 : i32
    return %arg1, %c0_i32, %c0_i32_0 : i32, i32, i32
  }
  func.func @transform_7(%arg0: i32, %arg1: i32) -> (i32, i32, i32) {
    %c0_i32 = arith.constant 0 : i32
    %c0_i32_0 = arith.constant 0 : i32
    %c0_i32_1 = arith.constant 0 : i32
    return %arg1, %c0_i32, %c0_i32_0 : i32, i32, i32
  }
  func.func @transform_8(%arg0: i32, %arg1: i32) -> (i32, i32, i32) {
    %c0_i32 = arith.constant 0 : i32
    %c0_i32_0 = arith.constant 0 : i32
    %c0_i32_1 = arith.constant 0 : i32
    return %arg1, %c0_i32, %c0_i32_0 : i32, i32, i32
  }
  func.func @transform_9(%arg0: i32, %arg1: i32) -> (i32, i32, i32) {
    %c0_i32 = arith.constant 0 : i32
    %c0_i32_0 = arith.constant 0 : i32
    %c0_i32_1 = arith.constant 0 : i32
    return %arg1, %c0_i32, %c0_i32_0 : i32, i32, i32
  }
  func.func @transform_10(%arg0: i32, %arg1: i32) -> (i32, i32, i32) {
    %c0_i32 = arith.constant 0 : i32
    %c0_i32_0 = arith.constant 0 : i32
    %c0_i32_1 = arith.constant 0 : i32
    return %arg1, %c0_i32, %c0_i32_0 : i32, i32, i32
  }
  func.func @transform_11(%arg0: i32, %arg1: i32) -> (i32, i32, i32) {
    %c0_i32 = arith.constant 0 : i32
    %c0_i32_0 = arith.constant 0 : i32
    %c0_i32_1 = arith.constant 0 : i32
    return %arg1, %c0_i32, %c0_i32_0 : i32, i32, i32
  }
  func.func @transform_12(%arg0: i32, %arg1: i32) -> (i32, i32, i32) {
    %c0_i32 = arith.constant 0 : i32
    %c0_i32_0 = arith.constant 0 : i32
    %c0_i32_1 = arith.constant 0 : i32
    return %arg1, %c0_i32, %c0_i32_0 : i32, i32, i32
  }
  func.func @transform_13(%arg0: i32, %arg1: i32) -> (i32, i32, i32) {
    %c0_i32 = arith.constant 0 : i32
    %c0_i32_0 = arith.constant 0 : i32
    %c0_i32_1 = arith.constant 0 : i32
    %c0_i32_2 = arith.constant 0 : i32
    return %c0_i32, %c0_i32_0, %c0_i32_1 : i32, i32, i32
  }
  func.func @transform_14(%arg0: i32, %arg1: i32) -> (i32, i32, i32) {
    %c0_i32 = arith.constant 0 : i32
    %c0_i32_0 = arith.constant 0 : i32
    %c0_i32_1 = arith.constant 0 : i32
    return %arg0, %c0_i32, %c0_i32_0 : i32, i32, i32
  }
}

</mosaic_0001>

<llo_original>
// kernel: _lambda_.1
$region0: #{_lambda_.1}
  #allocation0 [shape = 'u32[]', space=smem, size = 0x4, offset = 0x4, fixed_abs, tag = 'smem constant byte address 0x4 - core index']
  #allocation1 [shape = 'u32[144,128]{1,0:T(1,128)}', space=vmem, size = 0x12000, scoped, tag = 'internal scratch']
  #allocation2 [shape = 'f32[16,32]{1,0:T(8,128)}', space=vmem, size = 0x2000, scoped, tag = 'scratch operand']
  %s0 = inlined_call_operand.vmem [shape: f32[4,8,32], index: 0, kind: input, shape index: {}]
  %s1 = inlined_call_operand.vmem [shape: f32[4,10,48], index: 1, kind: input, shape index: {}]
  %s2 = inlined_call_operand.vmem [shape: f32[4,1,8], index: 2, kind: input, shape index: {}]
  %s3 = inlined_call_operand.vmem [shape: f32[4,1,10], index: 3, kind: input, shape index: {}]
  %s4 = inlined_call_operand.vmem [shape: f32[4,8,1], index: 4, kind: input, shape index: {}]
  %s5 = inlined_call_operand.vmem [shape: bf16[2,32,96], index: 5, kind: input, shape index: {}]
  %s6 = inlined_call_operand.vmem [shape: bf16[2,32,32], index: 6, kind: input, shape index: {}]
  %s7 = inlined_call_operand.vmem [shape: bf16[2,32,32], index: 7, kind: input, shape index: {}]
  %s8 = inlined_call_operand.vmem [shape: bf16[2,48,64], index: 8, kind: input, shape index: {}]
  %s9 = inlined_call_operand.vmem [shape: bf16[2,32,32], index: 9, kind: input, shape index: {}]
  %s10 = inlined_call_operand.vmem [shape: bf16[2,32,64], index: 10, kind: input, shape index: {}]
  %s11 = inlined_call_operand.vmem [shape: bf16[2,64,32], index: 11, kind: input, shape index: {}]
  %s12 = inlined_call_operand.vmem [shape: f32[2,13,96], index: 12, kind: input, shape index: {}]
  %s13 = inlined_call_operand.vmem [shape: f32[2,32,16], index: 13, kind: input, shape index: {}]
  %s14 = inlined_call_operand.hbm [shape: f32[4,8,16], index: 14, kind: output, shape index: {}]
  %s15 = sld [smem:[#allocation0]]
  $region97: #{_lambda_.1} parent=0
    _
  %s17 = ssub.s32 1, %s15
  %s18 = scalar_select 0, %s17, %s15
  $region1: #{_lambda_.1} parent=0
    #allocation3 [shape = 'u8[16384]{0}', space=vmem, size = 0x4000, scoped, tag = 'output window, operand 0']
    #allocation4 [shape = 's32[2]{0}', space=sflag, size = 0x8, scoped, tag = 'scoped memory for _lambda_.1']
    %19 = vsyncpa [#allocation4], 0
    %s20 = scalar_lea.sflag [#allocation4], 1
    %21 = vsyncpa %s20, 0
    loop: start=0, step=1, limit=6
    $region2: #{_lambda_.1} parent=1 // loop_pre_header
      _
    $region3: #{_lambda_.1} parent=1 // loop_header
      %s23 = sphi 0, %s27
      %p24 = scmp.ge.s32.totalorder %s23, 6
      %s30 = sphi 0, %s42
      %s31 = sphi 0, %s38
      %s32 = sphi 0, %s30
      %s33 = sphi 0, %s31
      %s34 = sphi 0, %s32
      %s35 = sphi 0, %s33
      %s45 = sphi 0, %s47
      %s48 = sphi 0, %s45
      %s49 = sphi 0, %s48
      %s65 = sphi 0, %s49
      %s71 = sphi 0, %s73
      %s74 = sphi 0, %s71
      %s75 = sphi 0, %s74
      %s91 = sphi 0, %s75
      %s97 = sphi 0, %s99
      %s100 = sphi 0, %s97
      %s101 = sphi 0, %s100
      %s117 = sphi 0, %s101
      %s123 = sphi 0, %s125
      %s126 = sphi 0, %s123
      %s127 = sphi 0, %s126
      %s143 = sphi 0, %s127
      %s149 = sphi 0, %s151
      %s152 = sphi 0, %s149
      %s153 = sphi 0, %s152
      %s169 = sphi 0, %s153
      %s175 = sphi 0, %s177
      %s178 = sphi 0, %s175
      %s179 = sphi 0, %s178
      %s195 = sphi 0, %s179
      %s201 = sphi 0, %s203
      %s204 = sphi 0, %s201
      %s205 = sphi 0, %s204
      %s221 = sphi 0, %s205
      %s227 = sphi 0, %s229
      %s230 = sphi 0, %s227
      %s231 = sphi 0, %s230
      %s247 = sphi 0, %s231
      %s253 = sphi 0, %s255
      %s256 = sphi 0, %s253
      %s257 = sphi 0, %s256
      %s273 = sphi 0, %s257
      %s279 = sphi 0, %s281
      %s282 = sphi 0, %s279
      %s283 = sphi 0, %s282
      %s299 = sphi 0, %s283
      %s305 = sphi 0, %s307
      %s308 = sphi 0, %s305
      %s309 = sphi 0, %s308
      %s325 = sphi 0, %s309
      %s331 = sphi 0, %s333
      %s334 = sphi 0, %s331
      %s335 = sphi 0, %s334
      %s351 = sphi 0, %s335
      %s357 = sphi 0, %s359
      %s360 = sphi 0, %s357
      %s361 = sphi 0, %s360
      %s377 = sphi 0, %s361
      %s381 = sphi 0, %s381
      %s383 = sphi 0, %s381
      %s384 = sphi 0, %s383
      %s398 = sphi 0, %s384
      %s404 = sphi 0, %s406
      %s407 = sphi 0, %s404
      %s408 = sphi 0, %s407
      %s424 = sphi 0, %s408
    $region4: #{_lambda_.1} parent=1 // loop_header_branch
      %26 = sbr.rel (%p24) target = $region8
    $region5: #{_lambda_.1} parent=1 // loop_body
      %s28 = ssub.s32 %s23, 1
      %s29 = ssub.s32 %s23, 2
      %s36 = sadd.s32 1, %s31
      %p37 = scmp.ge.s32.totalorder %s36, 2
      %s38 = scalar_select %p37, 0, %s36
      %s39 = sadd.s32 1, %s30
      %s40 = scalar_select %p37, %s39, %s30
      %p41 = scmp.ge.s32.totalorder %s40, 2
      %s42 = scalar_select %p41, 0, %s40
      %s43 = ssub.s32 %s30, %s42
      %p44 = scmp.eq.s32.totalorder %s43, 0
      %s46 = sadd.s32 %s45, 1
      %s47 = scalar_select %p44, %s45, %s46
      %p50 = pneg %p44
      %p51 = scmp.eq.s32.totalorder %s23, 3
      %p52 = por %p50, %p51
      %p53 = scmp.ne.s32.totalorder %s45, %s48
      %p54 = scmp.eq.s32.totalorder %s23, 0
      %p55 = por %p53, %p54
      %p56 = scmp.ne.s32.totalorder %s45, %s48
      %p57 = scmp.eq.s32.totalorder %s28, 3
      %p58 = por %p56, %p57
      %p59 = scmp.ne.s32.totalorder %s48, %s49
      %p60 = scmp.eq.s32.totalorder %s28, 0
      %p61 = por %p59, %p60
      %p62 = scmp.ne.s32.totalorder %s48, %s49
      %p63 = scmp.eq.s32.totalorder %s29, 3
      %p64 = por %p62, %p63
      %p66 = scmp.ne.s32.totalorder %s49, %s65
      %p67 = scmp.eq.s32.totalorder %s29, 0
      %p68 = por %p66, %p67
      %s69 = ssub.s32 %s30, %s42
      %p70 = scmp.eq.s32.totalorder %s69, 0
      %s72 = sadd.s32 %s71, 1
      %s73 = scalar_select %p70, %s71, %s72
      %p76 = pneg %p70
      %p77 = scmp.eq.s32.totalorder %s23, 3
      %p78 = por %p76, %p77
      %p79 = scmp.ne.s32.totalorder %s71, %s74
      %p80 = scmp.eq.s32.totalorder %s23, 0
      %p81 = por %p79, %p80
      %p82 = scmp.ne.s32.totalorder %s71, %s74
      %p83 = scmp.eq.s32.totalorder %s28, 3
      %p84 = por %p82, %p83
      %p85 = scmp.ne.s32.totalorder %s74, %s75
      %p86 = scmp.eq.s32.totalorder %s28, 0
      %p87 = por %p85, %p86
      %p88 = scmp.ne.s32.totalorder %s74, %s75
      %p89 = scmp.eq.s32.totalorder %s29, 3
      %p90 = por %p88, %p89
      %p92 = scmp.ne.s32.totalorder %s75, %s91
      %p93 = scmp.eq.s32.totalorder %s29, 0
      %p94 = por %p92, %p93
      %s95 = ssub.s32 %s30, %s42
      %p96 = scmp.eq.s32.totalorder %s95, 0
      %s98 = sadd.s32 %s97, 1
      %s99 = scalar_select %p96, %s97, %s98
      %p102 = pneg %p96
      %p103 = scmp.eq.s32.totalorder %s23, 3
      %p104 = por %p102, %p103
      %p105 = scmp.ne.s32.totalorder %s97, %s100
      %p106 = scmp.eq.s32.totalorder %s23, 0
      %p107 = por %p105, %p106
      %p108 = scmp.ne.s32.totalorder %s97, %s100
      %p109 = scmp.eq.s32.totalorder %s28, 3
      %p110 = por %p108, %p109
      %p111 = scmp.ne.s32.totalorder %s100, %s101
      %p112 = scmp.eq.s32.totalorder %s28, 0
      %p113 = por %p111, %p112
      %p114 = scmp.ne.s32.totalorder %s100, %s101
      %p115 = scmp.eq.s32.totalorder %s29, 3
      %p116 = por %p114, %p115
      %p118 = scmp.ne.s32.totalorder %s101, %s117
      %p119 = scmp.eq.s32.totalorder %s29, 0
      %p120 = por %p118, %p119
      %s121 = ssub.s32 %s30, %s42
      %p122 = scmp.eq.s32.totalorder %s121, 0
      %s124 = sadd.s32 %s123, 1
      %s125 = scalar_select %p122, %s123, %s124
      %p128 = pneg %p122
      %p129 = scmp.eq.s32.totalorder %s23, 3
      %p130 = por %p128, %p129
      %p131 = scmp.ne.s32.totalorder %s123, %s126
      %p132 = scmp.eq.s32.totalorder %s23, 0
      %p133 = por %p131, %p132
      %p134 = scmp.ne.s32.totalorder %s123, %s126
      %p135 = scmp.eq.s32.totalorder %s28, 3
      %p136 = por %p134, %p135
      %p137 = scmp.ne.s32.totalorder %s126, %s127
      %p138 = scmp.eq.s32.totalorder %s28, 0
      %p139 = por %p137, %p138
      %p140 = scmp.ne.s32.totalorder %s126, %s127
      %p141 = scmp.eq.s32.totalorder %s29, 3
      %p142 = por %p140, %p141
      %p144 = scmp.ne.s32.totalorder %s127, %s143
      %p145 = scmp.eq.s32.totalorder %s29, 0
      %p146 = por %p144, %p145
      %s147 = ssub.s32 %s30, %s42
      %p148 = scmp.eq.s32.totalorder %s147, 0
      %s150 = sadd.s32 %s149, 1
      %s151 = scalar_select %p148, %s149, %s150
      %p154 = pneg %p148
      %p155 = scmp.eq.s32.totalorder %s23, 3
      %p156 = por %p154, %p155
      %p157 = scmp.ne.s32.totalorder %s149, %s152
      %p158 = scmp.eq.s32.totalorder %s23, 0
      %p159 = por %p157, %p158
      %p160 = scmp.ne.s32.totalorder %s149, %s152
      %p161 = scmp.eq.s32.totalorder %s28, 3
      %p162 = por %p160, %p161
      %p163 = scmp.ne.s32.totalorder %s152, %s153
      %p164 = scmp.eq.s32.totalorder %s28, 0
      %p165 = por %p163, %p164
      %p166 = scmp.ne.s32.totalorder %s152, %s153
      %p167 = scmp.eq.s32.totalorder %s29, 3
      %p168 = por %p166, %p167
      %p170 = scmp.ne.s32.totalorder %s153, %s169
      %p171 = scmp.eq.s32.totalorder %s29, 0
      %p172 = por %p170, %p171
      %s173 = ssub.s32 %s31, %s38
      %p174 = scmp.eq.s32.totalorder %s173, 0
      %s176 = sadd.s32 %s175, 1
      %s177 = scalar_select %p174, %s175, %s176
      %p180 = pneg %p174
      %p181 = scmp.eq.s32.totalorder %s23, 3
      %p182 = por %p180, %p181
      %p183 = scmp.ne.s32.totalorder %s175, %s178
      %p184 = scmp.eq.s32.totalorder %s23, 0
      %p185 = por %p183, %p184
      %p186 = scmp.ne.s32.totalorder %s175, %s178
      %p187 = scmp.eq.s32.totalorder %s28, 3
      %p188 = por %p186, %p187
      %p189 = scmp.ne.s32.totalorder %s178, %s179
      %p190 = scmp.eq.s32.totalorder %s28, 0
      %p191 = por %p189, %p190
      %p192 = scmp.ne.s32.totalorder %s178, %s179
      %p193 = scmp.eq.s32.totalorder %s29, 3
      %p194 = por %p192, %p193
      %p196 = scmp.ne.s32.totalorder %s179, %s195
      %p197 = scmp.eq.s32.totalorder %s29, 0
      %p198 = por %p196, %p197
      %s199 = ssub.s32 %s31, %s38
      %p200 = scmp.eq.s32.totalorder %s199, 0
      %s202 = sadd.s32 %s201, 1
      %s203 = scalar_select %p200, %s201, %s202
      %p206 = pneg %p200
      %p207 = scmp.eq.s32.totalorder %s23, 3
      %p208 = por %p206, %p207
      %p209 = scmp.ne.s32.totalorder %s201, %s204
      %p210 = scmp.eq.s32.totalorder %s23, 0
      %p211 = por %p209, %p210
      %p212 = scmp.ne.s32.totalorder %s201, %s204
      %p213 = scmp.eq.s32.totalorder %s28, 3
      %p214 = por %p212, %p213
      %p215 = scmp.ne.s32.totalorder %s204, %s205
      %p216 = scmp.eq.s32.totalorder %s28, 0
      %p217 = por %p215, %p216
      %p218 = scmp.ne.s32.totalorder %s204, %s205
      %p219 = scmp.eq.s32.totalorder %s29, 3
      %p220 = por %p218, %p219
      %p222 = scmp.ne.s32.totalorder %s205, %s221
      %p223 = scmp.eq.s32.totalorder %s29, 0
      %p224 = por %p222, %p223
      %s225 = ssub.s32 %s31, %s38
      %p226 = scmp.eq.s32.totalorder %s225, 0
      %s228 = sadd.s32 %s227, 1
      %s229 = scalar_select %p226, %s227, %s228
      %p232 = pneg %p226
      %p233 = scmp.eq.s32.totalorder %s23, 3
      %p234 = por %p232, %p233
      %p235 = scmp.ne.s32.totalorder %s227, %s230
      %p236 = scmp.eq.s32.totalorder %s23, 0
      %p237 = por %p235, %p236
      %p238 = scmp.ne.s32.totalorder %s227, %s230
      %p239 = scmp.eq.s32.totalorder %s28, 3
      %p240 = por %p238, %p239
      %p241 = scmp.ne.s32.totalorder %s230, %s231
      %p242 = scmp.eq.s32.totalorder %s28, 0
      %p243 = por %p241, %p242
      %p244 = scmp.ne.s32.totalorder %s230, %s231
      %p245 = scmp.eq.s32.totalorder %s29, 3
      %p246 = por %p244, %p245
      %p248 = scmp.ne.s32.totalorder %s231, %s247
      %p249 = scmp.eq.s32.totalorder %s29, 0
      %p250 = por %p248, %p249
      %s251 = ssub.s32 %s31, %s38
      %p252 = scmp.eq.s32.totalorder %s251, 0
      %s254 = sadd.s32 %s253, 1
      %s255 = scalar_select %p252, %s253, %s254
      %p258 = pneg %p252
      %p259 = scmp.eq.s32.totalorder %s23, 3
      %p260 = por %p258, %p259
      %p261 = scmp.ne.s32.totalorder %s253, %s256
      %p262 = scmp.eq.s32.totalorder %s23, 0
      %p263 = por %p261, %p262
      %p264 = scmp.ne.s32.totalorder %s253, %s256
      %p265 = scmp.eq.s32.totalorder %s28, 3
      %p266 = por %p264, %p265
      %p267 = scmp.ne.s32.totalorder %s256, %s257
      %p268 = scmp.eq.s32.totalorder %s28, 0
      %p269 = por %p267, %p268
      %p270 = scmp.ne.s32.totalorder %s256, %s257
      %p271 = scmp.eq.s32.totalorder %s29, 3
      %p272 = por %p270, %p271
      %p274 = scmp.ne.s32.totalorder %s257, %s273
      %p275 = scmp.eq.s32.totalorder %s29, 0
      %p276 = por %p274, %p275
      %s277 = ssub.s32 %s31, %s38
      %p278 = scmp.eq.s32.totalorder %s277, 0
      %s280 = sadd.s32 %s279, 1
      %s281 = scalar_select %p278, %s279, %s280
      %p284 = pneg %p278
      %p285 = scmp.eq.s32.totalorder %s23, 3
      %p286 = por %p284, %p285
      %p287 = scmp.ne.s32.totalorder %s279, %s282
      %p288 = scmp.eq.s32.totalorder %s23, 0
      %p289 = por %p287, %p288
      %p290 = scmp.ne.s32.totalorder %s279, %s282
      %p291 = scmp.eq.s32.totalorder %s28, 3
      %p292 = por %p290, %p291
      %p293 = scmp.ne.s32.totalorder %s282, %s283
      %p294 = scmp.eq.s32.totalorder %s28, 0
      %p295 = por %p293, %p294
      %p296 = scmp.ne.s32.totalorder %s282, %s283
      %p297 = scmp.eq.s32.totalorder %s29, 3
      %p298 = por %p296, %p297
      %p300 = scmp.ne.s32.totalorder %s283, %s299
      %p301 = scmp.eq.s32.totalorder %s29, 0
      %p302 = por %p300, %p301
      %s303 = ssub.s32 %s31, %s38
      %p304 = scmp.eq.s32.totalorder %s303, 0
      %s306 = sadd.s32 %s305, 1
      %s307 = scalar_select %p304, %s305, %s306
      %p310 = pneg %p304
      %p311 = scmp.eq.s32.totalorder %s23, 3
      %p312 = por %p310, %p311
      %p313 = scmp.ne.s32.totalorder %s305, %s308
      %p314 = scmp.eq.s32.totalorder %s23, 0
      %p315 = por %p313, %p314
      %p316 = scmp.ne.s32.totalorder %s305, %s308
      %p317 = scmp.eq.s32.totalorder %s28, 3
      %p318 = por %p316, %p317
      %p319 = scmp.ne.s32.totalorder %s308, %s309
      %p320 = scmp.eq.s32.totalorder %s28, 0
      %p321 = por %p319, %p320
      %p322 = scmp.ne.s32.totalorder %s308, %s309
      %p323 = scmp.eq.s32.totalorder %s29, 3
      %p324 = por %p322, %p323
      %p326 = scmp.ne.s32.totalorder %s309, %s325
      %p327 = scmp.eq.s32.totalorder %s29, 0
      %p328 = por %p326, %p327
      %s329 = ssub.s32 %s31, %s38
      %p330 = scmp.eq.s32.totalorder %s329, 0
      %s332 = sadd.s32 %s331, 1
      %s333 = scalar_select %p330, %s331, %s332
      %p336 = pneg %p330
      %p337 = scmp.eq.s32.totalorder %s23, 3
      %p338 = por %p336, %p337
      %p339 = scmp.ne.s32.totalorder %s331, %s334
      %p340 = scmp.eq.s32.totalorder %s23, 0
      %p341 = por %p339, %p340
      %p342 = scmp.ne.s32.totalorder %s331, %s334
      %p343 = scmp.eq.s32.totalorder %s28, 3
      %p344 = por %p342, %p343
      %p345 = scmp.ne.s32.totalorder %s334, %s335
      %p346 = scmp.eq.s32.totalorder %s28, 0
      %p347 = por %p345, %p346
      %p348 = scmp.ne.s32.totalorder %s334, %s335
      %p349 = scmp.eq.s32.totalorder %s29, 3
      %p350 = por %p348, %p349
      %p352 = scmp.ne.s32.totalorder %s335, %s351
      %p353 = scmp.eq.s32.totalorder %s29, 0
      %p354 = por %p352, %p353
      %s355 = ssub.s32 %s31, %s38
      %p356 = scmp.eq.s32.totalorder %s355, 0
      %s358 = sadd.s32 %s357, 1
      %s359 = scalar_select %p356, %s357, %s358
      %p362 = pneg %p356
      %p363 = scmp.eq.s32.totalorder %s23, 3
      %p364 = por %p362, %p363
      %p365 = scmp.ne.s32.totalorder %s357, %s360
      %p366 = scmp.eq.s32.totalorder %s23, 0
      %p367 = por %p365, %p366
      %p368 = scmp.ne.s32.totalorder %s357, %s360
      %p369 = scmp.eq.s32.totalorder %s28, 3
      %p370 = por %p368, %p369
      %p371 = scmp.ne.s32.totalorder %s360, %s361
      %p372 = scmp.eq.s32.totalorder %s28, 0
      %p373 = por %p371, %p372
      %p374 = scmp.ne.s32.totalorder %s360, %s361
      %p375 = scmp.eq.s32.totalorder %s29, 3
      %p376 = por %p374, %p375
      %p378 = scmp.ne.s32.totalorder %s361, %s377
      %p379 = scmp.eq.s32.totalorder %s29, 0
      %p380 = por %p378, %p379
      %s382 = sadd.s32 %s381, 1
      %p385 = scmp.eq.s32.totalorder %s23, 3
      %p386 = scmp.ne.s32.totalorder %s381, %s383
      %p387 = scmp.eq.s32.totalorder %s23, 0
      %p388 = por %p386, %p387
      %p389 = scmp.ne.s32.totalorder %s381, %s383
      %p390 = scmp.eq.s32.totalorder %s28, 3
      %p391 = por %p389, %p390
      %p392 = scmp.ne.s32.totalorder %s383, %s384
      %p393 = scmp.eq.s32.totalorder %s28, 0
      %p394 = por %p392, %p393
      %p395 = scmp.ne.s32.totalorder %s383, %s384
      %p396 = scmp.eq.s32.totalorder %s29, 3
      %p397 = por %p395, %p396
      %p399 = scmp.ne.s32.totalorder %s384, %s398
      %p400 = scmp.eq.s32.totalorder %s29, 0
      %p401 = por %p399, %p400
      %s402 = ssub.s32 %s30, %s42
      %p403 = scmp.eq.s32.totalorder %s402, 0
      %s405 = sadd.s32 %s404, 1
      %s406 = scalar_select %p403, %s404, %s405
      %p409 = pneg %p403
      %p410 = scmp.eq.s32.totalorder %s23, 3
      %p411 = por %p409, %p410
      %p412 = scmp.ne.s32.totalorder %s404, %s407
      %p413 = scmp.eq.s32.totalorder %s23, 0
      %p414 = por %p412, %p413
      %p415 = scmp.ne.s32.totalorder %s404, %s407
      %p416 = scmp.eq.s32.totalorder %s28, 3
      %p417 = por %p415, %p416
      %p418 = scmp.ne.s32.totalorder %s407, %s408
      %p419 = scmp.eq.s32.totalorder %s28, 0
      %p420 = por %p418, %p419
      %p421 = scmp.ne.s32.totalorder %s407, %s408
      %p422 = scmp.eq.s32.totalorder %s29, 3
      %p423 = por %p421, %p422
      %p425 = scmp.ne.s32.totalorder %s408, %s424
      %p426 = scmp.eq.s32.totalorder %s29, 0
      %p427 = por %p425, %p426
      %p428 = scmp.le.s32.totalorder 1, %s23
      %p429 = scmp.lt.s32.totalorder %s23, 5
      %p430 = pnand %p428, %p429
      %p431 = pneg %p430
      // Predicated region
      $region9: #{_lambda_.1} parent=5 // pred_check
        _
      $region10: #{_lambda_.1} parent=5 // pred_check_branch
        %433 = sbr.rel (%p430) target = $region12
      $region11: #{_lambda_.1} parent=5 // pred_region
        %s434 = ssub.s32 %s23, 1
        // Predicated region
        $region13: #{_lambda_.1} parent=11 // pred_check
          %p435 = pneg %p394
        $region14: #{_lambda_.1} parent=11 // pred_check_branch
          %437 = sbr.rel (%p435) target = $region16
        $region15: #{_lambda_.1} parent=11 // pred_region
          _
        $region16: #{_lambda_.1} parent=11 // pred_fallthru
          _
      $region12: #{_lambda_.1} parent=5 // pred_fallthru
        _
      %p438 = scmp.lt.s32.totalorder %s23, 4
      // Predicated region
      $region17: #{_lambda_.1} parent=5 // pred_check
        %p439 = pneg %p438
      $region18: #{_lambda_.1} parent=5 // pred_check_branch
        %441 = sbr.rel (%p439) target = $region20
      $region19: #{_lambda_.1} parent=5 // pred_region
        // Predicated region
        $region21: #{_lambda_.1} parent=19 // pred_check
          %p442 = pneg %p55
        $region22: #{_lambda_.1} parent=19 // pred_check_branch
          %444 = sbr.rel (%p442) target = $region24
        $region23: #{_lambda_.1} parent=19 // pred_region
          %s445 = smul.u32 2, %s30
          %p446 = scmp.lt.s32.totalorder %s445, 3
          %s447 = scalar_select %p446, %s445, 3
          %s448 = smul.addr %s447, 8
          %s449 = scalar_lea.vmem %s0, %s448
          %s450 = smul.u32 2, %s30
        $region24: #{_lambda_.1} parent=19 // pred_fallthru
          _
        // Predicated region
        $region25: #{_lambda_.1} parent=19 // pred_check
          %p451 = pneg %p81
        $region26: #{_lambda_.1} parent=19 // pred_check_branch
          %453 = sbr.rel (%p451) target = $region28
        $region27: #{_lambda_.1} parent=19 // pred_region
          %s454 = smul.u32 2, %s30
          %p455 = scmp.lt.s32.totalorder %s454, 3
          %s456 = scalar_select %p455, %s454, 3
          %s457 = smul.addr %s456, 2
          %s458 = smul.addr %s457, 8
          %s459 = scalar_lea.vmem %s1, %s458
          %s460 = smul.u32 2, %s30
        $region28: #{_lambda_.1} parent=19 // pred_fallthru
          _
        // Predicated region
        $region29: #{_lambda_.1} parent=19 // pred_check
          %p461 = pneg %p107
        $region30: #{_lambda_.1} parent=19 // pred_check_branch
          %463 = sbr.rel (%p461) target = $region32
        $region31: #{_lambda_.1} parent=19 // pred_region
          %s464 = smul.u32 2, %s30
          %p465 = scmp.lt.s32.totalorder %s464, 3
          %s466 = scalar_select %p465, %s464, 3
          %s467 = scalar_lea.vmem %s2, %s466
          %s468 = smul.u32 2, %s30
        $region32: #{_lambda_.1} parent=19 // pred_fallthru
          _
        // Predicated region
        $region33: #{_lambda_.1} parent=19 // pred_check
          %p469 = pneg %p133
        $region34: #{_lambda_.1} parent=19 // pred_check_branch
          %471 = sbr.rel (%p469) target = $region36
        $region35: #{_lambda_.1} parent=19 // pred_region
          %s472 = smul.u32 2, %s30
          %p473 = scmp.lt.s32.totalorder %s472, 3
          %s474 = scalar_select %p473, %s472, 3
          %s475 = scalar_lea.vmem %s3, %s474
          %s476 = smul.u32 2, %s30
        $region36: #{_lambda_.1} parent=19 // pred_fallthru
          _
        // Predicated region
        $region37: #{_lambda_.1} parent=19 // pred_check
          %p477 = pneg %p159
        $region38: #{_lambda_.1} parent=19 // pred_check_branch
          %479 = sbr.rel (%p477) target = $region40
        $region39: #{_lambda_.1} parent=19 // pred_region
          %s480 = smul.u32 2, %s30
          %p481 = scmp.lt.s32.totalorder %s480, 3
          %s482 = scalar_select %p481, %s480, 3
          %s483 = smul.addr %s482, 8
          %s484 = scalar_lea.vmem %s4, %s483
          %s485 = smul.u32 2, %s30
        $region40: #{_lambda_.1} parent=19 // pred_fallthru
          _
        // Predicated region
        $region41: #{_lambda_.1} parent=19 // pred_check
          %p486 = pneg %p185
        $region42: #{_lambda_.1} parent=19 // pred_check_branch
          %488 = sbr.rel (%p486) target = $region44
        $region43: #{_lambda_.1} parent=19 // pred_region
          %p489 = scmp.lt.s32.totalorder %s31, 1
          %s490 = scalar_select %p489, %s31, 1
          %s491 = smul.addr %s490, 4
          %s492 = smul.addr %s491, 4
          %s493 = scalar_lea.vmem %s5, %s492
        $region44: #{_lambda_.1} parent=19 // pred_fallthru
          _
        // Predicated region
        $region45: #{_lambda_.1} parent=19 // pred_check
          %p494 = pneg %p211
        $region46: #{_lambda_.1} parent=19 // pred_check_branch
          %496 = sbr.rel (%p494) target = $region48
        $region47: #{_lambda_.1} parent=19 // pred_region
          %p497 = scmp.lt.s32.totalorder %s31, 1
          %s498 = scalar_select %p497, %s31, 1
          %s499 = smul.addr %s498, 4
          %s500 = smul.addr %s499, 4
          %s501 = scalar_lea.vmem %s6, %s500
        $region48: #{_lambda_.1} parent=19 // pred_fallthru
          _
        // Predicated region
        $region49: #{_lambda_.1} parent=19 // pred_check
          %p502 = pneg %p237
        $region50: #{_lambda_.1} parent=19 // pred_check_branch
          %504 = sbr.rel (%p502) target = $region52
        $region51: #{_lambda_.1} parent=19 // pred_region
          %p505 = scmp.lt.s32.totalorder %s31, 1
          %s506 = scalar_select %p505, %s31, 1
          %s507 = smul.addr %s506, 4
          %s508 = smul.addr %s507, 4
          %s509 = scalar_lea.vmem %s7, %s508
        $region52: #{_lambda_.1} parent=19 // pred_fallthru
          _
        // Predicated region
        $region53: #{_lambda_.1} parent=19 // pred_check
          %p510 = pneg %p263
        $region54: #{_lambda_.1} parent=19 // pred_check_branch
          %512 = sbr.rel (%p510) target = $region56
        $region55: #{_lambda_.1} parent=19 // pred_region
          %p513 = scmp.lt.s32.totalorder %s31, 1
          %s514 = scalar_select %p513, %s31, 1
          %s515 = smul.addr %s514, 6
          %s516 = smul.addr %s515, 4
          %s517 = scalar_lea.vmem %s8, %s516
        $region56: #{_lambda_.1} parent=19 // pred_fallthru
          _
        // Predicated region
        $region57: #{_lambda_.1} parent=19 // pred_check
          %p518 = pneg %p289
        $region58: #{_lambda_.1} parent=19 // pred_check_branch
          %520 = sbr.rel (%p518) target = $region60
        $region59: #{_lambda_.1} parent=19 // pred_region
          %p521 = scmp.lt.s32.totalorder %s31, 1
          %s522 = scalar_select %p521, %s31, 1
          %s523 = smul.addr %s522, 4
          %s524 = smul.addr %s523, 4
          %s525 = scalar_lea.vmem %s9, %s524
        $region60: #{_lambda_.1} parent=19 // pred_fallthru
          _
        // Predicated region
        $region61: #{_lambda_.1} parent=19 // pred_check
          %p526 = pneg %p315
        $region62: #{_lambda_.1} parent=19 // pred_check_branch
          %528 = sbr.rel (%p526) target = $region64
        $region63: #{_lambda_.1} parent=19 // pred_region
          %p529 = scmp.lt.s32.totalorder %s31, 1
          %s530 = scalar_select %p529, %s31, 1
          %s531 = smul.addr %s530, 4
          %s532 = smul.addr %s531, 4
          %s533 = scalar_lea.vmem %s10, %s532
        $region64: #{_lambda_.1} parent=19 // pred_fallthru
          _
        // Predicated region
        $region65: #{_lambda_.1} parent=19 // pred_check
          %p534 = pneg %p341
        $region66: #{_lambda_.1} parent=19 // pred_check_branch
          %536 = sbr.rel (%p534) target = $region68
        $region67: #{_lambda_.1} parent=19 // pred_region
          %p537 = scmp.lt.s32.totalorder %s31, 1
          %s538 = scalar_select %p537, %s31, 1
          %s539 = smul.addr %s538, 8
          %s540 = smul.addr %s539, 4
          %s541 = scalar_lea.vmem %s11, %s540
        $region68: #{_lambda_.1} parent=19 // pred_fallthru
          _
        // Predicated region
        $region69: #{_lambda_.1} parent=19 // pred_check
          %p542 = pneg %p367
        $region70: #{_lambda_.1} parent=19 // pred_check_branch
          %544 = sbr.rel (%p542) target = $region72
        $region71: #{_lambda_.1} parent=19 // pred_region
          %p545 = scmp.lt.s32.totalorder %s31, 1
          %s546 = scalar_select %p545, %s31, 1
          %s547 = smul.addr %s546, 2
          %s548 = smul.addr %s547, 8
          %s549 = scalar_lea.vmem %s12, %s548
        $region72: #{_lambda_.1} parent=19 // pred_fallthru
          _
      $region20: #{_lambda_.1} parent=5 // pred_fallthru
        _
      %p550 = scmp.le.s32.totalorder 1, %s23
      %p551 = scmp.lt.s32.totalorder %s23, 5
      %p552 = pnand %p550, %p551
      %p553 = pneg %p552
      // Predicated region
      $region73: #{_lambda_.1} parent=5 // pred_check
        _
      $region74: #{_lambda_.1} parent=5 // pred_check_branch
        %555 = sbr.rel (%p552) target = $region76
      $region75: #{_lambda_.1} parent=5 // pred_region
        %s556 = ssub.s32 %s23, 1
        %s557 = smul.u32 2, %s32
        %p558 = scmp.lt.s32.totalorder %s557, 3
        %s559 = scalar_select %p558, %s557, 3
        %s560 = smul.addr %s559, 8
        %s561 = scalar_lea.vmem %s0, %s560
        %p562 = pneg %p61
        %p563 = pneg %p58
        %s564 = smul.u32 2, %s32
        %p565 = scmp.lt.s32.totalorder %s564, 3
        %s566 = scalar_select %p565, %s564, 3
        %s567 = smul.addr %s566, 2
        %s568 = smul.addr %s567, 8
        %s569 = scalar_lea.vmem %s1, %s568
        %p570 = pneg %p87
        %p571 = pneg %p84
        %s572 = smul.u32 2, %s32
        %p573 = scmp.lt.s32.totalorder %s572, 3
        %s574 = scalar_select %p573, %s572, 3
        %s575 = scalar_lea.vmem %s2, %s574
        %p576 = pneg %p113
        %p577 = pneg %p110
        %s578 = smul.u32 2, %s32
        %p579 = scmp.lt.s32.totalorder %s578, 3
        %s580 = scalar_select %p579, %s578, 3
        %s581 = scalar_lea.vmem %s3, %s580
        %p582 = pneg %p139
        %p583 = pneg %p136
        %s584 = smul.u32 2, %s32
        %p585 = scmp.lt.s32.totalorder %s584, 3
        %s586 = scalar_select %p585, %s584, 3
        %s587 = smul.addr %s586, 8
        %s588 = scalar_lea.vmem %s4, %s587
        %p589 = pneg %p165
        %p590 = pneg %p162
        %p591 = scmp.lt.s32.totalorder %s33, 1
        %s592 = scalar_select %p591, %s33, 1
        %s593 = smul.addr %s592, 4
        %s594 = smul.addr %s593, 4
        %s595 = scalar_lea.vmem %s5, %s594
        %p596 = pneg %p191
        %p597 = pneg %p188
        %p598 = scmp.lt.s32.totalorder %s33, 1
        %s599 = scalar_select %p598, %s33, 1
        %s600 = smul.addr %s599, 4
        %s601 = smul.addr %s600, 4
        %s602 = scalar_lea.vmem %s6, %s601
        %p603 = pneg %p217
        %p604 = pneg %p214
        %p605 = scmp.lt.s32.totalorder %s33, 1
        %s606 = scalar_select %p605, %s33, 1
        %s607 = smul.addr %s606, 4
        %s608 = smul.addr %s607, 4
        %s609 = scalar_lea.vmem %s7, %s608
        %p610 = pneg %p243
        %p611 = pneg %p240
        %p612 = scmp.lt.s32.totalorder %s33, 1
        %s613 = scalar_select %p612, %s33, 1
        %s614 = smul.addr %s613, 6
        %s615 = smul.addr %s614, 4
        %s616 = scalar_lea.vmem %s8, %s615
        %p617 = pneg %p269
        %p618 = pneg %p266
        %p619 = scmp.lt.s32.totalorder %s33, 1
        %s620 = scalar_select %p619, %s33, 1
        %s621 = smul.addr %s620, 4
        %s622 = smul.addr %s621, 4
        %s623 = scalar_lea.vmem %s9, %s622
        %p624 = pneg %p295
        %p625 = pneg %p292
        %p626 = scmp.lt.s32.totalorder %s33, 1
        %s627 = scalar_select %p626, %s33, 1
        %s628 = smul.addr %s627, 4
        %s629 = smul.addr %s628, 4
        %s630 = scalar_lea.vmem %s10, %s629
        %p631 = pneg %p321
        %p632 = pneg %p318
        %p633 = scmp.lt.s32.totalorder %s33, 1
        %s634 = scalar_select %p633, %s33, 1
        %s635 = smul.addr %s634, 8
        %s636 = smul.addr %s635, 4
        %s637 = scalar_lea.vmem %s11, %s636
        %p638 = pneg %p347
        %p639 = pneg %p344
        %p640 = scmp.lt.s32.totalorder %s33, 1
        %s641 = scalar_select %p640, %s33, 1
        %s642 = smul.addr %s641, 2
        %s643 = smul.addr %s642, 8
        %s644 = scalar_lea.vmem %s12, %s643
        %p645 = pneg %p373
        %p646 = pneg %p370
        %p647 = pneg %p394
        %p648 = pneg %p391
        %p649 = pneg %p420
        %p650 = pneg %p417
        %s651 = sand.u32 %s407, 1
        %s652 = scalar_lea.sflag [#allocation4], %s651
        %s653 = sand.u32 %s407, 1
        %s654 = smul.addr %s653, 16
        %s655 = scalar_lea.vmem [#allocation3], %s654
        %s656 = smul.u32 2, %s32
        %p657 = scmp.lt.s32.totalorder %s656, 3
        %s658 = scalar_select %p657, %s656, 3
        %s659 = smul.addr %s658, 8
        %s660 = scalar_lea.vmem %s0, %s659
        %s661 = smul.u32 2, %s32
        %s662 = smul.u32 2, %s32
        %p663 = scmp.lt.s32.totalorder %s662, 3
        %s664 = scalar_select %p663, %s662, 3
        %s665 = smul.addr %s664, 2
        %s666 = smul.addr %s665, 8
        %s667 = scalar_lea.vmem %s1, %s666
        %s668 = smul.u32 2, %s32
        %s669 = smul.u32 2, %s32
        %p670 = scmp.lt.s32.totalorder %s669, 3
        %s671 = scalar_select %p670, %s669, 3
        %s672 = scalar_lea.vmem %s2, %s671
        %s673 = smul.u32 2, %s32
        %s674 = smul.u32 2, %s32
        %p675 = scmp.lt.s32.totalorder %s674, 3
        %s676 = scalar_select %p675, %s674, 3
        %s677 = scalar_lea.vmem %s3, %s676
        %s678 = smul.u32 2, %s32
        %s679 = smul.u32 2, %s32
        %p680 = scmp.lt.s32.totalorder %s679, 3
        %s681 = scalar_select %p680, %s679, 3
        %s682 = smul.addr %s681, 8
        %s683 = scalar_lea.vmem %s4, %s682
        %s684 = smul.u32 2, %s32
        %p685 = scmp.lt.s32.totalorder %s33, 1
        %s686 = scalar_select %p685, %s33, 1
        %s687 = smul.addr %s686, 4
        %s688 = smul.addr %s687, 4
        %s689 = scalar_lea.vmem %s5, %s688
        %p690 = scmp.lt.s32.totalorder %s33, 1
        %s691 = scalar_select %p690, %s33, 1
        %s692 = smul.addr %s691, 4
        %s693 = smul.addr %s692, 4
        %s694 = scalar_lea.vmem %s6, %s693
        %p695 = scmp.lt.s32.totalorder %s33, 1
        %s696 = scalar_select %p695, %s33, 1
        %s697 = smul.addr %s696, 4
        %s698 = smul.addr %s697, 4
        %s699 = scalar_lea.vmem %s7, %s698
        %p700 = scmp.lt.s32.totalorder %s33, 1
        %s701 = scalar_select %p700, %s33, 1
        %s702 = smul.addr %s701, 6
        %s703 = smul.addr %s702, 4
        %s704 = scalar_lea.vmem %s8, %s703
        %p705 = scmp.lt.s32.totalorder %s33, 1
        %s706 = scalar_select %p705, %s33, 1
        %s707 = smul.addr %s706, 4
        %s708 = smul.addr %s707, 4
        %s709 = scalar_lea.vmem %s9, %s708
        %p710 = scmp.lt.s32.totalorder %s33, 1
        %s711 = scalar_select %p710, %s33, 1
        %s712 = smul.addr %s711, 4
        %s713 = smul.addr %s712, 4
        %s714 = scalar_lea.vmem %s10, %s713
        %p715 = scmp.lt.s32.totalorder %s33, 1
        %s716 = scalar_select %p715, %s33, 1
        %s717 = smul.addr %s716, 8
        %s718 = smul.addr %s717, 4
        %s719 = scalar_lea.vmem %s11, %s718
        %p720 = scmp.lt.s32.totalorder %s33, 1
        %s721 = scalar_select %p720, %s33, 1
        %s722 = smul.addr %s721, 2
        %s723 = smul.addr %s722, 8
        %s724 = scalar_lea.vmem %s12, %s723
        %s725 = smul.u32 2, %s32
        %p727 = scmp.eq.s32.totalorder %s33, 0
        // Predicated region
        $region77: #{_lambda_.1} parent=75 // pred_check
          %p728 = pneg %p727
        $region78: #{_lambda_.1} parent=75 // pred_check_branch
          %730 = sbr.rel (%p728) target = $region80
        $region79: #{_lambda_.1} parent=75 // pred_region
          %v731 = vld [vmem:[%s660] sm:$0xff]
          %s732 = scalar_lea.vmem %s660, 8
          %v733 = vld [vmem:[%s732] sm:$0xff]
          %vm734 = vcmask 261120
          %735 = vst.msk [vmem:[#allocation2] sm:$0xff] %vm734, %v731
          %736 = vst.msk [vmem:[#allocation2 + $0x8] sm:$0xff] %vm734, %v733
        $region80: #{_lambda_.1} parent=75 // pred_fallthru
          _
        %v737 = vld [vmem:[#allocation2] sm:$0xff]
        %v738 = vld [vmem:[#allocation2 + $0x8] sm:$0xff]
        %v739 = vld [vmem:[%s683] sm:$0xff]
        %s740 = scalar_lea.vmem %s683, 8
        %v741 = vld [vmem:[%s740] sm:$0xff]
        %v742 = vld [vmem:[%s724] sm:$0xff]
        %v743 = vld [vmem:[%s724 + $0x8] sm:$0x1f]
        %v744 = vlaneseq
        %v745 = vshrl.u32 %v744, 7
        %v746 = vlaneseq
        %v747 = vand.u32 %v746, 127
        %vm748 = vcmp.gt.s32.totalorder %v747, %v745
        %v749 = vsel %vm748, -1e+09, 0.0
        %v750 = vpack.c.bf16 %v738, %v737
        %v751 = vld [vmem:[%s689] sm:$0xf]
        %v752 = vld [vmem:[%s689 + $0x4] sm:$0xf]
        %v753 = vld [vmem:[%s689 + $0x8] sm:$0xf]
        %v754 = vld [vmem:[%s689 + $0xc] sm:$0xf]
        %v755 = vlaneseq
        %v756 = vshrl.u32 %v755, 7
        %v757 = vsub.s32 0, %v756
        %v758 = vrot.slane %v742, %v757
        %v763 = vunpack.c.l.b16 %v751
        %v764 = vunpack.c.l.b16 %v752
        %v765 = vunpack.c.l.b16 %v753
        %v766 = vunpack.c.l.b16 %v754
        %v767 = vpack.c.b16 %v764, %v763
        %v768 = vpack.c.b16 %v766, %v765
        %vm771 = vcmask 261120
        %v773 = vsel %vm771, %v750, 0
        %775 = vmatprep.subr.bf16.mxu0 0
        %776 = vmatpush1.bf16.msra.mxu0 %v767
        %777 = vmatprep.subr.bf16.mxu0 0
        %778 = vmatpush1.bf16.msra.mxu0 %v768
        %779 = vmatprep.subr.bf16.mxu0 0
        %780 = vmatpush1.bf16.msra.mxu0 0
        %781 = vmatprep.subr.bf16.mxu0 0
        %782 = vmatpush1.bf16.msra.mxu0 0
        %783 = vmatprep.subr.bf16.mxu0 0
        %784 = vmatpush1.bf16.msra.mxu0 0
        %785 = vmatprep.subr.bf16.mxu0 0
        %786 = vmatpush1.bf16.msra.mxu0 0
        %787 = vmatprep.subr.bf16.mxu0 0
        %788 = vmatpush1.bf16.msra.mxu0 0
        %789 = vmatprep.subr.bf16.mxu0 0
        %790 = vmatpush1.bf16.msra.mxu0 0
        %791 = vmatprep.subr.bf16.mxu0 0
        %792 = vmatpush1.bf16.msra.mxu0 0
        %793 = vmatprep.subr.bf16.mxu0 0
        %794 = vmatpush1.bf16.msra.mxu0 0
        %795 = vmatprep.subr.bf16.mxu0 0
        %796 = vmatpush1.bf16.msra.mxu0 0
        %797 = vmatprep.subr.bf16.mxu0 0
        %798 = vmatpush1.bf16.msra.mxu0 0
        %799 = vmatprep.subr.bf16.mxu0 0
        %800 = vmatpush1.bf16.msra.mxu0 0
        %801 = vmatprep.subr.bf16.mxu0 0
        %802 = vmatpush1.bf16.msra.mxu0 0
        %803 = vmatprep.subr.bf16.mxu0 0
        %804 = vmatpush1.bf16.msra.mxu0 0
        %805 = vmatprep.subr.bf16.mxu0 0
        %806 = vmatpush1.bf16.msra.mxu0 0
        %807 = vmatprep.mubr.bf16.mxu0 0
        %808 = vmatmul.mubr.bf16.gmra.mrb[0].mxu0 %v773
        %v809 = vpop.f32.mrb[0].mxu0
        %v810 = vadd.f32 %v758, %v809
        %v811 = vpop.f32.mrb[0].mxu0
        %v812 = vpop.f32.mrb[0].mxu0
        %v813 = vadd.f32 %v758, %v812
        %v814 = vpop.f32.mrb[0].mxu0
        %815 = vdwg.mxu0
        %v816 = vld [vmem:[%s672] sm:$0x1]
        %v817 = vld [vmem:[%s672 + $0x1] sm:$0x1]
        %v819 = vlaneseq
        %v820 = vshrl.u32 %v819, 7
        %v821 = vsub.s32 0, %v820
        %v822 = vrot.slane %v816, %v821
        %v824 = vadd.f32 %v749, %v822
        %826 = vrot.lane.b32.xlu0 %v810, 96
        %v827 = vpop.permute.xlu0 %826
        %vm828 = vcmask 64512
        %v829 = vsel %vm828, %v810, 0
        %v831 = vsel %vm828, %v827, 0
        %833 = vmatprep.subr.mxu0 0.0
        %834 = vmatpush1.xpose.msra.mxu0 %v831
        %835 = vmatprep.subr.mxu0 0.0
        %836 = vmatpush1.xpose.msra.mxu0 0.0
        %837 = vmatprep.subr.mxu0 0.0
        %838 = vmatpush1.xpose.msra.mxu0 0.0
        %839 = vmatprep.subr.mxu0 0.0
        %840 = vmatpush1.xpose.msra.mxu0 0.0
        %841 = vmatprep.subr.mxu0 0.0
        %842 = vmatpush1.xpose.msra.mxu0 0.0
        %843 = vmatprep.subr.mxu0 0.0
        %844 = vmatpush1.xpose.msra.mxu0 0.0
        %845 = vmatprep.subr.mxu0 0.0
        %846 = vmatpush1.xpose.msra.mxu0 0.0
        %847 = vmatprep.subr.mxu0 0.0
        %848 = vmatpush1.xpose.msra.mxu0 0.0
        %849 = vmatprep.subr.mxu0 0.0
        %850 = vmatpush1.xpose.msra.mxu0 0.0
        %851 = vmatprep.subr.mxu0 0.0
        %852 = vmatpush1.xpose.msra.mxu0 0.0
        %853 = vmatprep.subr.mxu0 0.0
        %854 = vmatpush1.xpose.msra.mxu0 0.0
        %855 = vmatprep.subr.mxu0 0.0
        %856 = vmatpush1.xpose.msra.mxu0 0.0
        %857 = vmatprep.subr.mxu0 0.0
        %858 = vmatpush1.xpose.msra.mxu0 0.0
        %859 = vmatprep.subr.mxu0 0.0
        %860 = vmatpush1.xpose.msra.mxu0 0.0
        %861 = vmatprep.subr.mxu0 0.0
        %862 = vmatpush1.xpose.msra.mxu0 0.0
        %863 = vmatprep.subr.mxu0 0.0
        %864 = vmatpush1.xpose.msra.mxu0 0.0
        %865 = vmatprep.subr.mxu0 0.0
        %866 = vmatpush1.xpose.msra.mxu0 0.0
        %867 = vmatprep.subr.mxu0 0.0
        %868 = vmatpush1.xpose.msra.mxu0 0.0
        %869 = vmatprep.subr.mxu0 0.0
        %870 = vmatpush1.xpose.msra.mxu0 0.0
        %871 = vmatprep.subr.mxu0 0.0
        %872 = vmatpush1.xpose.msra.mxu0 0.0
        %873 = vmatprep.subr.mxu0 0.0
        %874 = vmatpush1.xpose.msra.mxu0 0.0
        %875 = vmatprep.subr.mxu0 0.0
        %876 = vmatpush1.xpose.msra.mxu0 0.0
        %877 = vmatprep.subr.mxu0 0.0
        %878 = vmatpush1.xpose.msra.mxu0 0.0
        %879 = vmatprep.subr.mxu0 0.0
        %880 = vmatpush1.xpose.msra.mxu0 0.0
        %881 = vmatprep.subr.mxu0 0.0
        %882 = vmatpush1.xpose.msra.mxu0 0.0
        %883 = vmatprep.subr.mxu0 0.0
        %884 = vmatpush1.xpose.msra.mxu0 0.0
        %885 = vmatprep.subr.mxu0 0.0
        %886 = vmatpush1.xpose.msra.mxu0 0.0
        %887 = vmatprep.subr.mxu0 0.0
        %888 = vmatpush1.xpose.msra.mxu0 0.0
        %889 = vmatprep.subr.mxu0 0.0
        %890 = vmatpush1.xpose.msra.mxu0 0.0
        %891 = vmatprep.subr.mxu0 0.0
        %892 = vmatpush1.xpose.msra.mxu0 0.0
        %893 = vmatprep.subr.mxu0 0.0
        %894 = vmatpush1.xpose.msra.mxu0 0.0
        %895 = vmatprep.subr.mxu0 0.0
        %896 = vmatpush1.xpose.msra.mxu0 0.0
        %897 = vmatprep.mubr.f32.mxu0 0.0
        %898 = vmatmul.mubr.f32.gmra.mrb[0].mxu0 %v829
        %v899 = vpop.f32.mrb[0].mxu0
        %v900 = vadd.f32 0.0, %v899
        %v901 = vpop.f32.mrb[0].mxu0
        %902 = vdwg.mxu0
        %v903 = vmul.f32 %v900, 0.35355338
        %v904 = vadd.f32 %v903, %v824
        %v905 = vsel %vm828, %v904, -inf
        %906 = vmax.xlane.f32.xlu0 %v905
        %v907 = vpop.xlane.xlu0 %906
        %v908 = vsub.f32 %v904, %v907
        %v909 = vmul.f32 %v908, 1.442695
        %v910 = vpow.pop %v909
        %v911 = vsel %vm828, %v910, 0.0
        %912 = vadd.xlane.f32.xlu0 %v911
        %v913 = vpop.xlane.xlu0 %912
        %v914 = vrcp.pop %v913
        %v915 = vmul.f32 %v910, %v914
        %v916 = vpack.c.bf16 %v915, %v915
        %v917 = vpack.c.bf16 %v810, %v810
        %919 = vrot.lane.b32.xlu0 %v917, 64
        %v920 = vpop.permute.xlu0 %919
        %v922 = vsel %vm828, %v916, 0
        %vm924 = vcmask 1043456
        %v926 = vsel %vm924, %v920, 0
        %928 = vmatprep.subr.bf16.mxu0 0
        %929 = vmatpush1.bf16.msra.mxu0 %v926
        %930 = vmatprep.subr.bf16.mxu0 0
        %931 = vmatpush1.bf16.msra.mxu0 0
        %932 = vmatprep.subr.bf16.mxu0 0
        %933 = vmatpush1.bf16.msra.mxu0 0
        %934 = vmatprep.subr.bf16.mxu0 0
        %935 = vmatpush1.bf16.msra.mxu0 0
        %936 = vmatprep.subr.bf16.mxu0 0
        %937 = vmatpush1.bf16.msra.mxu0 0
        %938 = vmatprep.subr.bf16.mxu0 0
        %939 = vmatpush1.bf16.msra.mxu0 0
        %940 = vmatprep.subr.bf16.mxu0 0
        %941 = vmatpush1.bf16.msra.mxu0 0
        %942 = vmatprep.subr.bf16.mxu0 0
        %943 = vmatpush1.bf16.msra.mxu0 0
        %944 = vmatprep.subr.bf16.mxu0 0
        %945 = vmatpush1.bf16.msra.mxu0 0
        %946 = vmatprep.subr.bf16.mxu0 0
        %947 = vmatpush1.bf16.msra.mxu0 0
        %948 = vmatprep.subr.bf16.mxu0 0
        %949 = vmatpush1.bf16.msra.mxu0 0
        %950 = vmatprep.subr.bf16.mxu0 0
        %951 = vmatpush1.bf16.msra.mxu0 0
        %952 = vmatprep.subr.bf16.mxu0 0
        %953 = vmatpush1.bf16.msra.mxu0 0
        %954 = vmatprep.subr.bf16.mxu0 0
        %955 = vmatpush1.bf16.msra.mxu0 0
        %956 = vmatprep.subr.bf16.mxu0 0
        %957 = vmatpush1.bf16.msra.mxu0 0
        %958 = vmatprep.subr.bf16.mxu0 0
        %959 = vmatpush1.bf16.msra.mxu0 0
        %960 = vmatprep.mubr.bf16.mxu0 0
        %961 = vmatmul.mubr.bf16.gmra.mrb[0].mxu0 %v922
        %v962 = vpop.f32.mrb[0].mxu0
        %v963 = vadd.f32 0.0, %v962
        %v964 = vpop.f32.mrb[0].mxu0
        %v965 = vpop.f32.mrb[0].mxu0
        %v966 = vpop.f32.mrb[0].mxu0
        %967 = vdwg.mxu0
        %968 = vrot.lane.b32.xlu0 %v810, 120
        %v969 = vpop.permute.xlu0 %968
        %970 = vrot.lane.b32.xlu0 %v810, 88
        %v971 = vpop.permute.xlu0 %970
        %v972 = vsel %vm828, %v969, 0
        %v974 = vsel %vm828, %v971, 0
        %976 = vmatprep.subr.mxu0 0.0
        %977 = vmatpush1.xpose.msra.mxu0 %v974
        %978 = vmatprep.subr.mxu0 0.0
        %979 = vmatpush1.xpose.msra.mxu0 0.0
        %980 = vmatprep.subr.mxu0 0.0
        %981 = vmatpush1.xpose.msra.mxu0 0.0
        %982 = vmatprep.subr.mxu0 0.0
        %983 = vmatpush1.xpose.msra.mxu0 0.0
        %984 = vmatprep.subr.mxu0 0.0
        %985 = vmatpush1.xpose.msra.mxu0 0.0
        %986 = vmatprep.subr.mxu0 0.0
        %987 = vmatpush1.xpose.msra.mxu0 0.0
        %988 = vmatprep.subr.mxu0 0.0
        %989 = vmatpush1.xpose.msra.mxu0 0.0
        %990 = vmatprep.subr.mxu0 0.0
        %991 = vmatpush1.xpose.msra.mxu0 0.0
        %992 = vmatprep.subr.mxu0 0.0
        %993 = vmatpush1.xpose.msra.mxu0 0.0
        %994 = vmatprep.subr.mxu0 0.0
        %995 = vmatpush1.xpose.msra.mxu0 0.0
        %996 = vmatprep.subr.mxu0 0.0
        %997 = vmatpush1.xpose.msra.mxu0 0.0
        %998 = vmatprep.subr.mxu0 0.0
        %999 = vmatpush1.xpose.msra.mxu0 0.0
        %1000 = vmatprep.subr.mxu0 0.0
        %1001 = vmatpush1.xpose.msra.mxu0 0.0
        %1002 = vmatprep.subr.mxu0 0.0
        %1003 = vmatpush1.xpose.msra.mxu0 0.0
        %1004 = vmatprep.subr.mxu0 0.0
        %1005 = vmatpush1.xpose.msra.mxu0 0.0
        %1006 = vmatprep.subr.mxu0 0.0
        %1007 = vmatpush1.xpose.msra.mxu0 0.0
        %1008 = vmatprep.subr.mxu0 0.0
        %1009 = vmatpush1.xpose.msra.mxu0 0.0
        %1010 = vmatprep.subr.mxu0 0.0
        %1011 = vmatpush1.xpose.msra.mxu0 0.0
        %1012 = vmatprep.subr.mxu0 0.0
        %1013 = vmatpush1.xpose.msra.mxu0 0.0
        %1014 = vmatprep.subr.mxu0 0.0
        %1015 = vmatpush1.xpose.msra.mxu0 0.0
        %1016 = vmatprep.subr.mxu0 0.0
        %1017 = vmatpush1.xpose.msra.mxu0 0.0
        %1018 = vmatprep.subr.mxu0 0.0
        %1019 = vmatpush1.xpose.msra.mxu0 0.0
        %1020 = vmatprep.subr.mxu0 0.0
        %1021 = vmatpush1.xpose.msra.mxu0 0.0
        %1022 = vmatprep.subr.mxu0 0.0
        %1023 = vmatpush1.xpose.msra.mxu0 0.0
        %1024 = vmatprep.subr.mxu0 0.0
        %1025 = vmatpush1.xpose.msra.mxu0 0.0
        %1026 = vmatprep.subr.mxu0 0.0
        %1027 = vmatpush1.xpose.msra.mxu0 0.0
        %1028 = vmatprep.subr.mxu0 0.0
        %1029 = vmatpush1.xpose.msra.mxu0 0.0
        %1030 = vmatprep.subr.mxu0 0.0
        %1031 = vmatpush1.xpose.msra.mxu0 0.0
        %1032 = vmatprep.subr.mxu0 0.0
        %1033 = vmatpush1.xpose.msra.mxu0 0.0
        %1034 = vmatprep.subr.mxu0 0.0
        %1035 = vmatpush1.xpose.msra.mxu0 0.0
        %1036 = vmatprep.subr.mxu0 0.0
        %1037 = vmatpush1.xpose.msra.mxu0 0.0
        %1038 = vmatprep.subr.mxu0 0.0
        %1039 = vmatpush1.xpose.msra.mxu0 0.0
        %1040 = vmatprep.mubr.f32.mxu0 0.0
        %1041 = vmatmul.mubr.f32.gmra.mrb[0].mxu0 %v972
        %v1042 = vpop.f32.mrb[0].mxu0
        %v1043 = vadd.f32 0.0, %v1042
        %v1044 = vpop.f32.mrb[0].mxu0
        %1045 = vdwg.mxu0
        %v1046 = vmul.f32 %v1043, 0.35355338
        %v1047 = vadd.f32 %v1046, %v824
        %v1048 = vsel %vm828, %v1047, -inf
        %1049 = vmax.xlane.f32.xlu0 %v1048
        %v1050 = vpop.xlane.xlu0 %1049
        %v1051 = vsub.f32 %v1047, %v1050
        %v1052 = vmul.f32 %v1051, 1.442695
        %v1053 = vpow.pop %v1052
        %v1054 = vsel %vm828, %v1053, 0.0
        %1055 = vadd.xlane.f32.xlu0 %v1054
        %v1056 = vpop.xlane.xlu0 %1055
        %v1057 = vrcp.pop %v1056
        %v1058 = vmul.f32 %v1053, %v1057
        %v1059 = vpack.c.bf16 %v1058, %v1058
        %1060 = vrot.lane.b32.xlu0 %v917, 56
        %v1061 = vpop.permute.xlu0 %1060
        %v1063 = vsel %vm828, %v1059, 0
        %v1066 = vsel %vm924, %v1061, 0
        %1068 = vmatprep.subr.bf16.mxu0 0
        %1069 = vmatpush1.bf16.msra.mxu0 %v1066
        %1070 = vmatprep.subr.bf16.mxu0 0
        %1071 = vmatpush1.bf16.msra.mxu0 0
        %1072 = vmatprep.subr.bf16.mxu0 0
        %1073 = vmatpush1.bf16.msra.mxu0 0
        %1074 = vmatprep.subr.bf16.mxu0 0
        %1075 = vmatpush1.bf16.msra.mxu0 0
        %1076 = vmatprep.subr.bf16.mxu0 0
        %1077 = vmatpush1.bf16.msra.mxu0 0
        %1078 = vmatprep.subr.bf16.mxu0 0
        %1079 = vmatpush1.bf16.msra.mxu0 0
        %1080 = vmatprep.subr.bf16.mxu0 0
        %1081 = vmatpush1.bf16.msra.mxu0 0
        %1082 = vmatprep.subr.bf16.mxu0 0
        %1083 = vmatpush1.bf16.msra.mxu0 0
        %1084 = vmatprep.subr.bf16.mxu0 0
        %1085 = vmatpush1.bf16.msra.mxu0 0
        %1086 = vmatprep.subr.bf16.mxu0 0
        %1087 = vmatpush1.bf16.msra.mxu0 0
        %1088 = vmatprep.subr.bf16.mxu0 0
        %1089 = vmatpush1.bf16.msra.mxu0 0
        %1090 = vmatprep.subr.bf16.mxu0 0
        %1091 = vmatpush1.bf16.msra.mxu0 0
        %1092 = vmatprep.subr.bf16.mxu0 0
        %1093 = vmatpush1.bf16.msra.mxu0 0
        %1094 = vmatprep.subr.bf16.mxu0 0
        %1095 = vmatpush1.bf16.msra.mxu0 0
        %1096 = vmatprep.subr.bf16.mxu0 0
        %1097 = vmatpush1.bf16.msra.mxu0 0
        %1098 = vmatprep.subr.bf16.mxu0 0
        %1099 = vmatpush1.bf16.msra.mxu0 0
        %1100 = vmatprep.mubr.bf16.mxu0 0
        %1101 = vmatmul.mubr.bf16.gmra.mrb[0].mxu0 %v1063
        %v1102 = vpop.f32.mrb[0].mxu0
        %v1103 = vadd.f32 0.0, %v1102
        %v1104 = vpop.f32.mrb[0].mxu0
        %v1105 = vpop.f32.mrb[0].mxu0
        %v1106 = vpop.f32.mrb[0].mxu0
        %1107 = vdwg.mxu0
        %1108 = vrot.lane.b32.xlu0 %v810, 112
        %v1109 = vpop.permute.xlu0 %1108
        %1110 = vrot.lane.b32.xlu0 %v810, 80
        %v1111 = vpop.permute.xlu0 %1110
        %v1112 = vsel %vm828, %v1109, 0
        %v1114 = vsel %vm828, %v1111, 0
        %1116 = vmatprep.subr.mxu0 0.0
        %1117 = vmatpush1.xpose.msra.mxu0 %v1114
        %1118 = vmatprep.subr.mxu0 0.0
        %1119 = vmatpush1.xpose.msra.mxu0 0.0
        %1120 = vmatprep.subr.mxu0 0.0
        %1121 = vmatpush1.xpose.msra.mxu0 0.0
        %1122 = vmatprep.subr.mxu0 0.0
        %1123 = vmatpush1.xpose.msra.mxu0 0.0
        %1124 = vmatprep.subr.mxu0 0.0
        %1125 = vmatpush1.xpose.msra.mxu0 0.0
        %1126 = vmatprep.subr.mxu0 0.0
        %1127 = vmatpush1.xpose.msra.mxu0 0.0
        %1128 = vmatprep.subr.mxu0 0.0
        %1129 = vmatpush1.xpose.msra.mxu0 0.0
        %1130 = vmatprep.subr.mxu0 0.0
        %1131 = vmatpush1.xpose.msra.mxu0 0.0
        %1132 = vmatprep.subr.mxu0 0.0
        %1133 = vmatpush1.xpose.msra.mxu0 0.0
        %1134 = vmatprep.subr.mxu0 0.0
        %1135 = vmatpush1.xpose.msra.mxu0 0.0
        %1136 = vmatprep.subr.mxu0 0.0
        %1137 = vmatpush1.xpose.msra.mxu0 0.0
        %1138 = vmatprep.subr.mxu0 0.0
        %1139 = vmatpush1.xpose.msra.mxu0 0.0
        %1140 = vmatprep.subr.mxu0 0.0
        %1141 = vmatpush1.xpose.msra.mxu0 0.0
        %1142 = vmatprep.subr.mxu0 0.0
        %1143 = vmatpush1.xpose.msra.mxu0 0.0
        %1144 = vmatprep.subr.mxu0 0.0
        %1145 = vmatpush1.xpose.msra.mxu0 0.0
        %1146 = vmatprep.subr.mxu0 0.0
        %1147 = vmatpush1.xpose.msra.mxu0 0.0
        %1148 = vmatprep.subr.mxu0 0.0
        %1149 = vmatpush1.xpose.msra.mxu0 0.0
        %1150 = vmatprep.subr.mxu0 0.0
        %1151 = vmatpush1.xpose.msra.mxu0 0.0
        %1152 = vmatprep.subr.mxu0 0.0
        %1153 = vmatpush1.xpose.msra.mxu0 0.0
        %1154 = vmatprep.subr.mxu0 0.0
        %1155 = vmatpush1.xpose.msra.mxu0 0.0
        %1156 = vmatprep.subr.mxu0 0.0
        %1157 = vmatpush1.xpose.msra.mxu0 0.0
        %1158 = vmatprep.subr.mxu0 0.0
        %1159 = vmatpush1.xpose.msra.mxu0 0.0
        %1160 = vmatprep.subr.mxu0 0.0
        %1161 = vmatpush1.xpose.msra.mxu0 0.0
        %1162 = vmatprep.subr.mxu0 0.0
        %1163 = vmatpush1.xpose.msra.mxu0 0.0
        %1164 = vmatprep.subr.mxu0 0.0
        %1165 = vmatpush1.xpose.msra.mxu0 0.0
        %1166 = vmatprep.subr.mxu0 0.0
        %1167 = vmatpush1.xpose.msra.mxu0 0.0
        %1168 = vmatprep.subr.mxu0 0.0
        %1169 = vmatpush1.xpose.msra.mxu0 0.0
        %1170 = vmatprep.subr.mxu0 0.0
        %1171 = vmatpush1.xpose.msra.mxu0 0.0
        %1172 = vmatprep.subr.mxu0 0.0
        %1173 = vmatpush1.xpose.msra.mxu0 0.0
        %1174 = vmatprep.subr.mxu0 0.0
        %1175 = vmatpush1.xpose.msra.mxu0 0.0
        %1176 = vmatprep.subr.mxu0 0.0
        %1177 = vmatpush1.xpose.msra.mxu0 0.0
        %1178 = vmatprep.subr.mxu0 0.0
        %1179 = vmatpush1.xpose.msra.mxu0 0.0
        %1180 = vmatprep.mubr.f32.mxu0 0.0
        %1181 = vmatmul.mubr.f32.gmra.mrb[0].mxu0 %v1112
        %v1182 = vpop.f32.mrb[0].mxu0
        %v1183 = vadd.f32 0.0, %v1182
        %v1184 = vpop.f32.mrb[0].mxu0
        %1185 = vdwg.mxu0
        %v1186 = vmul.f32 %v1183, 0.35355338
        %v1187 = vadd.f32 %v1186, %v824
        %v1188 = vsel %vm828, %v1187, -inf
        %1189 = vmax.xlane.f32.xlu0 %v1188
        %v1190 = vpop.xlane.xlu0 %1189
        %v1191 = vsub.f32 %v1187, %v1190
        %v1192 = vmul.f32 %v1191, 1.442695
        %v1193 = vpow.pop %v1192
        %v1194 = vsel %vm828, %v1193, 0.0
        %1195 = vadd.xlane.f32.xlu0 %v1194
        %v1196 = vpop.xlane.xlu0 %1195
        %v1197 = vrcp.pop %v1196
        %v1198 = vmul.f32 %v1193, %v1197
        %v1199 = vpack.c.bf16 %v1198, %v1198
        %1200 = vrot.lane.b32.xlu0 %v917, 48
        %v1201 = vpop.permute.xlu0 %1200
        %v1203 = vsel %vm828, %v1199, 0
        %v1206 = vsel %vm924, %v1201, 0
        %1208 = vmatprep.subr.bf16.mxu0 0
        %1209 = vmatpush1.bf16.msra.mxu0 %v1206
        %1210 = vmatprep.subr.bf16.mxu0 0
        %1211 = vmatpush1.bf16.msra.mxu0 0
        %1212 = vmatprep.subr.bf16.mxu0 0
        %1213 = vmatpush1.bf16.msra.mxu0 0
        %1214 = vmatprep.subr.bf16.mxu0 0
        %1215 = vmatpush1.bf16.msra.mxu0 0
        %1216 = vmatprep.subr.bf16.mxu0 0
        %1217 = vmatpush1.bf16.msra.mxu0 0
        %1218 = vmatprep.subr.bf16.mxu0 0
        %1219 = vmatpush1.bf16.msra.mxu0 0
        %1220 = vmatprep.subr.bf16.mxu0 0
        %1221 = vmatpush1.bf16.msra.mxu0 0
        %1222 = vmatprep.subr.bf16.mxu0 0
        %1223 = vmatpush1.bf16.msra.mxu0 0
        %1224 = vmatprep.subr.bf16.mxu0 0
        %1225 = vmatpush1.bf16.msra.mxu0 0
        %1226 = vmatprep.subr.bf16.mxu0 0
        %1227 = vmatpush1.bf16.msra.mxu0 0
        %1228 = vmatprep.subr.bf16.mxu0 0
        %1229 = vmatpush1.bf16.msra.mxu0 0
        %1230 = vmatprep.subr.bf16.mxu0 0
        %1231 = vmatpush1.bf16.msra.mxu0 0
        %1232 = vmatprep.subr.bf16.mxu0 0
        %1233 = vmatpush1.bf16.msra.mxu0 0
        %1234 = vmatprep.subr.bf16.mxu0 0
        %1235 = vmatpush1.bf16.msra.mxu0 0
        %1236 = vmatprep.subr.bf16.mxu0 0
        %1237 = vmatpush1.bf16.msra.mxu0 0
        %1238 = vmatprep.subr.bf16.mxu0 0
        %1239 = vmatpush1.bf16.msra.mxu0 0
        %1240 = vmatprep.mubr.bf16.mxu0 0
        %1241 = vmatmul.mubr.bf16.gmra.mrb[0].mxu0 %v1203
        %v1242 = vpop.f32.mrb[0].mxu0
        %v1243 = vadd.f32 0.0, %v1242
        %v1244 = vpop.f32.mrb[0].mxu0
        %v1245 = vpop.f32.mrb[0].mxu0
        %v1246 = vpop.f32.mrb[0].mxu0
        %1247 = vdwg.mxu0
        %1248 = vrot.lane.b32.xlu0 %v810, 104
        %v1249 = vpop.permute.xlu0 %1248
        %1250 = vrot.lane.b32.xlu0 %v810, 72
        %v1251 = vpop.permute.xlu0 %1250
        %v1252 = vsel %vm828, %v1249, 0
        %v1254 = vsel %vm828, %v1251, 0
        %1256 = vmatprep.subr.mxu0 0.0
        %1257 = vmatpush1.xpose.msra.mxu0 %v1254
        %1258 = vmatprep.subr.mxu0 0.0
        %1259 = vmatpush1.xpose.msra.mxu0 0.0
        %1260 = vmatprep.subr.mxu0 0.0
        %1261 = vmatpush1.xpose.msra.mxu0 0.0
        %1262 = vmatprep.subr.mxu0 0.0
        %1263 = vmatpush1.xpose.msra.mxu0 0.0
        %1264 = vmatprep.subr.mxu0 0.0
        %1265 = vmatpush1.xpose.msra.mxu0 0.0
        %1266 = vmatprep.subr.mxu0 0.0
        %1267 = vmatpush1.xpose.msra.mxu0 0.0
        %1268 = vmatprep.subr.mxu0 0.0
        %1269 = vmatpush1.xpose.msra.mxu0 0.0
        %1270 = vmatprep.subr.mxu0 0.0
        %1271 = vmatpush1.xpose.msra.mxu0 0.0
        %1272 = vmatprep.subr.mxu0 0.0
        %1273 = vmatpush1.xpose.msra.mxu0 0.0
        %1274 = vmatprep.subr.mxu0 0.0
        %1275 = vmatpush1.xpose.msra.mxu0 0.0
        %1276 = vmatprep.subr.mxu0 0.0
        %1277 = vmatpush1.xpose.msra.mxu0 0.0
        %1278 = vmatprep.subr.mxu0 0.0
        %1279 = vmatpush1.xpose.msra.mxu0 0.0
        %1280 = vmatprep.subr.mxu0 0.0
        %1281 = vmatpush1.xpose.msra.mxu0 0.0
        %1282 = vmatprep.subr.mxu0 0.0
        %1283 = vmatpush1.xpose.msra.mxu0 0.0
        %1284 = vmatprep.subr.mxu0 0.0
        %1285 = vmatpush1.xpose.msra.mxu0 0.0
        %1286 = vmatprep.subr.mxu0 0.0
        %1287 = vmatpush1.xpose.msra.mxu0 0.0
        %1288 = vmatprep.subr.mxu0 0.0
        %1289 = vmatpush1.xpose.msra.mxu0 0.0
        %1290 = vmatprep.subr.mxu0 0.0
        %1291 = vmatpush1.xpose.msra.mxu0 0.0
        %1292 = vmatprep.subr.mxu0 0.0
        %1293 = vmatpush1.xpose.msra.mxu0 0.0
        %1294 = vmatprep.subr.mxu0 0.0
        %1295 = vmatpush1.xpose.msra.mxu0 0.0
        %1296 = vmatprep.subr.mxu0 0.0
        %1297 = vmatpush1.xpose.msra.mxu0 0.0
        %1298 = vmatprep.subr.mxu0 0.0
        %1299 = vmatpush1.xpose.msra.mxu0 0.0
        %1300 = vmatprep.subr.mxu0 0.0
        %1301 = vmatpush1.xpose.msra.mxu0 0.0
        %1302 = vmatprep.subr.mxu0 0.0
        %1303 = vmatpush1.xpose.msra.mxu0 0.0
        %1304 = vmatprep.subr.mxu0 0.0
        %1305 = vmatpush1.xpose.msra.mxu0 0.0
        %1306 = vmatprep.subr.mxu0 0.0
        %1307 = vmatpush1.xpose.msra.mxu0 0.0
        %1308 = vmatprep.subr.mxu0 0.0
        %1309 = vmatpush1.xpose.msra.mxu0 0.0
        %1310 = vmatprep.subr.mxu0 0.0
        %1311 = vmatpush1.xpose.msra.mxu0 0.0
        %1312 = vmatprep.subr.mxu0 0.0
        %1313 = vmatpush1.xpose.msra.mxu0 0.0
        %1314 = vmatprep.subr.mxu0 0.0
        %1315 = vmatpush1.xpose.msra.mxu0 0.0
        %1316 = vmatprep.subr.mxu0 0.0
        %1317 = vmatpush1.xpose.msra.mxu0 0.0
        %1318 = vmatprep.subr.mxu0 0.0
        %1319 = vmatpush1.xpose.msra.mxu0 0.0
        %1320 = vmatprep.mubr.f32.mxu0 0.0
        %1321 = vmatmul.mubr.f32.gmra.mrb[0].mxu0 %v1252
        %v1322 = vpop.f32.mrb[0].mxu0
        %v1323 = vadd.f32 0.0, %v1322
        %v1324 = vpop.f32.mrb[0].mxu0
        %1325 = vdwg.mxu0
        %v1326 = vmul.f32 %v1323, 0.35355338
        %v1327 = vadd.f32 %v1326, %v824
        %v1328 = vsel %vm828, %v1327, -inf
        %1329 = vmax.xlane.f32.xlu0 %v1328
        %v1330 = vpop.xlane.xlu0 %1329
        %v1331 = vsub.f32 %v1327, %v1330
        %v1332 = vmul.f32 %v1331, 1.442695
        %v1333 = vpow.pop %v1332
        %v1334 = vsel %vm828, %v1333, 0.0
        %1335 = vadd.xlane.f32.xlu0 %v1334
        %v1336 = vpop.xlane.xlu0 %1335
        %v1337 = vrcp.pop %v1336
        %v1338 = vmul.f32 %v1333, %v1337
        %v1339 = vpack.c.bf16 %v1338, %v1338
        %1340 = vrot.lane.b32.xlu0 %v917, 40
        %v1341 = vpop.permute.xlu0 %1340
        %v1343 = vsel %vm828, %v1339, 0
        %v1346 = vsel %vm924, %v1341, 0
        %1348 = vmatprep.subr.bf16.mxu0 0
        %1349 = vmatpush1.bf16.msra.mxu0 %v1346
        %1350 = vmatprep.subr.bf16.mxu0 0
        %1351 = vmatpush1.bf16.msra.mxu0 0
        %1352 = vmatprep.subr.bf16.mxu0 0
        %1353 = vmatpush1.bf16.msra.mxu0 0
        %1354 = vmatprep.subr.bf16.mxu0 0
        %1355 = vmatpush1.bf16.msra.mxu0 0
        %1356 = vmatprep.subr.bf16.mxu0 0
        %1357 = vmatpush1.bf16.msra.mxu0 0
        %1358 = vmatprep.subr.bf16.mxu0 0
        %1359 = vmatpush1.bf16.msra.mxu0 0
        %1360 = vmatprep.subr.bf16.mxu0 0
        %1361 = vmatpush1.bf16.msra.mxu0 0
        %1362 = vmatprep.subr.bf16.mxu0 0
        %1363 = vmatpush1.bf16.msra.mxu0 0
        %1364 = vmatprep.subr.bf16.mxu0 0
        %1365 = vmatpush1.bf16.msra.mxu0 0
        %1366 = vmatprep.subr.bf16.mxu0 0
        %1367 = vmatpush1.bf16.msra.mxu0 0
        %1368 = vmatprep.subr.bf16.mxu0 0
        %1369 = vmatpush1.bf16.msra.mxu0 0
        %1370 = vmatprep.subr.bf16.mxu0 0
        %1371 = vmatpush1.bf16.msra.mxu0 0
        %1372 = vmatprep.subr.bf16.mxu0 0
        %1373 = vmatpush1.bf16.msra.mxu0 0
        %1374 = vmatprep.subr.bf16.mxu0 0
        %1375 = vmatpush1.bf16.msra.mxu0 0
        %1376 = vmatprep.subr.bf16.mxu0 0
        %1377 = vmatpush1.bf16.msra.mxu0 0
        %1378 = vmatprep.subr.bf16.mxu0 0
        %1379 = vmatpush1.bf16.msra.mxu0 0
        %1380 = vmatprep.mubr.bf16.mxu0 0
        %1381 = vmatmul.mubr.bf16.gmra.mrb[0].mxu0 %v1343
        %v1382 = vpop.f32.mrb[0].mxu0
        %v1383 = vadd.f32 0.0, %v1382
        %v1384 = vpop.f32.mrb[0].mxu0
        %v1385 = vpop.f32.mrb[0].mxu0
        %v1386 = vpop.f32.mrb[0].mxu0
        %1387 = vdwg.mxu0
        %1389 = vrot.lane.b32.xlu0 %v1103, 8
        %v1390 = vpop.permute.xlu0 %1389
        %1393 = vrot.lane.b32.xlu0 %v1243, 16
        %v1394 = vpop.permute.xlu0 %1393
        %1397 = vrot.lane.b32.xlu0 %v1383, 24
        %v1398 = vpop.permute.xlu0 %1397
        %v1400 = vsel %vm828, %v963, %v1390
        %vm1401 = vcmask 130048
        %v1402 = vsel %vm1401, %v1400, %v1394
        %vm1403 = vcmask 195584
        %v1404 = vsel %vm1403, %v1402, %v1398
        %v1406 = vlaneseq
        %v1407 = vshrl.u32 %v1406, 7
        %v1408 = vsub.s32 0, %v1407
        %v1409 = vrot.slane %v817, %v1408
        %v1411 = vadd.f32 %v749, %v1409
        %1413 = vrot.lane.b32.xlu0 %v813, 96
        %v1414 = vpop.permute.xlu0 %1413
        %v1415 = vsel %vm828, %v813, 0
        %v1417 = vsel %vm828, %v1414, 0
        %1419 = vmatprep.subr.mxu0 0.0
        %1420 = vmatpush1.xpose.msra.mxu0 %v1417
        %1421 = vmatprep.subr.mxu0 0.0
        %1422 = vmatpush1.xpose.msra.mxu0 0.0
        %1423 = vmatprep.subr.mxu0 0.0
        %1424 = vmatpush1.xpose.msra.mxu0 0.0
        %1425 = vmatprep.subr.mxu0 0.0
        %1426 = vmatpush1.xpose.msra.mxu0 0.0
        %1427 = vmatprep.subr.mxu0 0.0
        %1428 = vmatpush1.xpose.msra.mxu0 0.0
        %1429 = vmatprep.subr.mxu0 0.0
        %1430 = vmatpush1.xpose.msra.mxu0 0.0
        %1431 = vmatprep.subr.mxu0 0.0
        %1432 = vmatpush1.xpose.msra.mxu0 0.0
        %1433 = vmatprep.subr.mxu0 0.0
        %1434 = vmatpush1.xpose.msra.mxu0 0.0
        %1435 = vmatprep.subr.mxu0 0.0
        %1436 = vmatpush1.xpose.msra.mxu0 0.0
        %1437 = vmatprep.subr.mxu0 0.0
        %1438 = vmatpush1.xpose.msra.mxu0 0.0
        %1439 = vmatprep.subr.mxu0 0.0
        %1440 = vmatpush1.xpose.msra.mxu0 0.0
        %1441 = vmatprep.subr.mxu0 0.0
        %1442 = vmatpush1.xpose.msra.mxu0 0.0
        %1443 = vmatprep.subr.mxu0 0.0
        %1444 = vmatpush1.xpose.msra.mxu0 0.0
        %1445 = vmatprep.subr.mxu0 0.0
        %1446 = vmatpush1.xpose.msra.mxu0 0.0
        %1447 = vmatprep.subr.mxu0 0.0
        %1448 = vmatpush1.xpose.msra.mxu0 0.0
        %1449 = vmatprep.subr.mxu0 0.0
        %1450 = vmatpush1.xpose.msra.mxu0 0.0
        %1451 = vmatprep.subr.mxu0 0.0
        %1452 = vmatpush1.xpose.msra.mxu0 0.0
        %1453 = vmatprep.subr.mxu0 0.0
        %1454 = vmatpush1.xpose.msra.mxu0 0.0
        %1455 = vmatprep.subr.mxu0 0.0
        %1456 = vmatpush1.xpose.msra.mxu0 0.0
        %1457 = vmatprep.subr.mxu0 0.0
        %1458 = vmatpush1.xpose.msra.mxu0 0.0
        %1459 = vmatprep.subr.mxu0 0.0
        %1460 = vmatpush1.xpose.msra.mxu0 0.0
        %1461 = vmatprep.subr.mxu0 0.0
        %1462 = vmatpush1.xpose.msra.mxu0 0.0
        %1463 = vmatprep.subr.mxu0 0.0
        %1464 = vmatpush1.xpose.msra.mxu0 0.0
        %1465 = vmatprep.subr.mxu0 0.0
        %1466 = vmatpush1.xpose.msra.mxu0 0.0
        %1467 = vmatprep.subr.mxu0 0.0
        %1468 = vmatpush1.xpose.msra.mxu0 0.0
        %1469 = vmatprep.subr.mxu0 0.0
        %1470 = vmatpush1.xpose.msra.mxu0 0.0
        %1471 = vmatprep.subr.mxu0 0.0
        %1472 = vmatpush1.xpose.msra.mxu0 0.0
        %1473 = vmatprep.subr.mxu0 0.0
        %1474 = vmatpush1.xpose.msra.mxu0 0.0
        %1475 = vmatprep.subr.mxu0 0.0
        %1476 = vmatpush1.xpose.msra.mxu0 0.0
        %1477 = vmatprep.subr.mxu0 0.0
        %1478 = vmatpush1.xpose.msra.mxu0 0.0
        %1479 = vmatprep.subr.mxu0 0.0
        %1480 = vmatpush1.xpose.msra.mxu0 0.0
        %1481 = vmatprep.subr.mxu0 0.0
        %1482 = vmatpush1.xpose.msra.mxu0 0.0
        %1483 = vmatprep.mubr.f32.mxu0 0.0
        %1484 = vmatmul.mubr.f32.gmra.mrb[0].mxu0 %v1415
        %v1485 = vpop.f32.mrb[0].mxu0
        %v1486 = vadd.f32 0.0, %v1485
        %v1487 = vpop.f32.mrb[0].mxu0
        %1488 = vdwg.mxu0
        %v1489 = vmul.f32 %v1486, 0.35355338
        %v1490 = vadd.f32 %v1489, %v1411
        %v1491 = vsel %vm828, %v1490, -inf
        %1492 = vmax.xlane.f32.xlu0 %v1491
        %v1493 = vpop.xlane.xlu0 %1492
        %v1494 = vsub.f32 %v1490, %v1493
        %v1495 = vmul.f32 %v1494, 1.442695
        %v1496 = vpow.pop %v1495
        %v1497 = vsel %vm828, %v1496, 0.0
        %1498 = vadd.xlane.f32.xlu0 %v1497
        %v1499 = vpop.xlane.xlu0 %1498
        %v1500 = vrcp.pop %v1499
        %v1501 = vmul.f32 %v1496, %v1500
        %v1502 = vpack.c.bf16 %v1501, %v1501
        %v1503 = vpack.c.bf16 %v813, %v813
        %1505 = vrot.lane.b32.xlu0 %v1503, 64
        %v1506 = vpop.permute.xlu0 %1505
        %v1508 = vsel %vm828, %v1502, 0
        %v1511 = vsel %vm924, %v1506, 0
        %1513 = vmatprep.subr.bf16.mxu0 0
        %1514 = vmatpush1.bf16.msra.mxu0 %v1511
        %1515 = vmatprep.subr.bf16.mxu0 0
        %1516 = vmatpush1.bf16.msra.mxu0 0
        %1517 = vmatprep.subr.bf16.mxu0 0
        %1518 = vmatpush1.bf16.msra.mxu0 0
        %1519 = vmatprep.subr.bf16.mxu0 0
        %1520 = vmatpush1.bf16.msra.mxu0 0
        %1521 = vmatprep.subr.bf16.mxu0 0
        %1522 = vmatpush1.bf16.msra.mxu0 0
        %1523 = vmatprep.subr.bf16.mxu0 0
        %1524 = vmatpush1.bf16.msra.mxu0 0
        %1525 = vmatprep.subr.bf16.mxu0 0
        %1526 = vmatpush1.bf16.msra.mxu0 0
        %1527 = vmatprep.subr.bf16.mxu0 0
        %1528 = vmatpush1.bf16.msra.mxu0 0
        %1529 = vmatprep.subr.bf16.mxu0 0
        %1530 = vmatpush1.bf16.msra.mxu0 0
        %1531 = vmatprep.subr.bf16.mxu0 0
        %1532 = vmatpush1.bf16.msra.mxu0 0
        %1533 = vmatprep.subr.bf16.mxu0 0
        %1534 = vmatpush1.bf16.msra.mxu0 0
        %1535 = vmatprep.subr.bf16.mxu0 0
        %1536 = vmatpush1.bf16.msra.mxu0 0
        %1537 = vmatprep.subr.bf16.mxu0 0
        %1538 = vmatpush1.bf16.msra.mxu0 0
        %1539 = vmatprep.subr.bf16.mxu0 0
        %1540 = vmatpush1.bf16.msra.mxu0 0
        %1541 = vmatprep.subr.bf16.mxu0 0
        %1542 = vmatpush1.bf16.msra.mxu0 0
        %1543 = vmatprep.subr.bf16.mxu0 0
        %1544 = vmatpush1.bf16.msra.mxu0 0
        %1545 = vmatprep.mubr.bf16.mxu0 0
        %1546 = vmatmul.mubr.bf16.gmra.mrb[0].mxu0 %v1508
        %v1547 = vpop.f32.mrb[0].mxu0
        %v1548 = vadd.f32 0.0, %v1547
        %v1549 = vpop.f32.mrb[0].mxu0
        %v1550 = vpop.f32.mrb[0].mxu0
        %v1551 = vpop.f32.mrb[0].mxu0
        %1552 = vdwg.mxu0
        %1553 = vrot.lane.b32.xlu0 %v813, 120
        %v1554 = vpop.permute.xlu0 %1553
        %1555 = vrot.lane.b32.xlu0 %v813, 88
        %v1556 = vpop.permute.xlu0 %1555
        %v1557 = vsel %vm828, %v1554, 0
        %v1559 = vsel %vm828, %v1556, 0
        %1561 = vmatprep.subr.mxu0 0.0
        %1562 = vmatpush1.xpose.msra.mxu0 %v1559
        %1563 = vmatprep.subr.mxu0 0.0
        %1564 = vmatpush1.xpose.msra.mxu0 0.0
        %1565 = vmatprep.subr.mxu0 0.0
        %1566 = vmatpush1.xpose.msra.mxu0 0.0
        %1567 = vmatprep.subr.mxu0 0.0
        %1568 = vmatpush1.xpose.msra.mxu0 0.0
        %1569 = vmatprep.subr.mxu0 0.0
        %1570 = vmatpush1.xpose.msra.mxu0 0.0
        %1571 = vmatprep.subr.mxu0 0.0
        %1572 = vmatpush1.xpose.msra.mxu0 0.0
        %1573 = vmatprep.subr.mxu0 0.0
        %1574 = vmatpush1.xpose.msra.mxu0 0.0
        %1575 = vmatprep.subr.mxu0 0.0
        %1576 = vmatpush1.xpose.msra.mxu0 0.0
        %1577 = vmatprep.subr.mxu0 0.0
        %1578 = vmatpush1.xpose.msra.mxu0 0.0
        %1579 = vmatprep.subr.mxu0 0.0
        %1580 = vmatpush1.xpose.msra.mxu0 0.0
        %1581 = vmatprep.subr.mxu0 0.0
        %1582 = vmatpush1.xpose.msra.mxu0 0.0
        %1583 = vmatprep.subr.mxu0 0.0
        %1584 = vmatpush1.xpose.msra.mxu0 0.0
        %1585 = vmatprep.subr.mxu0 0.0
        %1586 = vmatpush1.xpose.msra.mxu0 0.0
        %1587 = vmatprep.subr.mxu0 0.0
        %1588 = vmatpush1.xpose.msra.mxu0 0.0
        %1589 = vmatprep.subr.mxu0 0.0
        %1590 = vmatpush1.xpose.msra.mxu0 0.0
        %1591 = vmatprep.subr.mxu0 0.0
        %1592 = vmatpush1.xpose.msra.mxu0 0.0
        %1593 = vmatprep.subr.mxu0 0.0
        %1594 = vmatpush1.xpose.msra.mxu0 0.0
        %1595 = vmatprep.subr.mxu0 0.0
        %1596 = vmatpush1.xpose.msra.mxu0 0.0
        %1597 = vmatprep.subr.mxu0 0.0
        %1598 = vmatpush1.xpose.msra.mxu0 0.0
        %1599 = vmatprep.subr.mxu0 0.0
        %1600 = vmatpush1.xpose.msra.mxu0 0.0
        %1601 = vmatprep.subr.mxu0 0.0
        %1602 = vmatpush1.xpose.msra.mxu0 0.0
        %1603 = vmatprep.subr.mxu0 0.0
        %1604 = vmatpush1.xpose.msra.mxu0 0.0
        %1605 = vmatprep.subr.mxu0 0.0
        %1606 = vmatpush1.xpose.msra.mxu0 0.0
        %1607 = vmatprep.subr.mxu0 0.0
        %1608 = vmatpush1.xpose.msra.mxu0 0.0
        %1609 = vmatprep.subr.mxu0 0.0
        %1610 = vmatpush1.xpose.msra.mxu0 0.0
        %1611 = vmatprep.subr.mxu0 0.0
        %1612 = vmatpush1.xpose.msra.mxu0 0.0
        %1613 = vmatprep.subr.mxu0 0.0
        %1614 = vmatpush1.xpose.msra.mxu0 0.0
        %1615 = vmatprep.subr.mxu0 0.0
        %1616 = vmatpush1.xpose.msra.mxu0 0.0
        %1617 = vmatprep.subr.mxu0 0.0
        %1618 = vmatpush1.xpose.msra.mxu0 0.0
        %1619 = vmatprep.subr.mxu0 0.0
        %1620 = vmatpush1.xpose.msra.mxu0 0.0
        %1621 = vmatprep.subr.mxu0 0.0
        %1622 = vmatpush1.xpose.msra.mxu0 0.0
        %1623 = vmatprep.subr.mxu0 0.0
        %1624 = vmatpush1.xpose.msra.mxu0 0.0
        %1625 = vmatprep.mubr.f32.mxu0 0.0
        %1626 = vmatmul.mubr.f32.gmra.mrb[0].mxu0 %v1557
        %v1627 = vpop.f32.mrb[0].mxu0
        %v1628 = vadd.f32 0.0, %v1627
        %v1629 = vpop.f32.mrb[0].mxu0
        %1630 = vdwg.mxu0
        %v1631 = vmul.f32 %v1628, 0.35355338
        %v1632 = vadd.f32 %v1631, %v1411
        %v1633 = vsel %vm828, %v1632, -inf
        %1634 = vmax.xlane.f32.xlu0 %v1633
        %v1635 = vpop.xlane.xlu0 %1634
        %v1636 = vsub.f32 %v1632, %v1635
        %v1637 = vmul.f32 %v1636, 1.442695
        %v1638 = vpow.pop %v1637
        %v1639 = vsel %vm828, %v1638, 0.0
        %1640 = vadd.xlane.f32.xlu0 %v1639
        %v1641 = vpop.xlane.xlu0 %1640
        %v1642 = vrcp.pop %v1641
        %v1643 = vmul.f32 %v1638, %v1642
        %v1644 = vpack.c.bf16 %v1643, %v1643
        %1645 = vrot.lane.b32.xlu0 %v1503, 56
        %v1646 = vpop.permute.xlu0 %1645
        %v1648 = vsel %vm828, %v1644, 0
        %v1651 = vsel %vm924, %v1646, 0
        %1653 = vmatprep.subr.bf16.mxu0 0
        %1654 = vmatpush1.bf16.msra.mxu0 %v1651
        %1655 = vmatprep.subr.bf16.mxu0 0
        %1656 = vmatpush1.bf16.msra.mxu0 0
        %1657 = vmatprep.subr.bf16.mxu0 0
        %1658 = vmatpush1.bf16.msra.mxu0 0
        %1659 = vmatprep.subr.bf16.mxu0 0
        %1660 = vmatpush1.bf16.msra.mxu0 0
        %1661 = vmatprep.subr.bf16.mxu0 0
        %1662 = vmatpush1.bf16.msra.mxu0 0
        %1663 = vmatprep.subr.bf16.mxu0 0
        %1664 = vmatpush1.bf16.msra.mxu0 0
        %1665 = vmatprep.subr.bf16.mxu0 0
        %1666 = vmatpush1.bf16.msra.mxu0 0
        %1667 = vmatprep.subr.bf16.mxu0 0
        %1668 = vmatpush1.bf16.msra.mxu0 0
        %1669 = vmatprep.subr.bf16.mxu0 0
        %1670 = vmatpush1.bf16.msra.mxu0 0
        %1671 = vmatprep.subr.bf16.mxu0 0
        %1672 = vmatpush1.bf16.msra.mxu0 0
        %1673 = vmatprep.subr.bf16.mxu0 0
        %1674 = vmatpush1.bf16.msra.mxu0 0
        %1675 = vmatprep.subr.bf16.mxu0 0
        %1676 = vmatpush1.bf16.msra.mxu0 0
        %1677 = vmatprep.subr.bf16.mxu0 0
        %1678 = vmatpush1.bf16.msra.mxu0 0
        %1679 = vmatprep.subr.bf16.mxu0 0
        %1680 = vmatpush1.bf16.msra.mxu0 0
        %1681 = vmatprep.subr.bf16.mxu0 0
        %1682 = vmatpush1.bf16.msra.mxu0 0
        %1683 = vmatprep.subr.bf16.mxu0 0
        %1684 = vmatpush1.bf16.msra.mxu0 0
        %1685 = vmatprep.mubr.bf16.mxu0 0
        %1686 = vmatmul.mubr.bf16.gmra.mrb[0].mxu0 %v1648
        %v1687 = vpop.f32.mrb[0].mxu0
        %v1688 = vadd.f32 0.0, %v1687
        %v1689 = vpop.f32.mrb[0].mxu0
        %v1690 = vpop.f32.mrb[0].mxu0
        %v1691 = vpop.f32.mrb[0].mxu0
        %1692 = vdwg.mxu0
        %1693 = vrot.lane.b32.xlu0 %v813, 112
        %v1694 = vpop.permute.xlu0 %1693
        %1695 = vrot.lane.b32.xlu0 %v813, 80
        %v1696 = vpop.permute.xlu0 %1695
        %v1697 = vsel %vm828, %v1694, 0
        %v1699 = vsel %vm828, %v1696, 0
        %1701 = vmatprep.subr.mxu0 0.0
        %1702 = vmatpush1.xpose.msra.mxu0 %v1699
        %1703 = vmatprep.subr.mxu0 0.0
        %1704 = vmatpush1.xpose.msra.mxu0 0.0
        %1705 = vmatprep.subr.mxu0 0.0
        %1706 = vmatpush1.xpose.msra.mxu0 0.0
        %1707 = vmatprep.subr.mxu0 0.0
        %1708 = vmatpush1.xpose.msra.mxu0 0.0
        %1709 = vmatprep.subr.mxu0 0.0
        %1710 = vmatpush1.xpose.msra.mxu0 0.0
        %1711 = vmatprep.subr.mxu0 0.0
        %1712 = vmatpush1.xpose.msra.mxu0 0.0
        %1713 = vmatprep.subr.mxu0 0.0
        %1714 = vmatpush1.xpose.msra.mxu0 0.0
        %1715 = vmatprep.subr.mxu0 0.0
        %1716 = vmatpush1.xpose.msra.mxu0 0.0
        %1717 = vmatprep.subr.mxu0 0.0
        %1718 = vmatpush1.xpose.msra.mxu0 0.0
        %1719 = vmatprep.subr.mxu0 0.0
        %1720 = vmatpush1.xpose.msra.mxu0 0.0
        %1721 = vmatprep.subr.mxu0 0.0
        %1722 = vmatpush1.xpose.msra.mxu0 0.0
        %1723 = vmatprep.subr.mxu0 0.0
        %1724 = vmatpush1.xpose.msra.mxu0 0.0
        %1725 = vmatprep.subr.mxu0 0.0
        %1726 = vmatpush1.xpose.msra.mxu0 0.0
        %1727 = vmatprep.subr.mxu0 0.0
        %1728 = vmatpush1.xpose.msra.mxu0 0.0
        %1729 = vmatprep.subr.mxu0 0.0
        %1730 = vmatpush1.xpose.msra.mxu0 0.0
        %1731 = vmatprep.subr.mxu0 0.0
        %1732 = vmatpush1.xpose.msra.mxu0 0.0
        %1733 = vmatprep.subr.mxu0 0.0
        %1734 = vmatpush1.xpose.msra.mxu0 0.0
        %1735 = vmatprep.subr.mxu0 0.0
        %1736 = vmatpush1.xpose.msra.mxu0 0.0
        %1737 = vmatprep.subr.mxu0 0.0
        %1738 = vmatpush1.xpose.msra.mxu0 0.0
        %1739 = vmatprep.subr.mxu0 0.0
        %1740 = vmatpush1.xpose.msra.mxu0 0.0
        %1741 = vmatprep.subr.mxu0 0.0
        %1742 = vmatpush1.xpose.msra.mxu0 0.0
        %1743 = vmatprep.subr.mxu0 0.0
        %1744 = vmatpush1.xpose.msra.mxu0 0.0
        %1745 = vmatprep.subr.mxu0 0.0
        %1746 = vmatpush1.xpose.msra.mxu0 0.0
        %1747 = vmatprep.subr.mxu0 0.0
        %1748 = vmatpush1.xpose.msra.mxu0 0.0
        %1749 = vmatprep.subr.mxu0 0.0
        %1750 = vmatpush1.xpose.msra.mxu0 0.0
        %1751 = vmatprep.subr.mxu0 0.0
        %1752 = vmatpush1.xpose.msra.mxu0 0.0
        %1753 = vmatprep.subr.mxu0 0.0
        %1754 = vmatpush1.xpose.msra.mxu0 0.0
        %1755 = vmatprep.subr.mxu0 0.0
        %1756 = vmatpush1.xpose.msra.mxu0 0.0
        %1757 = vmatprep.subr.mxu0 0.0
        %1758 = vmatpush1.xpose.msra.mxu0 0.0
        %1759 = vmatprep.subr.mxu0 0.0
        %1760 = vmatpush1.xpose.msra.mxu0 0.0
        %1761 = vmatprep.subr.mxu0 0.0
        %1762 = vmatpush1.xpose.msra.mxu0 0.0
        %1763 = vmatprep.subr.mxu0 0.0
        %1764 = vmatpush1.xpose.msra.mxu0 0.0
        %1765 = vmatprep.mubr.f32.mxu0 0.0
        %1766 = vmatmul.mubr.f32.gmra.mrb[0].mxu0 %v1697
        %v1767 = vpop.f32.mrb[0].mxu0
        %v1768 = vadd.f32 0.0, %v1767
        %v1769 = vpop.f32.mrb[0].mxu0
        %1770 = vdwg.mxu0
        %v1771 = vmul.f32 %v1768, 0.35355338
        %v1772 = vadd.f32 %v1771, %v1411
        %v1773 = vsel %vm828, %v1772, -inf
        %1774 = vmax.xlane.f32.xlu0 %v1773
        %v1775 = vpop.xlane.xlu0 %1774
        %v1776 = vsub.f32 %v1772, %v1775
        %v1777 = vmul.f32 %v1776, 1.442695
        %v1778 = vpow.pop %v1777
        %v1779 = vsel %vm828, %v1778, 0.0
        %1780 = vadd.xlane.f32.xlu0 %v1779
        %v1781 = vpop.xlane.xlu0 %1780
        %v1782 = vrcp.pop %v1781
        %v1783 = vmul.f32 %v1778, %v1782
        %v1784 = vpack.c.bf16 %v1783, %v1783
        %1785 = vrot.lane.b32.xlu0 %v1503, 48
        %v1786 = vpop.permute.xlu0 %1785
        %v1788 = vsel %vm828, %v1784, 0
        %v1791 = vsel %vm924, %v1786, 0
        %1793 = vmatprep.subr.bf16.mxu0 0
        %1794 = vmatpush1.bf16.msra.mxu0 %v1791
        %1795 = vmatprep.subr.bf16.mxu0 0
        %1796 = vmatpush1.bf16.msra.mxu0 0
        %1797 = vmatprep.subr.bf16.mxu0 0
        %1798 = vmatpush1.bf16.msra.mxu0 0
        %1799 = vmatprep.subr.bf16.mxu0 0
        %1800 = vmatpush1.bf16.msra.mxu0 0
        %1801 = vmatprep.subr.bf16.mxu0 0
        %1802 = vmatpush1.bf16.msra.mxu0 0
        %1803 = vmatprep.subr.bf16.mxu0 0
        %1804 = vmatpush1.bf16.msra.mxu0 0
        %1805 = vmatprep.subr.bf16.mxu0 0
        %1806 = vmatpush1.bf16.msra.mxu0 0
        %1807 = vmatprep.subr.bf16.mxu0 0
        %1808 = vmatpush1.bf16.msra.mxu0 0
        %1809 = vmatprep.subr.bf16.mxu0 0
        %1810 = vmatpush1.bf16.msra.mxu0 0
        %1811 = vmatprep.subr.bf16.mxu0 0
        %1812 = vmatpush1.bf16.msra.mxu0 0
        %1813 = vmatprep.subr.bf16.mxu0 0
        %1814 = vmatpush1.bf16.msra.mxu0 0
        %1815 = vmatprep.subr.bf16.mxu0 0
        %1816 = vmatpush1.bf16.msra.mxu0 0
        %1817 = vmatprep.subr.bf16.mxu0 0
        %1818 = vmatpush1.bf16.msra.mxu0 0
        %1819 = vmatprep.subr.bf16.mxu0 0
        %1820 = vmatpush1.bf16.msra.mxu0 0
        %1821 = vmatprep.subr.bf16.mxu0 0
        %1822 = vmatpush1.bf16.msra.mxu0 0
        %1823 = vmatprep.subr.bf16.mxu0 0
        %1824 = vmatpush1.bf16.msra.mxu0 0
        %1825 = vmatprep.mubr.bf16.mxu0 0
        %1826 = vmatmul.mubr.bf16.gmra.mrb[0].mxu0 %v1788
        %v1827 = vpop.f32.mrb[0].mxu0
        %v1828 = vadd.f32 0.0, %v1827
        %v1829 = vpop.f32.mrb[0].mxu0
        %v1830 = vpop.f32.mrb[0].mxu0
        %v1831 = vpop.f32.mrb[0].mxu0
        %1832 = vdwg.mxu0
        %1833 = vrot.lane.b32.xlu0 %v813, 104
        %v1834 = vpop.permute.xlu0 %1833
        %1835 = vrot.lane.b32.xlu0 %v813, 72
        %v1836 = vpop.permute.xlu0 %1835
        %v1837 = vsel %vm828, %v1834, 0
        %v1839 = vsel %vm828, %v1836, 0
        %1841 = vmatprep.subr.mxu0 0.0
        %1842 = vmatpush1.xpose.msra.mxu0 %v1839
        %1843 = vmatprep.subr.mxu0 0.0
        %1844 = vmatpush1.xpose.msra.mxu0 0.0
        %1845 = vmatprep.subr.mxu0 0.0
        %1846 = vmatpush1.xpose.msra.mxu0 0.0
        %1847 = vmatprep.subr.mxu0 0.0
        %1848 = vmatpush1.xpose.msra.mxu0 0.0
        %1849 = vmatprep.subr.mxu0 0.0
        %1850 = vmatpush1.xpose.msra.mxu0 0.0
        %1851 = vmatprep.subr.mxu0 0.0
        %1852 = vmatpush1.xpose.msra.mxu0 0.0
        %1853 = vmatprep.subr.mxu0 0.0
        %1854 = vmatpush1.xpose.msra.mxu0 0.0
        %1855 = vmatprep.subr.mxu0 0.0
        %1856 = vmatpush1.xpose.msra.mxu0 0.0
        %1857 = vmatprep.subr.mxu0 0.0
        %1858 = vmatpush1.xpose.msra.mxu0 0.0
        %1859 = vmatprep.subr.mxu0 0.0
        %1860 = vmatpush1.xpose.msra.mxu0 0.0
        %1861 = vmatprep.subr.mxu0 0.0
        %1862 = vmatpush1.xpose.msra.mxu0 0.0
        %1863 = vmatprep.subr.mxu0 0.0
        %1864 = vmatpush1.xpose.msra.mxu0 0.0
        %1865 = vmatprep.subr.mxu0 0.0
        %1866 = vmatpush1.xpose.msra.mxu0 0.0
        %1867 = vmatprep.subr.mxu0 0.0
        %1868 = vmatpush1.xpose.msra.mxu0 0.0
        %1869 = vmatprep.subr.mxu0 0.0
        %1870 = vmatpush1.xpose.msra.mxu0 0.0
        %1871 = vmatprep.subr.mxu0 0.0
        %1872 = vmatpush1.xpose.msra.mxu0 0.0
        %1873 = vmatprep.subr.mxu0 0.0
        %1874 = vmatpush1.xpose.msra.mxu0 0.0
        %1875 = vmatprep.subr.mxu0 0.0
        %1876 = vmatpush1.xpose.msra.mxu0 0.0
        %1877 = vmatprep.subr.mxu0 0.0
        %1878 = vmatpush1.xpose.msra.mxu0 0.0
        %1879 = vmatprep.subr.mxu0 0.0
        %1880 = vmatpush1.xpose.msra.mxu0 0.0
        %1881 = vmatprep.subr.mxu0 0.0
        %1882 = vmatpush1.xpose.msra.mxu0 0.0
        %1883 = vmatprep.subr.mxu0 0.0
        %1884 = vmatpush1.xpose.msra.mxu0 0.0
        %1885 = vmatprep.subr.mxu0 0.0
        %1886 = vmatpush1.xpose.msra.mxu0 0.0
        %1887 = vmatprep.subr.mxu0 0.0
        %1888 = vmatpush1.xpose.msra.mxu0 0.0
        %1889 = vmatprep.subr.mxu0 0.0
        %1890 = vmatpush1.xpose.msra.mxu0 0.0
        %1891 = vmatprep.subr.mxu0 0.0
        %1892 = vmatpush1.xpose.msra.mxu0 0.0
        %1893 = vmatprep.subr.mxu0 0.0
        %1894 = vmatpush1.xpose.msra.mxu0 0.0
        %1895 = vmatprep.subr.mxu0 0.0
        %1896 = vmatpush1.xpose.msra.mxu0 0.0
        %1897 = vmatprep.subr.mxu0 0.0
        %1898 = vmatpush1.xpose.msra.mxu0 0.0
        %1899 = vmatprep.subr.mxu0 0.0
        %1900 = vmatpush1.xpose.msra.mxu0 0.0
        %1901 = vmatprep.subr.mxu0 0.0
        %1902 = vmatpush1.xpose.msra.mxu0 0.0
        %1903 = vmatprep.subr.mxu0 0.0
        %1904 = vmatpush1.xpose.msra.mxu0 0.0
        %1905 = vmatprep.mubr.f32.mxu0 0.0
        %1906 = vmatmul.mubr.f32.gmra.mrb[0].mxu0 %v1837
        %v1907 = vpop.f32.mrb[0].mxu0
        %v1908 = vadd.f32 0.0, %v1907
        %v1909 = vpop.f32.mrb[0].mxu0
        %1910 = vdwg.mxu0
        %v1911 = vmul.f32 %v1908, 0.35355338
        %v1912 = vadd.f32 %v1911, %v1411
        %v1913 = vsel %vm828, %v1912, -inf
        %1914 = vmax.xlane.f32.xlu0 %v1913
        %v1915 = vpop.xlane.xlu0 %1914
        %v1916 = vsub.f32 %v1912, %v1915
        %v1917 = vmul.f32 %v1916, 1.442695
        %v1918 = vpow.pop %v1917
        %v1919 = vsel %vm828, %v1918, 0.0
        %1920 = vadd.xlane.f32.xlu0 %v1919
        %v1921 = vpop.xlane.xlu0 %1920
        %v1922 = vrcp.pop %v1921
        %v1923 = vmul.f32 %v1918, %v1922
        %v1924 = vpack.c.bf16 %v1923, %v1923
        %1925 = vrot.lane.b32.xlu0 %v1503, 40
        %v1926 = vpop.permute.xlu0 %1925
        %v1928 = vsel %vm828, %v1924, 0
        %v1931 = vsel %vm924, %v1926, 0
        %1933 = vmatprep.subr.bf16.mxu0 0
        %1934 = vmatpush1.bf16.msra.mxu0 %v1931
        %1935 = vmatprep.subr.bf16.mxu0 0
        %1936 = vmatpush1.bf16.msra.mxu0 0
        %1937 = vmatprep.subr.bf16.mxu0 0
        %1938 = vmatpush1.bf16.msra.mxu0 0
        %1939 = vmatprep.subr.bf16.mxu0 0
        %1940 = vmatpush1.bf16.msra.mxu0 0
        %1941 = vmatprep.subr.bf16.mxu0 0
        %1942 = vmatpush1.bf16.msra.mxu0 0
        %1943 = vmatprep.subr.bf16.mxu0 0
        %1944 = vmatpush1.bf16.msra.mxu0 0
        %1945 = vmatprep.subr.bf16.mxu0 0
        %1946 = vmatpush1.bf16.msra.mxu0 0
        %1947 = vmatprep.subr.bf16.mxu0 0
        %1948 = vmatpush1.bf16.msra.mxu0 0
        %1949 = vmatprep.subr.bf16.mxu0 0
        %1950 = vmatpush1.bf16.msra.mxu0 0
        %1951 = vmatprep.subr.bf16.mxu0 0
        %1952 = vmatpush1.bf16.msra.mxu0 0
        %1953 = vmatprep.subr.bf16.mxu0 0
        %1954 = vmatpush1.bf16.msra.mxu0 0
        %1955 = vmatprep.subr.bf16.mxu0 0
        %1956 = vmatpush1.bf16.msra.mxu0 0
        %1957 = vmatprep.subr.bf16.mxu0 0
        %1958 = vmatpush1.bf16.msra.mxu0 0
        %1959 = vmatprep.subr.bf16.mxu0 0
        %1960 = vmatpush1.bf16.msra.mxu0 0
        %1961 = vmatprep.subr.bf16.mxu0 0
        %1962 = vmatpush1.bf16.msra.mxu0 0
        %1963 = vmatprep.subr.bf16.mxu0 0
        %1964 = vmatpush1.bf16.msra.mxu0 0
        %1965 = vmatprep.mubr.bf16.mxu0 0
        %1966 = vmatmul.mubr.bf16.gmra.mrb[0].mxu0 %v1928
        %v1967 = vpop.f32.mrb[0].mxu0
        %v1968 = vadd.f32 0.0, %v1967
        %v1969 = vpop.f32.mrb[0].mxu0
        %v1970 = vpop.f32.mrb[0].mxu0
        %v1971 = vpop.f32.mrb[0].mxu0
        %1972 = vdwg.mxu0
        %1974 = vrot.lane.b32.xlu0 %v1688, 8
        %v1975 = vpop.permute.xlu0 %1974
        %1978 = vrot.lane.b32.xlu0 %v1828, 16
        %v1979 = vpop.permute.xlu0 %1978
        %1982 = vrot.lane.b32.xlu0 %v1968, 24
        %v1983 = vpop.permute.xlu0 %1982
        %v1985 = vsel %vm828, %v1548, %v1975
        %v1986 = vsel %vm1401, %v1985, %v1979
        %v1987 = vsel %vm1403, %v1986, %v1983
        %v1988 = vpack.c.bf16 %v1987, %v1404
        %v1989 = vld [vmem:[%s694] sm:$0xf]
        %v1990 = vld [vmem:[%s694 + $0x4] sm:$0xf]
        %v1991 = vld [vmem:[%s694 + $0x8] sm:$0xf]
        %v1992 = vld [vmem:[%s694 + $0xc] sm:$0xf]
        %v1993 = vlaneseq
        %v1994 = vshrl.u32 %v1993, 7
        %v1995 = vsub.s32 1, %v1994
        %v1996 = vrot.slane %v742, %v1995
        %v2001 = vunpack.c.l.b16 %v1989
        %v2002 = vunpack.c.l.b16 %v1990
        %v2003 = vunpack.c.l.b16 %v1991
        %v2004 = vunpack.c.l.b16 %v1992
        %v2005 = vpack.c.b16 %v2002, %v2001
        %v2006 = vpack.c.b16 %v2004, %v2003
        %v2010 = vsel %vm771, %v1988, 0
        %2012 = vmatprep.subr.bf16.mxu0 0
        %2013 = vmatpush1.bf16.msra.mxu0 %v2005
        %2014 = vmatprep.subr.bf16.mxu0 0
        %2015 = vmatpush1.bf16.msra.mxu0 %v2006
        %2016 = vmatprep.subr.bf16.mxu0 0
        %2017 = vmatpush1.bf16.msra.mxu0 0
        %2018 = vmatprep.subr.bf16.mxu0 0
        %2019 = vmatpush1.bf16.msra.mxu0 0
        %2020 = vmatprep.subr.bf16.mxu0 0
        %2021 = vmatpush1.bf16.msra.mxu0 0
        %2022 = vmatprep.subr.bf16.mxu0 0
        %2023 = vmatpush1.bf16.msra.mxu0 0
        %2024 = vmatprep.subr.bf16.mxu0 0
        %2025 = vmatpush1.bf16.msra.mxu0 0
        %2026 = vmatprep.subr.bf16.mxu0 0
        %2027 = vmatpush1.bf16.msra.mxu0 0
        %2028 = vmatprep.subr.bf16.mxu0 0
        %2029 = vmatpush1.bf16.msra.mxu0 0
        %2030 = vmatprep.subr.bf16.mxu0 0
        %2031 = vmatpush1.bf16.msra.mxu0 0
        %2032 = vmatprep.subr.bf16.mxu0 0
        %2033 = vmatpush1.bf16.msra.mxu0 0
        %2034 = vmatprep.subr.bf16.mxu0 0
        %2035 = vmatpush1.bf16.msra.mxu0 0
        %2036 = vmatprep.subr.bf16.mxu0 0
        %2037 = vmatpush1.bf16.msra.mxu0 0
        %2038 = vmatprep.subr.bf16.mxu0 0
        %2039 = vmatpush1.bf16.msra.mxu0 0
        %2040 = vmatprep.subr.bf16.mxu0 0
        %2041 = vmatpush1.bf16.msra.mxu0 0
        %2042 = vmatprep.subr.bf16.mxu0 0
        %2043 = vmatpush1.bf16.msra.mxu0 0
        %2044 = vmatprep.mubr.bf16.mxu0 0
        %2045 = vmatmul.mubr.bf16.gmra.mrb[0].mxu0 %v2010
        %v2046 = vpop.f32.mrb[0].mxu0
        %v2047 = vadd.f32 %v1996, %v2046
        %v2048 = vpop.f32.mrb[0].mxu0
        %v2049 = vpop.f32.mrb[0].mxu0
        %v2050 = vadd.f32 %v1996, %v2049
        %v2051 = vpop.f32.mrb[0].mxu0
        %2052 = vdwg.mxu0
        %v2053 = vadd.f32 %v2047, %v737
        %v2054 = vadd.f32 %v2050, %v738
        %v2055 = vsel %vm771, %v2053, 0.0
        %2056 = vadd.xlane.f32.xlu0 %v2055
        %v2057 = vpop.xlane.xlu0 %2056
        %v2058 = vsel %vm771, %v2054, 0.0
        %2059 = vadd.xlane.f32.xlu0 %v2058
        %v2060 = vpop.xlane.xlu0 %2059
        %v2061 = vrcp.pop 32.0
        %v2062 = vmul.f32 %v2057, %v2061
        %v2063 = vmul.f32 %v2060, %v2061
        %v2064 = vsub.f32 %v2053, %v2062
        %v2065 = vsub.f32 %v2054, %v2063
        %v2066 = vmul.f32 %v2064, %v2064
        %v2067 = vmul.f32 %v2065, %v2065
        %v2068 = vsel %vm771, %v2066, 0.0
        %2069 = vadd.xlane.f32.xlu0 %v2068
        %v2070 = vpop.xlane.xlu0 %2069
        %v2071 = vsel %vm771, %v2067, 0.0
        %2072 = vadd.xlane.f32.xlu0 %v2071
        %v2073 = vpop.xlane.xlu0 %2072
        %v2074 = vmul.f32 %v2070, %v2061
        %v2075 = vmul.f32 %v2073, %v2061
        %v2076 = vadd.f32 %v2074, 1e-05
        %v2077 = vadd.f32 %v2075, 1e-05
        %v2078 = vrsqrt.pop %v2076
        %v2079 = vrsqrt.pop %v2077
        %v2080 = vmul.f32 %v2064, %v2078
        %v2081 = vmul.f32 %v2065, %v2079
        %v2082 = vlaneseq
        %v2083 = vshrl.u32 %v2082, 7
        %v2084 = vsub.s32 2, %v2083
        %v2085 = vrot.slane %v742, %v2084
        %v2086 = vmul.f32 %v2080, %v2085
        %v2087 = vmul.f32 %v2081, %v2085
        %v2088 = vlaneseq
        %v2089 = vshrl.u32 %v2088, 7
        %v2090 = vsub.s32 3, %v2089
        %v2091 = vrot.slane %v742, %v2090
        %v2092 = vadd.f32 %v2086, %v2091
        %v2093 = vadd.f32 %v2087, %v2091
        %2095 = vset.pattern.permute.xlu0 0
        %2096 = vperm.xlu0 %2095, %v739
        %v2097 = vpop.permute.xlu0 %2096
        %2100 = vset.pattern.permute.xlu0 0
        %2101 = vperm.xlu0 %2100, %v741
        %v2102 = vpop.permute.xlu0 %2101
        %v2104 = vmul.f32 %v2092, %v2097
        %v2105 = vmul.f32 %v2093, %v2102
        %v2106 = vpack.c.bf16 %v2105, %v2104
        %v2107 = vld [vmem:[%s699] sm:$0xf]
        %v2108 = vld [vmem:[%s699 + $0x4] sm:$0xf]
        %v2109 = vld [vmem:[%s699 + $0x8] sm:$0xf]
        %v2110 = vld [vmem:[%s699 + $0xc] sm:$0xf]
        %v2111 = vlaneseq
        %v2112 = vshrl.u32 %v2111, 7
        %v2113 = vsub.s32 4, %v2112
        %v2114 = vrot.slane %v742, %v2113
        %v2119 = vunpack.c.l.b16 %v2107
        %v2120 = vunpack.c.l.b16 %v2108
        %v2121 = vunpack.c.l.b16 %v2109
        %v2122 = vunpack.c.l.b16 %v2110
        %v2123 = vpack.c.b16 %v2120, %v2119
        %v2124 = vpack.c.b16 %v2122, %v2121
        %v2128 = vsel %vm771, %v2106, 0
        %2130 = vmatprep.subr.bf16.mxu0 0
        %2131 = vmatpush1.bf16.msra.mxu0 %v2123
        %2132 = vmatprep.subr.bf16.mxu0 0
        %2133 = vmatpush1.bf16.msra.mxu0 %v2124
        %2134 = vmatprep.subr.bf16.mxu0 0
        %2135 = vmatpush1.bf16.msra.mxu0 0
        %2136 = vmatprep.subr.bf16.mxu0 0
        %2137 = vmatpush1.bf16.msra.mxu0 0
        %2138 = vmatprep.subr.bf16.mxu0 0
        %2139 = vmatpush1.bf16.msra.mxu0 0
        %2140 = vmatprep.subr.bf16.mxu0 0
        %2141 = vmatpush1.bf16.msra.mxu0 0
        %2142 = vmatprep.subr.bf16.mxu0 0
        %2143 = vmatpush1.bf16.msra.mxu0 0
        %2144 = vmatprep.subr.bf16.mxu0 0
        %2145 = vmatpush1.bf16.msra.mxu0 0
        %2146 = vmatprep.subr.bf16.mxu0 0
        %2147 = vmatpush1.bf16.msra.mxu0 0
        %2148 = vmatprep.subr.bf16.mxu0 0
        %2149 = vmatpush1.bf16.msra.mxu0 0
        %2150 = vmatprep.subr.bf16.mxu0 0
        %2151 = vmatpush1.bf16.msra.mxu0 0
        %2152 = vmatprep.subr.bf16.mxu0 0
        %2153 = vmatpush1.bf16.msra.mxu0 0
        %2154 = vmatprep.subr.bf16.mxu0 0
        %2155 = vmatpush1.bf16.msra.mxu0 0
        %2156 = vmatprep.subr.bf16.mxu0 0
        %2157 = vmatpush1.bf16.msra.mxu0 0
        %2158 = vmatprep.subr.bf16.mxu0 0
        %2159 = vmatpush1.bf16.msra.mxu0 0
        %2160 = vmatprep.subr.bf16.mxu0 0
        %2161 = vmatpush1.bf16.msra.mxu0 0
        %2162 = vmatprep.mubr.bf16.mxu0 0
        %2163 = vmatmul.mubr.bf16.gmra.mrb[0].mxu0 %v2128
        %v2164 = vpop.f32.mrb[0].mxu0
        %v2165 = vadd.f32 %v2114, %v2164
        %v2166 = vpop.f32.mrb[0].mxu0
        %v2167 = vpop.f32.mrb[0].mxu0
        %v2168 = vadd.f32 %v2114, %v2167
        %v2169 = vpop.f32.mrb[0].mxu0
        %2170 = vdwg.mxu0
        %v2171 = vld [vmem:[%s677] sm:$0x1]
        %v2172 = vld [vmem:[%s677 + $0x1] sm:$0x1]
        %v2173 = vld [vmem:[%s667] sm:$0xff]
        %v2174 = vld [vmem:[%s667 + $0x8] sm:$0x3]
        %v2175 = vpack.c.bf16 %v2174, %v2173
        %v2176 = vld [vmem:[%s704] sm:$0xf]
        %v2177 = vld [vmem:[%s704 + $0x4] sm:$0xf]
        %v2178 = vld [vmem:[%s704 + $0x8] sm:$0xf]
        %v2179 = vld [vmem:[%s704 + $0xc] sm:$0xf]
        %v2180 = vld [vmem:[%s704 + $0x10] sm:$0xf]
        %v2181 = vld [vmem:[%s704 + $0x14] sm:$0xf]
        %v2182 = vlaneseq
        %v2183 = vshrl.u32 %v2182, 7
        %v2184 = vsub.s32 5, %v2183
        %v2185 = vrot.slane %v742, %v2184
        %v2192 = vunpack.c.l.b16 %v2176
        %v2193 = vunpack.c.l.b16 %v2177
        %v2194 = vunpack.c.l.b16 %v2178
        %v2195 = vunpack.c.l.b16 %v2179
        %v2196 = vunpack.c.l.b16 %v2180
        %v2197 = vunpack.c.l.b16 %v2181
        %v2198 = vpack.c.b16 %v2193, %v2192
        %v2199 = vpack.c.b16 %v2195, %v2194
        %v2200 = vpack.c.b16 %v2197, %v2196
        %vm2204 = vcmask 392192
        %v2206 = vsel %vm2204, %v2175, 0
        %2208 = vmatprep.subr.bf16.mxu0 0
        %2209 = vmatpush1.bf16.msra.mxu0 %v2198
        %2210 = vmatprep.subr.bf16.mxu0 0
        %2211 = vmatpush1.bf16.msra.mxu0 %v2199
        %2212 = vmatprep.subr.bf16.mxu0 0
        %2213 = vmatpush1.bf16.msra.mxu0 %v2200
        %2214 = vmatprep.subr.bf16.mxu0 0
        %2215 = vmatpush1.bf16.msra.mxu0 0
        %2216 = vmatprep.subr.bf16.mxu0 0
        %2217 = vmatpush1.bf16.msra.mxu0 0
        %2218 = vmatprep.subr.bf16.mxu0 0
        %2219 = vmatpush1.bf16.msra.mxu0 0
        %2220 = vmatprep.subr.bf16.mxu0 0
        %2221 = vmatpush1.bf16.msra.mxu0 0
        %2222 = vmatprep.subr.bf16.mxu0 0
        %2223 = vmatpush1.bf16.msra.mxu0 0
        %2224 = vmatprep.subr.bf16.mxu0 0
        %2225 = vmatpush1.bf16.msra.mxu0 0
        %2226 = vmatprep.subr.bf16.mxu0 0
        %2227 = vmatpush1.bf16.msra.mxu0 0
        %2228 = vmatprep.subr.bf16.mxu0 0
        %2229 = vmatpush1.bf16.msra.mxu0 0
        %2230 = vmatprep.subr.bf16.mxu0 0
        %2231 = vmatpush1.bf16.msra.mxu0 0
        %2232 = vmatprep.subr.bf16.mxu0 0
        %2233 = vmatpush1.bf16.msra.mxu0 0
        %2234 = vmatprep.subr.bf16.mxu0 0
        %2235 = vmatpush1.bf16.msra.mxu0 0
        %2236 = vmatprep.subr.bf16.mxu0 0
        %2237 = vmatpush1.bf16.msra.mxu0 0
        %2238 = vmatprep.subr.bf16.mxu0 0
        %2239 = vmatpush1.bf16.msra.mxu0 0
        %2240 = vmatprep.mubr.bf16.mxu0 0
        %2241 = vmatmul.mubr.bf16.gmra.mrb[0].mxu0 %v2206
        %v2242 = vpop.f32.mrb[0].mxu0
        %v2243 = vadd.f32 %v2185, %v2242
        %v2244 = vpop.f32.mrb[0].mxu0
        %v2245 = vpop.f32.mrb[0].mxu0
        %v2246 = vadd.f32 %v2185, %v2245
        %v2247 = vpop.f32.mrb[0].mxu0
        %2248 = vdwg.mxu0
        %v2250 = vsel %vm828, %v2165, 0
        %v2253 = vsel %vm828, %v2243, 0
        %v2256 = vsel %vm828, %v2246, 0
        %2258 = vmatprep.subr.mxu0 0.0
        %2259 = vmatpush1.xpose.msra.mxu0 %v2253
        %2260 = vmatprep.subr.mxu0 0.0
        %2261 = vmatpush1.xpose.msra.mxu0 %v2256
        %2262 = vmatprep.subr.mxu0 0.0
        %2263 = vmatpush1.xpose.msra.mxu0 0.0
        %2264 = vmatprep.subr.mxu0 0.0
        %2265 = vmatpush1.xpose.msra.mxu0 0.0
        %2266 = vmatprep.subr.mxu0 0.0
        %2267 = vmatpush1.xpose.msra.mxu0 0.0
        %2268 = vmatprep.subr.mxu0 0.0
        %2269 = vmatpush1.xpose.msra.mxu0 0.0
        %2270 = vmatprep.subr.mxu0 0.0
        %2271 = vmatpush1.xpose.msra.mxu0 0.0
        %2272 = vmatprep.subr.mxu0 0.0
        %2273 = vmatpush1.xpose.msra.mxu0 0.0
        %2274 = vmatprep.subr.mxu0 0.0
        %2275 = vmatpush1.xpose.msra.mxu0 0.0
        %2276 = vmatprep.subr.mxu0 0.0
        %2277 = vmatpush1.xpose.msra.mxu0 0.0
        %2278 = vmatprep.subr.mxu0 0.0
        %2279 = vmatpush1.xpose.msra.mxu0 0.0
        %2280 = vmatprep.subr.mxu0 0.0
        %2281 = vmatpush1.xpose.msra.mxu0 0.0
        %2282 = vmatprep.subr.mxu0 0.0
        %2283 = vmatpush1.xpose.msra.mxu0 0.0
        %2284 = vmatprep.subr.mxu0 0.0
        %2285 = vmatpush1.xpose.msra.mxu0 0.0
        %2286 = vmatprep.subr.mxu0 0.0
        %2287 = vmatpush1.xpose.msra.mxu0 0.0
        %2288 = vmatprep.subr.mxu0 0.0
        %2289 = vmatpush1.xpose.msra.mxu0 0.0
        %2290 = vmatprep.subr.mxu0 0.0
        %2291 = vmatpush1.xpose.msra.mxu0 0.0
        %2292 = vmatprep.subr.mxu0 0.0
        %2293 = vmatpush1.xpose.msra.mxu0 0.0
        %2294 = vmatprep.subr.mxu0 0.0
        %2295 = vmatpush1.xpose.msra.mxu0 0.0
        %2296 = vmatprep.subr.mxu0 0.0
        %2297 = vmatpush1.xpose.msra.mxu0 0.0
        %2298 = vmatprep.subr.mxu0 0.0
        %2299 = vmatpush1.xpose.msra.mxu0 0.0
        %2300 = vmatprep.subr.mxu0 0.0
        %2301 = vmatpush1.xpose.msra.mxu0 0.0
        %2302 = vmatprep.subr.mxu0 0.0
        %2303 = vmatpush1.xpose.msra.mxu0 0.0
        %2304 = vmatprep.subr.mxu0 0.0
        %2305 = vmatpush1.xpose.msra.mxu0 0.0
        %2306 = vmatprep.subr.mxu0 0.0
        %2307 = vmatpush1.xpose.msra.mxu0 0.0
        %2308 = vmatprep.subr.mxu0 0.0
        %2309 = vmatpush1.xpose.msra.mxu0 0.0
        %2310 = vmatprep.subr.mxu0 0.0
        %2311 = vmatpush1.xpose.msra.mxu0 0.0
        %2312 = vmatprep.subr.mxu0 0.0
        %2313 = vmatpush1.xpose.msra.mxu0 0.0
        %2314 = vmatprep.subr.mxu0 0.0
        %2315 = vmatpush1.xpose.msra.mxu0 0.0
        %2316 = vmatprep.subr.mxu0 0.0
        %2317 = vmatpush1.xpose.msra.mxu0 0.0
        %2318 = vmatprep.subr.mxu0 0.0
        %2319 = vmatpush1.xpose.msra.mxu0 0.0
        %2320 = vmatprep.subr.mxu0 0.0
        %2321 = vmatpush1.xpose.msra.mxu0 0.0
        %2322 = vmatprep.mubr.f32.mxu0 0.0
        %2323 = vmatmul.mubr.f32.gmra.mrb[0].mxu0 %v2250
        %v2324 = vpop.f32.mrb[0].mxu0
        %v2325 = vadd.f32 0.0, %v2324
        %v2326 = vpop.f32.mrb[0].mxu0
        %2327 = vdwg.mxu0
        %v2328 = vmul.f32 %v2325, 0.35355338
        %v2330 = vlaneseq
        %v2331 = vshrl.u32 %v2330, 7
        %v2332 = vsub.s32 0, %v2331
        %v2333 = vrot.slane %v2171, %v2332
        %v2335 = vadd.f32 %v2328, %v2333
        %vm2336 = vcmask 80896
        %v2337 = vsel %vm2336, %v2335, -inf
        %2338 = vmax.xlane.f32.xlu0 %v2337
        %v2339 = vpop.xlane.xlu0 %2338
        %v2340 = vsub.f32 %v2335, %v2339
        %v2341 = vmul.f32 %v2340, 1.442695
        %v2342 = vpow.pop %v2341
        %v2343 = vsel %vm2336, %v2342, 0.0
        %2344 = vadd.xlane.f32.xlu0 %v2343
        %v2345 = vpop.xlane.xlu0 %2344
        %v2346 = vrcp.pop %v2345
        %v2347 = vmul.f32 %v2342, %v2346
        %v2348 = vpack.c.bf16 %v2347, %v2347
        %v2349 = vpack.c.bf16 %v2246, %v2243
        %2351 = vrot.lane.b32.xlu0 %v2349, 96
        %v2352 = vpop.permute.xlu0 %2351
        %v2354 = vsel %vm2336, %v2348, 0
        %vm2356 = vcmask 1044480
        %v2358 = vsel %vm2356, %v2352, 0
        %2360 = vmatprep.subr.bf16.mxu0 0
        %2361 = vmatpush1.bf16.msra.mxu0 %v2358
        %2362 = vmatprep.subr.bf16.mxu0 0
        %2363 = vmatpush1.bf16.msra.mxu0 0
        %2364 = vmatprep.subr.bf16.mxu0 0
        %2365 = vmatpush1.bf16.msra.mxu0 0
        %2366 = vmatprep.subr.bf16.mxu0 0
        %2367 = vmatpush1.bf16.msra.mxu0 0
        %2368 = vmatprep.subr.bf16.mxu0 0
        %2369 = vmatpush1.bf16.msra.mxu0 0
        %2370 = vmatprep.subr.bf16.mxu0 0
        %2371 = vmatpush1.bf16.msra.mxu0 0
        %2372 = vmatprep.subr.bf16.mxu0 0
        %2373 = vmatpush1.bf16.msra.mxu0 0
        %2374 = vmatprep.subr.bf16.mxu0 0
        %2375 = vmatpush1.bf16.msra.mxu0 0
        %2376 = vmatprep.subr.bf16.mxu0 0
        %2377 = vmatpush1.bf16.msra.mxu0 0
        %2378 = vmatprep.subr.bf16.mxu0 0
        %2379 = vmatpush1.bf16.msra.mxu0 0
        %2380 = vmatprep.subr.bf16.mxu0 0
        %2381 = vmatpush1.bf16.msra.mxu0 0
        %2382 = vmatprep.subr.bf16.mxu0 0
        %2383 = vmatpush1.bf16.msra.mxu0 0
        %2384 = vmatprep.subr.bf16.mxu0 0
        %2385 = vmatpush1.bf16.msra.mxu0 0
        %2386 = vmatprep.subr.bf16.mxu0 0
        %2387 = vmatpush1.bf16.msra.mxu0 0
        %2388 = vmatprep.subr.bf16.mxu0 0
        %2389 = vmatpush1.bf16.msra.mxu0 0
        %2390 = vmatprep.subr.bf16.mxu0 0
        %2391 = vmatpush1.bf16.msra.mxu0 0
        %2392 = vmatprep.mubr.bf16.mxu0 0
        %2393 = vmatmul.mubr.bf16.gmra.mrb[0].mxu0 %v2354
        %v2394 = vpop.f32.mrb[0].mxu0
        %v2395 = vadd.f32 0.0, %v2394
        %v2396 = vpop.f32.mrb[0].mxu0
        %v2397 = vpop.f32.mrb[0].mxu0
        %v2398 = vpop.f32.mrb[0].mxu0
        %2399 = vdwg.mxu0
        %2400 = vrot.lane.b32.xlu0 %v2165, 120
        %v2401 = vpop.permute.xlu0 %2400
        %2402 = vrot.lane.b32.xlu0 %v2243, 120
        %v2403 = vpop.permute.xlu0 %2402
        %2404 = vrot.lane.b32.xlu0 %v2246, 120
        %v2405 = vpop.permute.xlu0 %2404
        %v2406 = vsel %vm828, %v2401, 0
        %v2408 = vsel %vm828, %v2403, 0
        %v2410 = vsel %vm828, %v2405, 0
        %2412 = vmatprep.subr.mxu0 0.0
        %2413 = vmatpush1.xpose.msra.mxu0 %v2408
        %2414 = vmatprep.subr.mxu0 0.0
        %2415 = vmatpush1.xpose.msra.mxu0 %v2410
        %2416 = vmatprep.subr.mxu0 0.0
        %2417 = vmatpush1.xpose.msra.mxu0 0.0
        %2418 = vmatprep.subr.mxu0 0.0
        %2419 = vmatpush1.xpose.msra.mxu0 0.0
        %2420 = vmatprep.subr.mxu0 0.0
        %2421 = vmatpush1.xpose.msra.mxu0 0.0
        %2422 = vmatprep.subr.mxu0 0.0
        %2423 = vmatpush1.xpose.msra.mxu0 0.0
        %2424 = vmatprep.subr.mxu0 0.0
        %2425 = vmatpush1.xpose.msra.mxu0 0.0
        %2426 = vmatprep.subr.mxu0 0.0
        %2427 = vmatpush1.xpose.msra.mxu0 0.0
        %2428 = vmatprep.subr.mxu0 0.0
        %2429 = vmatpush1.xpose.msra.mxu0 0.0
        %2430 = vmatprep.subr.mxu0 0.0
        %2431 = vmatpush1.xpose.msra.mxu0 0.0
        %2432 = vmatprep.subr.mxu0 0.0
        %2433 = vmatpush1.xpose.msra.mxu0 0.0
        %2434 = vmatprep.subr.mxu0 0.0
        %2435 = vmatpush1.xpose.msra.mxu0 0.0
        %2436 = vmatprep.subr.mxu0 0.0
        %2437 = vmatpush1.xpose.msra.mxu0 0.0
        %2438 = vmatprep.subr.mxu0 0.0
        %2439 = vmatpush1.xpose.msra.mxu0 0.0
        %2440 = vmatprep.subr.mxu0 0.0
        %2441 = vmatpush1.xpose.msra.mxu0 0.0
        %2442 = vmatprep.subr.mxu0 0.0
        %2443 = vmatpush1.xpose.msra.mxu0 0.0
        %2444 = vmatprep.subr.mxu0 0.0
        %2445 = vmatpush1.xpose.msra.mxu0 0.0
        %2446 = vmatprep.subr.mxu0 0.0
        %2447 = vmatpush1.xpose.msra.mxu0 0.0
        %2448 = vmatprep.subr.mxu0 0.0
        %2449 = vmatpush1.xpose.msra.mxu0 0.0
        %2450 = vmatprep.subr.mxu0 0.0
        %2451 = vmatpush1.xpose.msra.mxu0 0.0
        %2452 = vmatprep.subr.mxu0 0.0
        %2453 = vmatpush1.xpose.msra.mxu0 0.0
        %2454 = vmatprep.subr.mxu0 0.0
        %2455 = vmatpush1.xpose.msra.mxu0 0.0
        %2456 = vmatprep.subr.mxu0 0.0
        %2457 = vmatpush1.xpose.msra.mxu0 0.0
        %2458 = vmatprep.subr.mxu0 0.0
        %2459 = vmatpush1.xpose.msra.mxu0 0.0
        %2460 = vmatprep.subr.mxu0 0.0
        %2461 = vmatpush1.xpose.msra.mxu0 0.0
        %2462 = vmatprep.subr.mxu0 0.0
        %2463 = vmatpush1.xpose.msra.mxu0 0.0
        %2464 = vmatprep.subr.mxu0 0.0
        %2465 = vmatpush1.xpose.msra.mxu0 0.0
        %2466 = vmatprep.subr.mxu0 0.0
        %2467 = vmatpush1.xpose.msra.mxu0 0.0
        %2468 = vmatprep.subr.mxu0 0.0
        %2469 = vmatpush1.xpose.msra.mxu0 0.0
        %2470 = vmatprep.subr.mxu0 0.0
        %2471 = vmatpush1.xpose.msra.mxu0 0.0
        %2472 = vmatprep.subr.mxu0 0.0
        %2473 = vmatpush1.xpose.msra.mxu0 0.0
        %2474 = vmatprep.subr.mxu0 0.0
        %2475 = vmatpush1.xpose.msra.mxu0 0.0
        %2476 = vmatprep.mubr.f32.mxu0 0.0
        %2477 = vmatmul.mubr.f32.gmra.mrb[0].mxu0 %v2406
        %v2478 = vpop.f32.mrb[0].mxu0
        %v2479 = vadd.f32 0.0, %v2478
        %v2480 = vpop.f32.mrb[0].mxu0
        %2481 = vdwg.mxu0
        %v2482 = vmul.f32 %v2479, 0.35355338
        %v2483 = vadd.f32 %v2482, %v2333
        %v2484 = vsel %vm2336, %v2483, -inf
        %2485 = vmax.xlane.f32.xlu0 %v2484
        %v2486 = vpop.xlane.xlu0 %2485
        %v2487 = vsub.f32 %v2483, %v2486
        %v2488 = vmul.f32 %v2487, 1.442695
        %v2489 = vpow.pop %v2488
        %v2490 = vsel %vm2336, %v2489, 0.0
        %2491 = vadd.xlane.f32.xlu0 %v2490
        %v2492 = vpop.xlane.xlu0 %2491
        %v2493 = vrcp.pop %v2492
        %v2494 = vmul.f32 %v2489, %v2493
        %v2495 = vpack.c.bf16 %v2494, %v2494
        %2496 = vrot.lane.b32.xlu0 %v2349, 88
        %v2497 = vpop.permute.xlu0 %2496
        %v2499 = vsel %vm2336, %v2495, 0
        %v2502 = vsel %vm2356, %v2497, 0
        %2504 = vmatprep.subr.bf16.mxu0 0
        %2505 = vmatpush1.bf16.msra.mxu0 %v2502
        %2506 = vmatprep.subr.bf16.mxu0 0
        %2507 = vmatpush1.bf16.msra.mxu0 0
        %2508 = vmatprep.subr.bf16.mxu0 0
        %2509 = vmatpush1.bf16.msra.mxu0 0
        %2510 = vmatprep.subr.bf16.mxu0 0
        %2511 = vmatpush1.bf16.msra.mxu0 0
        %2512 = vmatprep.subr.bf16.mxu0 0
        %2513 = vmatpush1.bf16.msra.mxu0 0
        %2514 = vmatprep.subr.bf16.mxu0 0
        %2515 = vmatpush1.bf16.msra.mxu0 0
        %2516 = vmatprep.subr.bf16.mxu0 0
        %2517 = vmatpush1.bf16.msra.mxu0 0
        %2518 = vmatprep.subr.bf16.mxu0 0
        %2519 = vmatpush1.bf16.msra.mxu0 0
        %2520 = vmatprep.subr.bf16.mxu0 0
        %2521 = vmatpush1.bf16.msra.mxu0 0
        %2522 = vmatprep.subr.bf16.mxu0 0
        %2523 = vmatpush1.bf16.msra.mxu0 0
        %2524 = vmatprep.subr.bf16.mxu0 0
        %2525 = vmatpush1.bf16.msra.mxu0 0
        %2526 = vmatprep.subr.bf16.mxu0 0
        %2527 = vmatpush1.bf16.msra.mxu0 0
        %2528 = vmatprep.subr.bf16.mxu0 0
        %2529 = vmatpush1.bf16.msra.mxu0 0
        %2530 = vmatprep.subr.bf16.mxu0 0
        %2531 = vmatpush1.bf16.msra.mxu0 0
        %2532 = vmatprep.subr.bf16.mxu0 0
        %2533 = vmatpush1.bf16.msra.mxu0 0
        %2534 = vmatprep.subr.bf16.mxu0 0
        %2535 = vmatpush1.bf16.msra.mxu0 0
        %2536 = vmatprep.mubr.bf16.mxu0 0
        %2537 = vmatmul.mubr.bf16.gmra.mrb[0].mxu0 %v2499
        %v2538 = vpop.f32.mrb[0].mxu0
        %v2539 = vadd.f32 0.0, %v2538
        %v2540 = vpop.f32.mrb[0].mxu0
        %v2541 = vpop.f32.mrb[0].mxu0
        %v2542 = vpop.f32.mrb[0].mxu0
        %2543 = vdwg.mxu0
        %2544 = vrot.lane.b32.xlu0 %v2165, 112
        %v2545 = vpop.permute.xlu0 %2544
        %2546 = vrot.lane.b32.xlu0 %v2243, 112
        %v2547 = vpop.permute.xlu0 %2546
        %2548 = vrot.lane.b32.xlu0 %v2246, 112
        %v2549 = vpop.permute.xlu0 %2548
        %v2550 = vsel %vm828, %v2545, 0
        %v2552 = vsel %vm828, %v2547, 0
        %v2554 = vsel %vm828, %v2549, 0
        %2556 = vmatprep.subr.mxu0 0.0
        %2557 = vmatpush1.xpose.msra.mxu0 %v2552
        %2558 = vmatprep.subr.mxu0 0.0
        %2559 = vmatpush1.xpose.msra.mxu0 %v2554
        %2560 = vmatprep.subr.mxu0 0.0
        %2561 = vmatpush1.xpose.msra.mxu0 0.0
        %2562 = vmatprep.subr.mxu0 0.0
        %2563 = vmatpush1.xpose.msra.mxu0 0.0
        %2564 = vmatprep.subr.mxu0 0.0
        %2565 = vmatpush1.xpose.msra.mxu0 0.0
        %2566 = vmatprep.subr.mxu0 0.0
        %2567 = vmatpush1.xpose.msra.mxu0 0.0
        %2568 = vmatprep.subr.mxu0 0.0
        %2569 = vmatpush1.xpose.msra.mxu0 0.0
        %2570 = vmatprep.subr.mxu0 0.0
        %2571 = vmatpush1.xpose.msra.mxu0 0.0
        %2572 = vmatprep.subr.mxu0 0.0
        %2573 = vmatpush1.xpose.msra.mxu0 0.0
        %2574 = vmatprep.subr.mxu0 0.0
        %2575 = vmatpush1.xpose.msra.mxu0 0.0
        %2576 = vmatprep.subr.mxu0 0.0
        %2577 = vmatpush1.xpose.msra.mxu0 0.0
        %2578 = vmatprep.subr.mxu0 0.0
        %2579 = vmatpush1.xpose.msra.mxu0 0.0
        %2580 = vmatprep.subr.mxu0 0.0
        %2581 = vmatpush1.xpose.msra.mxu0 0.0
        %2582 = vmatprep.subr.mxu0 0.0
        %2583 = vmatpush1.xpose.msra.mxu0 0.0
        %2584 = vmatprep.subr.mxu0 0.0
        %2585 = vmatpush1.xpose.msra.mxu0 0.0
        %2586 = vmatprep.subr.mxu0 0.0
        %2587 = vmatpush1.xpose.msra.mxu0 0.0
        %2588 = vmatprep.subr.mxu0 0.0
        %2589 = vmatpush1.xpose.msra.mxu0 0.0
        %2590 = vmatprep.subr.mxu0 0.0
        %2591 = vmatpush1.xpose.msra.mxu0 0.0
        %2592 = vmatprep.subr.mxu0 0.0
        %2593 = vmatpush1.xpose.msra.mxu0 0.0
        %2594 = vmatprep.subr.mxu0 0.0
        %2595 = vmatpush1.xpose.msra.mxu0 0.0
        %2596 = vmatprep.subr.mxu0 0.0
        %2597 = vmatpush1.xpose.msra.mxu0 0.0
        %2598 = vmatprep.subr.mxu0 0.0
        %2599 = vmatpush1.xpose.msra.mxu0 0.0
        %2600 = vmatprep.subr.mxu0 0.0
        %2601 = vmatpush1.xpose.msra.mxu0 0.0
        %2602 = vmatprep.subr.mxu0 0.0
        %2603 = vmatpush1.xpose.msra.mxu0 0.0
        %2604 = vmatprep.subr.mxu0 0.0
        %2605 = vmatpush1.xpose.msra.mxu0 0.0
        %2606 = vmatprep.subr.mxu0 0.0
        %2607 = vmatpush1.xpose.msra.mxu0 0.0
        %2608 = vmatprep.subr.mxu0 0.0
        %2609 = vmatpush1.xpose.msra.mxu0 0.0
        %2610 = vmatprep.subr.mxu0 0.0
        %2611 = vmatpush1.xpose.msra.mxu0 0.0
        %2612 = vmatprep.subr.mxu0 0.0
        %2613 = vmatpush1.xpose.msra.mxu0 0.0
        %2614 = vmatprep.subr.mxu0 0.0
        %2615 = vmatpush1.xpose.msra.mxu0 0.0
        %2616 = vmatprep.subr.mxu0 0.0
        %2617 = vmatpush1.xpose.msra.mxu0 0.0
        %2618 = vmatprep.subr.mxu0 0.0
        %2619 = vmatpush1.xpose.msra.mxu0 0.0
        %2620 = vmatprep.mubr.f32.mxu0 0.0
        %2621 = vmatmul.mubr.f32.gmra.mrb[0].mxu0 %v2550
        %v2622 = vpop.f32.mrb[0].mxu0
        %v2623 = vadd.f32 0.0, %v2622
        %v2624 = vpop.f32.mrb[0].mxu0
        %2625 = vdwg.mxu0
        %v2626 = vmul.f32 %v2623, 0.35355338
        %v2627 = vadd.f32 %v2626, %v2333
        %v2628 = vsel %vm2336, %v2627, -inf
        %2629 = vmax.xlane.f32.xlu0 %v2628
        %v2630 = vpop.xlane.xlu0 %2629
        %v2631 = vsub.f32 %v2627, %v2630
        %v2632 = vmul.f32 %v2631, 1.442695
        %v2633 = vpow.pop %v2632
        %v2634 = vsel %vm2336, %v2633, 0.0
        %2635 = vadd.xlane.f32.xlu0 %v2634
        %v2636 = vpop.xlane.xlu0 %2635
        %v2637 = vrcp.pop %v2636
        %v2638 = vmul.f32 %v2633, %v2637
        %v2639 = vpack.c.bf16 %v2638, %v2638
        %2640 = vrot.lane.b32.xlu0 %v2349, 80
        %v2641 = vpop.permute.xlu0 %2640
        %v2643 = vsel %vm2336, %v2639, 0
        %v2646 = vsel %vm2356, %v2641, 0
        %2648 = vmatprep.subr.bf16.mxu0 0
        %2649 = vmatpush1.bf16.msra.mxu0 %v2646
        %2650 = vmatprep.subr.bf16.mxu0 0
        %2651 = vmatpush1.bf16.msra.mxu0 0
        %2652 = vmatprep.subr.bf16.mxu0 0
        %2653 = vmatpush1.bf16.msra.mxu0 0
        %2654 = vmatprep.subr.bf16.mxu0 0
        %2655 = vmatpush1.bf16.msra.mxu0 0
        %2656 = vmatprep.subr.bf16.mxu0 0
        %2657 = vmatpush1.bf16.msra.mxu0 0
        %2658 = vmatprep.subr.bf16.mxu0 0
        %2659 = vmatpush1.bf16.msra.mxu0 0
        %2660 = vmatprep.subr.bf16.mxu0 0
        %2661 = vmatpush1.bf16.msra.mxu0 0
        %2662 = vmatprep.subr.bf16.mxu0 0
        %2663 = vmatpush1.bf16.msra.mxu0 0
        %2664 = vmatprep.subr.bf16.mxu0 0
        %2665 = vmatpush1.bf16.msra.mxu0 0
        %2666 = vmatprep.subr.bf16.mxu0 0
        %2667 = vmatpush1.bf16.msra.mxu0 0
        %2668 = vmatprep.subr.bf16.mxu0 0
        %2669 = vmatpush1.bf16.msra.mxu0 0
        %2670 = vmatprep.subr.bf16.mxu0 0
        %2671 = vmatpush1.bf16.msra.mxu0 0
        %2672 = vmatprep.subr.bf16.mxu0 0
        %2673 = vmatpush1.bf16.msra.mxu0 0
        %2674 = vmatprep.subr.bf16.mxu0 0
        %2675 = vmatpush1.bf16.msra.mxu0 0
        %2676 = vmatprep.subr.bf16.mxu0 0
        %2677 = vmatpush1.bf16.msra.mxu0 0
        %2678 = vmatprep.subr.bf16.mxu0 0
        %2679 = vmatpush1.bf16.msra.mxu0 0
        %2680 = vmatprep.mubr.bf16.mxu0 0
        %2681 = vmatmul.mubr.bf16.gmra.mrb[0].mxu0 %v2643
        %v2682 = vpop.f32.mrb[0].mxu0
        %v2683 = vadd.f32 0.0, %v2682
        %v2684 = vpop.f32.mrb[0].mxu0
        %v2685 = vpop.f32.mrb[0].mxu0
        %v2686 = vpop.f32.mrb[0].mxu0
        %2687 = vdwg.mxu0
        %2688 = vrot.lane.b32.xlu0 %v2165, 104
        %v2689 = vpop.permute.xlu0 %2688
        %2690 = vrot.lane.b32.xlu0 %v2243, 104
        %v2691 = vpop.permute.xlu0 %2690
        %2692 = vrot.lane.b32.xlu0 %v2246, 104
        %v2693 = vpop.permute.xlu0 %2692
        %v2694 = vsel %vm828, %v2689, 0
        %v2696 = vsel %vm828, %v2691, 0
        %v2698 = vsel %vm828, %v2693, 0
        %2700 = vmatprep.subr.mxu0 0.0
        %2701 = vmatpush1.xpose.msra.mxu0 %v2696
        %2702 = vmatprep.subr.mxu0 0.0
        %2703 = vmatpush1.xpose.msra.mxu0 %v2698
        %2704 = vmatprep.subr.mxu0 0.0
        %2705 = vmatpush1.xpose.msra.mxu0 0.0
        %2706 = vmatprep.subr.mxu0 0.0
        %2707 = vmatpush1.xpose.msra.mxu0 0.0
        %2708 = vmatprep.subr.mxu0 0.0
        %2709 = vmatpush1.xpose.msra.mxu0 0.0
        %2710 = vmatprep.subr.mxu0 0.0
        %2711 = vmatpush1.xpose.msra.mxu0 0.0
        %2712 = vmatprep.subr.mxu0 0.0
        %2713 = vmatpush1.xpose.msra.mxu0 0.0
        %2714 = vmatprep.subr.mxu0 0.0
        %2715 = vmatpush1.xpose.msra.mxu0 0.0
        %2716 = vmatprep.subr.mxu0 0.0
        %2717 = vmatpush1.xpose.msra.mxu0 0.0
        %2718 = vmatprep.subr.mxu0 0.0
        %2719 = vmatpush1.xpose.msra.mxu0 0.0
        %2720 = vmatprep.subr.mxu0 0.0
        %2721 = vmatpush1.xpose.msra.mxu0 0.0
        %2722 = vmatprep.subr.mxu0 0.0
        %2723 = vmatpush1.xpose.msra.mxu0 0.0
        %2724 = vmatprep.subr.mxu0 0.0
        %2725 = vmatpush1.xpose.msra.mxu0 0.0
        %2726 = vmatprep.subr.mxu0 0.0
        %2727 = vmatpush1.xpose.msra.mxu0 0.0
        %2728 = vmatprep.subr.mxu0 0.0
        %2729 = vmatpush1.xpose.msra.mxu0 0.0
        %2730 = vmatprep.subr.mxu0 0.0
        %2731 = vmatpush1.xpose.msra.mxu0 0.0
        %2732 = vmatprep.subr.mxu0 0.0
        %2733 = vmatpush1.xpose.msra.mxu0 0.0
        %2734 = vmatprep.subr.mxu0 0.0
        %2735 = vmatpush1.xpose.msra.mxu0 0.0
        %2736 = vmatprep.subr.mxu0 0.0
        %2737 = vmatpush1.xpose.msra.mxu0 0.0
        %2738 = vmatprep.subr.mxu0 0.0
        %2739 = vmatpush1.xpose.msra.mxu0 0.0
        %2740 = vmatprep.subr.mxu0 0.0
        %2741 = vmatpush1.xpose.msra.mxu0 0.0
        %2742 = vmatprep.subr.mxu0 0.0
        %2743 = vmatpush1.xpose.msra.mxu0 0.0
        %2744 = vmatprep.subr.mxu0 0.0
        %2745 = vmatpush1.xpose.msra.mxu0 0.0
        %2746 = vmatprep.subr.mxu0 0.0
        %2747 = vmatpush1.xpose.msra.mxu0 0.0
        %2748 = vmatprep.subr.mxu0 0.0
        %2749 = vmatpush1.xpose.msra.mxu0 0.0
        %2750 = vmatprep.subr.mxu0 0.0
        %2751 = vmatpush1.xpose.msra.mxu0 0.0
        %2752 = vmatprep.subr.mxu0 0.0
        %2753 = vmatpush1.xpose.msra.mxu0 0.0
        %2754 = vmatprep.subr.mxu0 0.0
        %2755 = vmatpush1.xpose.msra.mxu0 0.0
        %2756 = vmatprep.subr.mxu0 0.0
        %2757 = vmatpush1.xpose.msra.mxu0 0.0
        %2758 = vmatprep.subr.mxu0 0.0
        %2759 = vmatpush1.xpose.msra.mxu0 0.0
        %2760 = vmatprep.subr.mxu0 0.0
        %2761 = vmatpush1.xpose.msra.mxu0 0.0
        %2762 = vmatprep.subr.mxu0 0.0
        %2763 = vmatpush1.xpose.msra.mxu0 0.0
        %2764 = vmatprep.mubr.f32.mxu0 0.0
        %2765 = vmatmul.mubr.f32.gmra.mrb[0].mxu0 %v2694
        %v2766 = vpop.f32.mrb[0].mxu0
        %v2767 = vadd.f32 0.0, %v2766
        %v2768 = vpop.f32.mrb[0].mxu0
        %2769 = vdwg.mxu0
        %v2770 = vmul.f32 %v2767, 0.35355338
        %v2771 = vadd.f32 %v2770, %v2333
        %v2772 = vsel %vm2336, %v2771, -inf
        %2773 = vmax.xlane.f32.xlu0 %v2772
        %v2774 = vpop.xlane.xlu0 %2773
        %v2775 = vsub.f32 %v2771, %v2774
        %v2776 = vmul.f32 %v2775, 1.442695
        %v2777 = vpow.pop %v2776
        %v2778 = vsel %vm2336, %v2777, 0.0
        %2779 = vadd.xlane.f32.xlu0 %v2778
        %v2780 = vpop.xlane.xlu0 %2779
        %v2781 = vrcp.pop %v2780
        %v2782 = vmul.f32 %v2777, %v2781
        %v2783 = vpack.c.bf16 %v2782, %v2782
        %2784 = vrot.lane.b32.xlu0 %v2349, 72
        %v2785 = vpop.permute.xlu0 %2784
        %v2787 = vsel %vm2336, %v2783, 0
        %v2790 = vsel %vm2356, %v2785, 0
        %2792 = vmatprep.subr.bf16.mxu0 0
        %2793 = vmatpush1.bf16.msra.mxu0 %v2790
        %2794 = vmatprep.subr.bf16.mxu0 0
        %2795 = vmatpush1.bf16.msra.mxu0 0
        %2796 = vmatprep.subr.bf16.mxu0 0
        %2797 = vmatpush1.bf16.msra.mxu0 0
        %2798 = vmatprep.subr.bf16.mxu0 0
        %2799 = vmatpush1.bf16.msra.mxu0 0
        %2800 = vmatprep.subr.bf16.mxu0 0
        %2801 = vmatpush1.bf16.msra.mxu0 0
        %2802 = vmatprep.subr.bf16.mxu0 0
        %2803 = vmatpush1.bf16.msra.mxu0 0
        %2804 = vmatprep.subr.bf16.mxu0 0
        %2805 = vmatpush1.bf16.msra.mxu0 0
        %2806 = vmatprep.subr.bf16.mxu0 0
        %2807 = vmatpush1.bf16.msra.mxu0 0
        %2808 = vmatprep.subr.bf16.mxu0 0
        %2809 = vmatpush1.bf16.msra.mxu0 0
        %2810 = vmatprep.subr.bf16.mxu0 0
        %2811 = vmatpush1.bf16.msra.mxu0 0
        %2812 = vmatprep.subr.bf16.mxu0 0
        %2813 = vmatpush1.bf16.msra.mxu0 0
        %2814 = vmatprep.subr.bf16.mxu0 0
        %2815 = vmatpush1.bf16.msra.mxu0 0
        %2816 = vmatprep.subr.bf16.mxu0 0
        %2817 = vmatpush1.bf16.msra.mxu0 0
        %2818 = vmatprep.subr.bf16.mxu0 0
        %2819 = vmatpush1.bf16.msra.mxu0 0
        %2820 = vmatprep.subr.bf16.mxu0 0
        %2821 = vmatpush1.bf16.msra.mxu0 0
        %2822 = vmatprep.subr.bf16.mxu0 0
        %2823 = vmatpush1.bf16.msra.mxu0 0
        %2824 = vmatprep.mubr.bf16.mxu0 0
        %2825 = vmatmul.mubr.bf16.gmra.mrb[0].mxu0 %v2787
        %v2826 = vpop.f32.mrb[0].mxu0
        %v2827 = vadd.f32 0.0, %v2826
        %v2828 = vpop.f32.mrb[0].mxu0
        %v2829 = vpop.f32.mrb[0].mxu0
        %v2830 = vpop.f32.mrb[0].mxu0
        %2831 = vdwg.mxu0
        %2833 = vrot.lane.b32.xlu0 %v2539, 8
        %v2834 = vpop.permute.xlu0 %2833
        %2837 = vrot.lane.b32.xlu0 %v2683, 16
        %v2838 = vpop.permute.xlu0 %2837
        %2841 = vrot.lane.b32.xlu0 %v2827, 24
        %v2842 = vpop.permute.xlu0 %2841
        %v2844 = vsel %vm828, %v2395, %v2834
        %v2845 = vsel %vm1401, %v2844, %v2838
        %v2846 = vsel %vm1403, %v2845, %v2842
        %s2847 = scalar_lea.vmem %s667, 16
        %v2848 = vld [vmem:[%s2847] sm:$0xff]
        %v2849 = vld [vmem:[%s2847 + $0x8] sm:$0x3]
        %v2850 = vpack.c.bf16 %v2849, %v2848
        %v2852 = vsel %vm2204, %v2850, 0
        %2854 = vmatprep.subr.bf16.mxu0 0
        %2855 = vmatpush1.bf16.msra.mxu0 %v2198
        %2856 = vmatprep.subr.bf16.mxu0 0
        %2857 = vmatpush1.bf16.msra.mxu0 %v2199
        %2858 = vmatprep.subr.bf16.mxu0 0
        %2859 = vmatpush1.bf16.msra.mxu0 %v2200
        %2860 = vmatprep.subr.bf16.mxu0 0
        %2861 = vmatpush1.bf16.msra.mxu0 0
        %2862 = vmatprep.subr.bf16.mxu0 0
        %2863 = vmatpush1.bf16.msra.mxu0 0
        %2864 = vmatprep.subr.bf16.mxu0 0
        %2865 = vmatpush1.bf16.msra.mxu0 0
        %2866 = vmatprep.subr.bf16.mxu0 0
        %2867 = vmatpush1.bf16.msra.mxu0 0
        %2868 = vmatprep.subr.bf16.mxu0 0
        %2869 = vmatpush1.bf16.msra.mxu0 0
        %2870 = vmatprep.subr.bf16.mxu0 0
        %2871 = vmatpush1.bf16.msra.mxu0 0
        %2872 = vmatprep.subr.bf16.mxu0 0
        %2873 = vmatpush1.bf16.msra.mxu0 0
        %2874 = vmatprep.subr.bf16.mxu0 0
        %2875 = vmatpush1.bf16.msra.mxu0 0
        %2876 = vmatprep.subr.bf16.mxu0 0
        %2877 = vmatpush1.bf16.msra.mxu0 0
        %2878 = vmatprep.subr.bf16.mxu0 0
        %2879 = vmatpush1.bf16.msra.mxu0 0
        %2880 = vmatprep.subr.bf16.mxu0 0
        %2881 = vmatpush1.bf16.msra.mxu0 0
        %2882 = vmatprep.subr.bf16.mxu0 0
        %2883 = vmatpush1.bf16.msra.mxu0 0
        %2884 = vmatprep.subr.bf16.mxu0 0
        %2885 = vmatpush1.bf16.msra.mxu0 0
        %2886 = vmatprep.mubr.bf16.mxu0 0
        %2887 = vmatmul.mubr.bf16.gmra.mrb[0].mxu0 %v2852
        %v2888 = vpop.f32.mrb[0].mxu0
        %v2889 = vadd.f32 %v2185, %v2888
        %v2890 = vpop.f32.mrb[0].mxu0
        %v2891 = vpop.f32.mrb[0].mxu0
        %v2892 = vadd.f32 %v2185, %v2891
        %v2893 = vpop.f32.mrb[0].mxu0
        %2894 = vdwg.mxu0
        %v2896 = vsel %vm828, %v2168, 0
        %v2899 = vsel %vm828, %v2889, 0
        %v2902 = vsel %vm828, %v2892, 0
        %2904 = vmatprep.subr.mxu0 0.0
        %2905 = vmatpush1.xpose.msra.mxu0 %v2899
        %2906 = vmatprep.subr.mxu0 0.0
        %2907 = vmatpush1.xpose.msra.mxu0 %v2902
        %2908 = vmatprep.subr.mxu0 0.0
        %2909 = vmatpush1.xpose.msra.mxu0 0.0
        %2910 = vmatprep.subr.mxu0 0.0
        %2911 = vmatpush1.xpose.msra.mxu0 0.0
        %2912 = vmatprep.subr.mxu0 0.0
        %2913 = vmatpush1.xpose.msra.mxu0 0.0
        %2914 = vmatprep.subr.mxu0 0.0
        %2915 = vmatpush1.xpose.msra.mxu0 0.0
        %2916 = vmatprep.subr.mxu0 0.0
        %2917 = vmatpush1.xpose.msra.mxu0 0.0
        %2918 = vmatprep.subr.mxu0 0.0
        %2919 = vmatpush1.xpose.msra.mxu0 0.0
        %2920 = vmatprep.subr.mxu0 0.0
        %2921 = vmatpush1.xpose.msra.mxu0 0.0
        %2922 = vmatprep.subr.mxu0 0.0
        %2923 = vmatpush1.xpose.msra.mxu0 0.0
        %2924 = vmatprep.subr.mxu0 0.0
        %2925 = vmatpush1.xpose.msra.mxu0 0.0
        %2926 = vmatprep.subr.mxu0 0.0
        %2927 = vmatpush1.xpose.msra.mxu0 0.0
        %2928 = vmatprep.subr.mxu0 0.0
        %2929 = vmatpush1.xpose.msra.mxu0 0.0
        %2930 = vmatprep.subr.mxu0 0.0
        %2931 = vmatpush1.xpose.msra.mxu0 0.0
        %2932 = vmatprep.subr.mxu0 0.0
        %2933 = vmatpush1.xpose.msra.mxu0 0.0
        %2934 = vmatprep.subr.mxu0 0.0
        %2935 = vmatpush1.xpose.msra.mxu0 0.0
        %2936 = vmatprep.subr.mxu0 0.0
        %2937 = vmatpush1.xpose.msra.mxu0 0.0
        %2938 = vmatprep.subr.mxu0 0.0
        %2939 = vmatpush1.xpose.msra.mxu0 0.0
        %2940 = vmatprep.subr.mxu0 0.0
        %2941 = vmatpush1.xpose.msra.mxu0 0.0
        %2942 = vmatprep.subr.mxu0 0.0
        %2943 = vmatpush1.xpose.msra.mxu0 0.0
        %2944 = vmatprep.subr.mxu0 0.0
        %2945 = vmatpush1.xpose.msra.mxu0 0.0
        %2946 = vmatprep.subr.mxu0 0.0
        %2947 = vmatpush1.xpose.msra.mxu0 0.0
        %2948 = vmatprep.subr.mxu0 0.0
        %2949 = vmatpush1.xpose.msra.mxu0 0.0
        %2950 = vmatprep.subr.mxu0 0.0
        %2951 = vmatpush1.xpose.msra.mxu0 0.0
        %2952 = vmatprep.subr.mxu0 0.0
        %2953 = vmatpush1.xpose.msra.mxu0 0.0
        %2954 = vmatprep.subr.mxu0 0.0
        %2955 = vmatpush1.xpose.msra.mxu0 0.0
        %2956 = vmatprep.subr.mxu0 0.0
        %2957 = vmatpush1.xpose.msra.mxu0 0.0
        %2958 = vmatprep.subr.mxu0 0.0
        %2959 = vmatpush1.xpose.msra.mxu0 0.0
        %2960 = vmatprep.subr.mxu0 0.0
        %2961 = vmatpush1.xpose.msra.mxu0 0.0
        %2962 = vmatprep.subr.mxu0 0.0
        %2963 = vmatpush1.xpose.msra.mxu0 0.0
        %2964 = vmatprep.subr.mxu0 0.0
        %2965 = vmatpush1.xpose.msra.mxu0 0.0
        %2966 = vmatprep.subr.mxu0 0.0
        %2967 = vmatpush1.xpose.msra.mxu0 0.0
        %2968 = vmatprep.mubr.f32.mxu0 0.0
        %2969 = vmatmul.mubr.f32.gmra.mrb[0].mxu0 %v2896
        %v2970 = vpop.f32.mrb[0].mxu0
        %v2971 = vadd.f32 0.0, %v2970
        %v2972 = vpop.f32.mrb[0].mxu0
        %2973 = vdwg.mxu0
        %v2974 = vmul.f32 %v2971, 0.35355338
        %v2976 = vlaneseq
        %v2977 = vshrl.u32 %v2976, 7
        %v2978 = vsub.s32 0, %v2977
        %v2979 = vrot.slane %v2172, %v2978
        %v2981 = vadd.f32 %v2974, %v2979
        %v2982 = vsel %vm2336, %v2981, -inf
        %2983 = vmax.xlane.f32.xlu0 %v2982
        %v2984 = vpop.xlane.xlu0 %2983
        %v2985 = vsub.f32 %v2981, %v2984
        %v2986 = vmul.f32 %v2985, 1.442695
        %v2987 = vpow.pop %v2986
        %v2988 = vsel %vm2336, %v2987, 0.0
        %2989 = vadd.xlane.f32.xlu0 %v2988
        %v2990 = vpop.xlane.xlu0 %2989
        %v2991 = vrcp.pop %v2990
        %v2992 = vmul.f32 %v2987, %v2991
        %v2993 = vpack.c.bf16 %v2992, %v2992
        %v2994 = vpack.c.bf16 %v2892, %v2889
        %2996 = vrot.lane.b32.xlu0 %v2994, 96
        %v2997 = vpop.permute.xlu0 %2996
        %v2999 = vsel %vm2336, %v2993, 0
        %v3002 = vsel %vm2356, %v2997, 0
        %3004 = vmatprep.subr.bf16.mxu0 0
        %3005 = vmatpush1.bf16.msra.mxu0 %v3002
        %3006 = vmatprep.subr.bf16.mxu0 0
        %3007 = vmatpush1.bf16.msra.mxu0 0
        %3008 = vmatprep.subr.bf16.mxu0 0
        %3009 = vmatpush1.bf16.msra.mxu0 0
        %3010 = vmatprep.subr.bf16.mxu0 0
        %3011 = vmatpush1.bf16.msra.mxu0 0
        %3012 = vmatprep.subr.bf16.mxu0 0
        %3013 = vmatpush1.bf16.msra.mxu0 0
        %3014 = vmatprep.subr.bf16.mxu0 0
        %3015 = vmatpush1.bf16.msra.mxu0 0
        %3016 = vmatprep.subr.bf16.mxu0 0
        %3017 = vmatpush1.bf16.msra.mxu0 0
        %3018 = vmatprep.subr.bf16.mxu0 0
        %3019 = vmatpush1.bf16.msra.mxu0 0
        %3020 = vmatprep.subr.bf16.mxu0 0
        %3021 = vmatpush1.bf16.msra.mxu0 0
        %3022 = vmatprep.subr.bf16.mxu0 0
        %3023 = vmatpush1.bf16.msra.mxu0 0
        %3024 = vmatprep.subr.bf16.mxu0 0
        %3025 = vmatpush1.bf16.msra.mxu0 0
        %3026 = vmatprep.subr.bf16.mxu0 0
        %3027 = vmatpush1.bf16.msra.mxu0 0
        %3028 = vmatprep.subr.bf16.mxu0 0
        %3029 = vmatpush1.bf16.msra.mxu0 0
        %3030 = vmatprep.subr.bf16.mxu0 0
        %3031 = vmatpush1.bf16.msra.mxu0 0
        %3032 = vmatprep.subr.bf16.mxu0 0
        %3033 = vmatpush1.bf16.msra.mxu0 0
        %3034 = vmatprep.subr.bf16.mxu0 0
        %3035 = vmatpush1.bf16.msra.mxu0 0
        %3036 = vmatprep.mubr.bf16.mxu0 0
        %3037 = vmatmul.mubr.bf16.gmra.mrb[0].mxu0 %v2999
        %v3038 = vpop.f32.mrb[0].mxu0
        %v3039 = vadd.f32 0.0, %v3038
        %v3040 = vpop.f32.mrb[0].mxu0
        %v3041 = vpop.f32.mrb[0].mxu0
        %v3042 = vpop.f32.mrb[0].mxu0
        %3043 = vdwg.mxu0
        %3044 = vrot.lane.b32.xlu0 %v2168, 120
        %v3045 = vpop.permute.xlu0 %3044
        %3046 = vrot.lane.b32.xlu0 %v2889, 120
        %v3047 = vpop.permute.xlu0 %3046
        %3048 = vrot.lane.b32.xlu0 %v2892, 120
        %v3049 = vpop.permute.xlu0 %3048
        %v3050 = vsel %vm828, %v3045, 0
        %v3052 = vsel %vm828, %v3047, 0
        %v3054 = vsel %vm828, %v3049, 0
        %3056 = vmatprep.subr.mxu0 0.0
        %3057 = vmatpush1.xpose.msra.mxu0 %v3052
        %3058 = vmatprep.subr.mxu0 0.0
        %3059 = vmatpush1.xpose.msra.mxu0 %v3054
        %3060 = vmatprep.subr.mxu0 0.0
        %3061 = vmatpush1.xpose.msra.mxu0 0.0
        %3062 = vmatprep.subr.mxu0 0.0
        %3063 = vmatpush1.xpose.msra.mxu0 0.0
        %3064 = vmatprep.subr.mxu0 0.0
        %3065 = vmatpush1.xpose.msra.mxu0 0.0
        %3066 = vmatprep.subr.mxu0 0.0
        %3067 = vmatpush1.xpose.msra.mxu0 0.0
        %3068 = vmatprep.subr.mxu0 0.0
        %3069 = vmatpush1.xpose.msra.mxu0 0.0
        %3070 = vmatprep.subr.mxu0 0.0
        %3071 = vmatpush1.xpose.msra.mxu0 0.0
        %3072 = vmatprep.subr.mxu0 0.0
        %3073 = vmatpush1.xpose.msra.mxu0 0.0
        %3074 = vmatprep.subr.mxu0 0.0
        %3075 = vmatpush1.xpose.msra.mxu0 0.0
        %3076 = vmatprep.subr.mxu0 0.0
        %3077 = vmatpush1.xpose.msra.mxu0 0.0
        %3078 = vmatprep.subr.mxu0 0.0
        %3079 = vmatpush1.xpose.msra.mxu0 0.0
        %3080 = vmatprep.subr.mxu0 0.0
        %3081 = vmatpush1.xpose.msra.mxu0 0.0
        %3082 = vmatprep.subr.mxu0 0.0
        %3083 = vmatpush1.xpose.msra.mxu0 0.0
        %3084 = vmatprep.subr.mxu0 0.0
        %3085 = vmatpush1.xpose.msra.mxu0 0.0
        %3086 = vmatprep.subr.mxu0 0.0
        %3087 = vmatpush1.xpose.msra.mxu0 0.0
        %3088 = vmatprep.subr.mxu0 0.0
        %3089 = vmatpush1.xpose.msra.mxu0 0.0
        %3090 = vmatprep.subr.mxu0 0.0
        %3091 = vmatpush1.xpose.msra.mxu0 0.0
        %3092 = vmatprep.subr.mxu0 0.0
        %3093 = vmatpush1.xpose.msra.mxu0 0.0
        %3094 = vmatprep.subr.mxu0 0.0
        %3095 = vmatpush1.xpose.msra.mxu0 0.0
        %3096 = vmatprep.subr.mxu0 0.0
        %3097 = vmatpush1.xpose.msra.mxu0 0.0
        %3098 = vmatprep.subr.mxu0 0.0
        %3099 = vmatpush1.xpose.msra.mxu0 0.0
        %3100 = vmatprep.subr.mxu0 0.0
        %3101 = vmatpush1.xpose.msra.mxu0 0.0
        %3102 = vmatprep.subr.mxu0 0.0
        %3103 = vmatpush1.xpose.msra.mxu0 0.0
        %3104 = vmatprep.subr.mxu0 0.0
        %3105 = vmatpush1.xpose.msra.mxu0 0.0
        %3106 = vmatprep.subr.mxu0 0.0
        %3107 = vmatpush1.xpose.msra.mxu0 0.0
        %3108 = vmatprep.subr.mxu0 0.0
        %3109 = vmatpush1.xpose.msra.mxu0 0.0
        %3110 = vmatprep.subr.mxu0 0.0
        %3111 = vmatpush1.xpose.msra.mxu0 0.0
        %3112 = vmatprep.subr.mxu0 0.0
        %3113 = vmatpush1.xpose.msra.mxu0 0.0
        %3114 = vmatprep.subr.mxu0 0.0
        %3115 = vmatpush1.xpose.msra.mxu0 0.0
        %3116 = vmatprep.subr.mxu0 0.0
        %3117 = vmatpush1.xpose.msra.mxu0 0.0
        %3118 = vmatprep.subr.mxu0 0.0
        %3119 = vmatpush1.xpose.msra.mxu0 0.0
        %3120 = vmatprep.mubr.f32.mxu0 0.0
        %3121 = vmatmul.mubr.f32.gmra.mrb[0].mxu0 %v3050
        %v3122 = vpop.f32.mrb[0].mxu0
        %v3123 = vadd.f32 0.0, %v3122
        %v3124 = vpop.f32.mrb[0].mxu0
        %3125 = vdwg.mxu0
        %v3126 = vmul.f32 %v3123, 0.35355338
        %v3127 = vadd.f32 %v3126, %v2979
        %v3128 = vsel %vm2336, %v3127, -inf
        %3129 = vmax.xlane.f32.xlu0 %v3128
        %v3130 = vpop.xlane.xlu0 %3129
        %v3131 = vsub.f32 %v3127, %v3130
        %v3132 = vmul.f32 %v3131, 1.442695
        %v3133 = vpow.pop %v3132
        %v3134 = vsel %vm2336, %v3133, 0.0
        %3135 = vadd.xlane.f32.xlu0 %v3134
        %v3136 = vpop.xlane.xlu0 %3135
        %v3137 = vrcp.pop %v3136
        %v3138 = vmul.f32 %v3133, %v3137
        %v3139 = vpack.c.bf16 %v3138, %v3138
        %3140 = vrot.lane.b32.xlu0 %v2994, 88
        %v3141 = vpop.permute.xlu0 %3140
        %v3143 = vsel %vm2336, %v3139, 0
        %v3146 = vsel %vm2356, %v3141, 0
        %3148 = vmatprep.subr.bf16.mxu0 0
        %3149 = vmatpush1.bf16.msra.mxu0 %v3146
        %3150 = vmatprep.subr.bf16.mxu0 0
        %3151 = vmatpush1.bf16.msra.mxu0 0
        %3152 = vmatprep.subr.bf16.mxu0 0
        %3153 = vmatpush1.bf16.msra.mxu0 0
        %3154 = vmatprep.subr.bf16.mxu0 0
        %3155 = vmatpush1.bf16.msra.mxu0 0
        %3156 = vmatprep.subr.bf16.mxu0 0
        %3157 = vmatpush1.bf16.msra.mxu0 0
        %3158 = vmatprep.subr.bf16.mxu0 0
        %3159 = vmatpush1.bf16.msra.mxu0 0
        %3160 = vmatprep.subr.bf16.mxu0 0
        %3161 = vmatpush1.bf16.msra.mxu0 0
        %3162 = vmatprep.subr.bf16.mxu0 0
        %3163 = vmatpush1.bf16.msra.mxu0 0
        %3164 = vmatprep.subr.bf16.mxu0 0
        %3165 = vmatpush1.bf16.msra.mxu0 0
        %3166 = vmatprep.subr.bf16.mxu0 0
        %3167 = vmatpush1.bf16.msra.mxu0 0
        %3168 = vmatprep.subr.bf16.mxu0 0
        %3169 = vmatpush1.bf16.msra.mxu0 0
        %3170 = vmatprep.subr.bf16.mxu0 0
        %3171 = vmatpush1.bf16.msra.mxu0 0
        %3172 = vmatprep.subr.bf16.mxu0 0
        %3173 = vmatpush1.bf16.msra.mxu0 0
        %3174 = vmatprep.subr.bf16.mxu0 0
        %3175 = vmatpush1.bf16.msra.mxu0 0
        %3176 = vmatprep.subr.bf16.mxu0 0
        %3177 = vmatpush1.bf16.msra.mxu0 0
        %3178 = vmatprep.subr.bf16.mxu0 0
        %3179 = vmatpush1.bf16.msra.mxu0 0
        %3180 = vmatprep.mubr.bf16.mxu0 0
        %3181 = vmatmul.mubr.bf16.gmra.mrb[0].mxu0 %v3143
        %v3182 = vpop.f32.mrb[0].mxu0
        %v3183 = vadd.f32 0.0, %v3182
        %v3184 = vpop.f32.mrb[0].mxu0
        %v3185 = vpop.f32.mrb[0].mxu0
        %v3186 = vpop.f32.mrb[0].mxu0
        %3187 = vdwg.mxu0
        %3188 = vrot.lane.b32.xlu0 %v2168, 112
        %v3189 = vpop.permute.xlu0 %3188
        %3190 = vrot.lane.b32.xlu0 %v2889, 112
        %v3191 = vpop.permute.xlu0 %3190
        %3192 = vrot.lane.b32.xlu0 %v2892, 112
        %v3193 = vpop.permute.xlu0 %3192
        %v3194 = vsel %vm828, %v3189, 0
        %v3196 = vsel %vm828, %v3191, 0
        %v3198 = vsel %vm828, %v3193, 0
        %3200 = vmatprep.subr.mxu0 0.0
        %3201 = vmatpush1.xpose.msra.mxu0 %v3196
        %3202 = vmatprep.subr.mxu0 0.0
        %3203 = vmatpush1.xpose.msra.mxu0 %v3198
        %3204 = vmatprep.subr.mxu0 0.0
        %3205 = vmatpush1.xpose.msra.mxu0 0.0
        %3206 = vmatprep.subr.mxu0 0.0
        %3207 = vmatpush1.xpose.msra.mxu0 0.0
        %3208 = vmatprep.subr.mxu0 0.0
        %3209 = vmatpush1.xpose.msra.mxu0 0.0
        %3210 = vmatprep.subr.mxu0 0.0
        %3211 = vmatpush1.xpose.msra.mxu0 0.0
        %3212 = vmatprep.subr.mxu0 0.0
        %3213 = vmatpush1.xpose.msra.mxu0 0.0
        %3214 = vmatprep.subr.mxu0 0.0
        %3215 = vmatpush1.xpose.msra.mxu0 0.0
        %3216 = vmatprep.subr.mxu0 0.0
        %3217 = vmatpush1.xpose.msra.mxu0 0.0
        %3218 = vmatprep.subr.mxu0 0.0
        %3219 = vmatpush1.xpose.msra.mxu0 0.0
        %3220 = vmatprep.subr.mxu0 0.0
        %3221 = vmatpush1.xpose.msra.mxu0 0.0
        %3222 = vmatprep.subr.mxu0 0.0
        %3223 = vmatpush1.xpose.msra.mxu0 0.0
        %3224 = vmatprep.subr.mxu0 0.0
        %3225 = vmatpush1.xpose.msra.mxu0 0.0
        %3226 = vmatprep.subr.mxu0 0.0
        %3227 = vmatpush1.xpose.msra.mxu0 0.0
        %3228 = vmatprep.subr.mxu0 0.0
        %3229 = vmatpush1.xpose.msra.mxu0 0.0
        %3230 = vmatprep.subr.mxu0 0.0
        %3231 = vmatpush1.xpose.msra.mxu0 0.0
        %3232 = vmatprep.subr.mxu0 0.0
        %3233 = vmatpush1.xpose.msra.mxu0 0.0
        %3234 = vmatprep.subr.mxu0 0.0
        %3235 = vmatpush1.xpose.msra.mxu0 0.0
        %3236 = vmatprep.subr.mxu0 0.0
        %3237 = vmatpush1.xpose.msra.mxu0 0.0
        %3238 = vmatprep.subr.mxu0 0.0
        %3239 = vmatpush1.xpose.msra.mxu0 0.0
        %3240 = vmatprep.subr.mxu0 0.0
        %3241 = vmatpush1.xpose.msra.mxu0 0.0
        %3242 = vmatprep.subr.mxu0 0.0
        %3243 = vmatpush1.xpose.msra.mxu0 0.0
        %3244 = vmatprep.subr.mxu0 0.0
        %3245 = vmatpush1.xpose.msra.mxu0 0.0
        %3246 = vmatprep.subr.mxu0 0.0
        %3247 = vmatpush1.xpose.msra.mxu0 0.0
        %3248 = vmatprep.subr.mxu0 0.0
        %3249 = vmatpush1.xpose.msra.mxu0 0.0
        %3250 = vmatprep.subr.mxu0 0.0
        %3251 = vmatpush1.xpose.msra.mxu0 0.0
        %3252 = vmatprep.subr.mxu0 0.0
        %3253 = vmatpush1.xpose.msra.mxu0 0.0
        %3254 = vmatprep.subr.mxu0 0.0
        %3255 = vmatpush1.xpose.msra.mxu0 0.0
        %3256 = vmatprep.subr.mxu0 0.0
        %3257 = vmatpush1.xpose.msra.mxu0 0.0
        %3258 = vmatprep.subr.mxu0 0.0
        %3259 = vmatpush1.xpose.msra.mxu0 0.0
        %3260 = vmatprep.subr.mxu0 0.0
        %3261 = vmatpush1.xpose.msra.mxu0 0.0
        %3262 = vmatprep.subr.mxu0 0.0
        %3263 = vmatpush1.xpose.msra.mxu0 0.0
        %3264 = vmatprep.mubr.f32.mxu0 0.0
        %3265 = vmatmul.mubr.f32.gmra.mrb[0].mxu0 %v3194
        %v3266 = vpop.f32.mrb[0].mxu0
        %v3267 = vadd.f32 0.0, %v3266
        %v3268 = vpop.f32.mrb[0].mxu0
        %3269 = vdwg.mxu0
        %v3270 = vmul.f32 %v3267, 0.35355338
        %v3271 = vadd.f32 %v3270, %v2979
        %v3272 = vsel %vm2336, %v3271, -inf
        %3273 = vmax.xlane.f32.xlu0 %v3272
        %v3274 = vpop.xlane.xlu0 %3273
        %v3275 = vsub.f32 %v3271, %v3274
        %v3276 = vmul.f32 %v3275, 1.442695
        %v3277 = vpow.pop %v3276
        %v3278 = vsel %vm2336, %v3277, 0.0
        %3279 = vadd.xlane.f32.xlu0 %v3278
        %v3280 = vpop.xlane.xlu0 %3279
        %v3281 = vrcp.pop %v3280
        %v3282 = vmul.f32 %v3277, %v3281
        %v3283 = vpack.c.bf16 %v3282, %v3282
        %3284 = vrot.lane.b32.xlu0 %v2994, 80
        %v3285 = vpop.permute.xlu0 %3284
        %v3287 = vsel %vm2336, %v3283, 0
        %v3290 = vsel %vm2356, %v3285, 0
        %3292 = vmatprep.subr.bf16.mxu0 0
        %3293 = vmatpush1.bf16.msra.mxu0 %v3290
        %3294 = vmatprep.subr.bf16.mxu0 0
        %3295 = vmatpush1.bf16.msra.mxu0 0
        %3296 = vmatprep.subr.bf16.mxu0 0
        %3297 = vmatpush1.bf16.msra.mxu0 0
        %3298 = vmatprep.subr.bf16.mxu0 0
        %3299 = vmatpush1.bf16.msra.mxu0 0
        %3300 = vmatprep.subr.bf16.mxu0 0
        %3301 = vmatpush1.bf16.msra.mxu0 0
        %3302 = vmatprep.subr.bf16.mxu0 0
        %3303 = vmatpush1.bf16.msra.mxu0 0
        %3304 = vmatprep.subr.bf16.mxu0 0
        %3305 = vmatpush1.bf16.msra.mxu0 0
        %3306 = vmatprep.subr.bf16.mxu0 0
        %3307 = vmatpush1.bf16.msra.mxu0 0
        %3308 = vmatprep.subr.bf16.mxu0 0
        %3309 = vmatpush1.bf16.msra.mxu0 0
        %3310 = vmatprep.subr.bf16.mxu0 0
        %3311 = vmatpush1.bf16.msra.mxu0 0
        %3312 = vmatprep.subr.bf16.mxu0 0
        %3313 = vmatpush1.bf16.msra.mxu0 0
        %3314 = vmatprep.subr.bf16.mxu0 0
        %3315 = vmatpush1.bf16.msra.mxu0 0
        %3316 = vmatprep.subr.bf16.mxu0 0
        %3317 = vmatpush1.bf16.msra.mxu0 0
        %3318 = vmatprep.subr.bf16.mxu0 0
        %3319 = vmatpush1.bf16.msra.mxu0 0
        %3320 = vmatprep.subr.bf16.mxu0 0
        %3321 = vmatpush1.bf16.msra.mxu0 0
        %3322 = vmatprep.subr.bf16.mxu0 0
        %3323 = vmatpush1.bf16.msra.mxu0 0
        %3324 = vmatprep.mubr.bf16.mxu0 0
        %3325 = vmatmul.mubr.bf16.gmra.mrb[0].mxu0 %v3287
        %v3326 = vpop.f32.mrb[0].mxu0
        %v3327 = vadd.f32 0.0, %v3326
        %v3328 = vpop.f32.mrb[0].mxu0
        %v3329 = vpop.f32.mrb[0].mxu0
        %v3330 = vpop.f32.mrb[0].mxu0
        %3331 = vdwg.mxu0
        %3332 = vrot.lane.b32.xlu0 %v2168, 104
        %v3333 = vpop.permute.xlu0 %3332
        %3334 = vrot.lane.b32.xlu0 %v2889, 104
        %v3335 = vpop.permute.xlu0 %3334
        %3336 = vrot.lane.b32.xlu0 %v2892, 104
        %v3337 = vpop.permute.xlu0 %3336
        %v3338 = vsel %vm828, %v3333, 0
        %v3340 = vsel %vm828, %v3335, 0
        %v3342 = vsel %vm828, %v3337, 0
        %3344 = vmatprep.subr.mxu0 0.0
        %3345 = vmatpush1.xpose.msra.mxu0 %v3340
        %3346 = vmatprep.subr.mxu0 0.0
        %3347 = vmatpush1.xpose.msra.mxu0 %v3342
        %3348 = vmatprep.subr.mxu0 0.0
        %3349 = vmatpush1.xpose.msra.mxu0 0.0
        %3350 = vmatprep.subr.mxu0 0.0
        %3351 = vmatpush1.xpose.msra.mxu0 0.0
        %3352 = vmatprep.subr.mxu0 0.0
        %3353 = vmatpush1.xpose.msra.mxu0 0.0
        %3354 = vmatprep.subr.mxu0 0.0
        %3355 = vmatpush1.xpose.msra.mxu0 0.0
        %3356 = vmatprep.subr.mxu0 0.0
        %3357 = vmatpush1.xpose.msra.mxu0 0.0
        %3358 = vmatprep.subr.mxu0 0.0
        %3359 = vmatpush1.xpose.msra.mxu0 0.0
        %3360 = vmatprep.subr.mxu0 0.0
        %3361 = vmatpush1.xpose.msra.mxu0 0.0
        %3362 = vmatprep.subr.mxu0 0.0
        %3363 = vmatpush1.xpose.msra.mxu0 0.0
        %3364 = vmatprep.subr.mxu0 0.0
        %3365 = vmatpush1.xpose.msra.mxu0 0.0
        %3366 = vmatprep.subr.mxu0 0.0
        %3367 = vmatpush1.xpose.msra.mxu0 0.0
        %3368 = vmatprep.subr.mxu0 0.0
        %3369 = vmatpush1.xpose.msra.mxu0 0.0
        %3370 = vmatprep.subr.mxu0 0.0
        %3371 = vmatpush1.xpose.msra.mxu0 0.0
        %3372 = vmatprep.subr.mxu0 0.0
        %3373 = vmatpush1.xpose.msra.mxu0 0.0
        %3374 = vmatprep.subr.mxu0 0.0
        %3375 = vmatpush1.xpose.msra.mxu0 0.0
        %3376 = vmatprep.subr.mxu0 0.0
        %3377 = vmatpush1.xpose.msra.mxu0 0.0
        %3378 = vmatprep.subr.mxu0 0.0
        %3379 = vmatpush1.xpose.msra.mxu0 0.0
        %3380 = vmatprep.subr.mxu0 0.0
        %3381 = vmatpush1.xpose.msra.mxu0 0.0
        %3382 = vmatprep.subr.mxu0 0.0
        %3383 = vmatpush1.xpose.msra.mxu0 0.0
        %3384 = vmatprep.subr.mxu0 0.0
        %3385 = vmatpush1.xpose.msra.mxu0 0.0
        %3386 = vmatprep.subr.mxu0 0.0
        %3387 = vmatpush1.xpose.msra.mxu0 0.0
        %3388 = vmatprep.subr.mxu0 0.0
        %3389 = vmatpush1.xpose.msra.mxu0 0.0
        %3390 = vmatprep.subr.mxu0 0.0
        %3391 = vmatpush1.xpose.msra.mxu0 0.0
        %3392 = vmatprep.subr.mxu0 0.0
        %3393 = vmatpush1.xpose.msra.mxu0 0.0
        %3394 = vmatprep.subr.mxu0 0.0
        %3395 = vmatpush1.xpose.msra.mxu0 0.0
        %3396 = vmatprep.subr.mxu0 0.0
        %3397 = vmatpush1.xpose.msra.mxu0 0.0
        %3398 = vmatprep.subr.mxu0 0.0
        %3399 = vmatpush1.xpose.msra.mxu0 0.0
        %3400 = vmatprep.subr.mxu0 0.0
        %3401 = vmatpush1.xpose.msra.mxu0 0.0
        %3402 = vmatprep.subr.mxu0 0.0
        %3403 = vmatpush1.xpose.msra.mxu0 0.0
        %3404 = vmatprep.subr.mxu0 0.0
        %3405 = vmatpush1.xpose.msra.mxu0 0.0
        %3406 = vmatprep.subr.mxu0 0.0
        %3407 = vmatpush1.xpose.msra.mxu0 0.0
        %3408 = vmatprep.mubr.f32.mxu0 0.0
        %3409 = vmatmul.mubr.f32.gmra.mrb[0].mxu0 %v3338
        %v3410 = vpop.f32.mrb[0].mxu0
        %v3411 = vadd.f32 0.0, %v3410
        %v3412 = vpop.f32.mrb[0].mxu0
        %3413 = vdwg.mxu0
        %v3414 = vmul.f32 %v3411, 0.35355338
        %v3415 = vadd.f32 %v3414, %v2979
        %v3416 = vsel %vm2336, %v3415, -inf
        %3417 = vmax.xlane.f32.xlu0 %v3416
        %v3418 = vpop.xlane.xlu0 %3417
        %v3419 = vsub.f32 %v3415, %v3418
        %v3420 = vmul.f32 %v3419, 1.442695
        %v3421 = vpow.pop %v3420
        %v3422 = vsel %vm2336, %v3421, 0.0
        %3423 = vadd.xlane.f32.xlu0 %v3422
        %v3424 = vpop.xlane.xlu0 %3423
        %v3425 = vrcp.pop %v3424
        %v3426 = vmul.f32 %v3421, %v3425
        %v3427 = vpack.c.bf16 %v3426, %v3426
        %3428 = vrot.lane.b32.xlu0 %v2994, 72
        %v3429 = vpop.permute.xlu0 %3428
        %v3431 = vsel %vm2336, %v3427, 0
        %v3434 = vsel %vm2356, %v3429, 0
        %3436 = vmatprep.subr.bf16.mxu0 0
        %3437 = vmatpush1.bf16.msra.mxu0 %v3434
        %3438 = vmatprep.subr.bf16.mxu0 0
        %3439 = vmatpush1.bf16.msra.mxu0 0
        %3440 = vmatprep.subr.bf16.mxu0 0
        %3441 = vmatpush1.bf16.msra.mxu0 0
        %3442 = vmatprep.subr.bf16.mxu0 0
        %3443 = vmatpush1.bf16.msra.mxu0 0
        %3444 = vmatprep.subr.bf16.mxu0 0
        %3445 = vmatpush1.bf16.msra.mxu0 0
        %3446 = vmatprep.subr.bf16.mxu0 0
        %3447 = vmatpush1.bf16.msra.mxu0 0
        %3448 = vmatprep.subr.bf16.mxu0 0
        %3449 = vmatpush1.bf16.msra.mxu0 0
        %3450 = vmatprep.subr.bf16.mxu0 0
        %3451 = vmatpush1.bf16.msra.mxu0 0
        %3452 = vmatprep.subr.bf16.mxu0 0
        %3453 = vmatpush1.bf16.msra.mxu0 0
        %3454 = vmatprep.subr.bf16.mxu0 0
        %3455 = vmatpush1.bf16.msra.mxu0 0
        %3456 = vmatprep.subr.bf16.mxu0 0
        %3457 = vmatpush1.bf16.msra.mxu0 0
        %3458 = vmatprep.subr.bf16.mxu0 0
        %3459 = vmatpush1.bf16.msra.mxu0 0
        %3460 = vmatprep.subr.bf16.mxu0 0
        %3461 = vmatpush1.bf16.msra.mxu0 0
        %3462 = vmatprep.subr.bf16.mxu0 0
        %3463 = vmatpush1.bf16.msra.mxu0 0
        %3464 = vmatprep.subr.bf16.mxu0 0
        %3465 = vmatpush1.bf16.msra.mxu0 0
        %3466 = vmatprep.subr.bf16.mxu0 0
        %3467 = vmatpush1.bf16.msra.mxu0 0
        %3468 = vmatprep.mubr.bf16.mxu0 0
        %3469 = vmatmul.mubr.bf16.gmra.mrb[0].mxu0 %v3431
        %v3470 = vpop.f32.mrb[0].mxu0
        %v3471 = vadd.f32 0.0, %v3470
        %v3472 = vpop.f32.mrb[0].mxu0
        %v3473 = vpop.f32.mrb[0].mxu0
        %v3474 = vpop.f32.mrb[0].mxu0
        %3475 = vdwg.mxu0
        %3477 = vrot.lane.b32.xlu0 %v3183, 8
        %v3478 = vpop.permute.xlu0 %3477
        %3481 = vrot.lane.b32.xlu0 %v3327, 16
        %v3482 = vpop.permute.xlu0 %3481
        %3485 = vrot.lane.b32.xlu0 %v3471, 24
        %v3486 = vpop.permute.xlu0 %3485
        %v3488 = vsel %vm828, %v3039, %v3478
        %v3489 = vsel %vm1401, %v3488, %v3482
        %v3490 = vsel %vm1403, %v3489, %v3486
        %v3491 = vpack.c.bf16 %v3490, %v2846
        %v3492 = vld [vmem:[%s709] sm:$0xf]
        %v3493 = vld [vmem:[%s709 + $0x4] sm:$0xf]
        %v3494 = vld [vmem:[%s709 + $0x8] sm:$0xf]
        %v3495 = vld [vmem:[%s709 + $0xc] sm:$0xf]
        %v3496 = vlaneseq
        %v3497 = vshrl.u32 %v3496, 7
        %v3498 = vsub.s32 6, %v3497
        %v3499 = vrot.slane %v742, %v3498
        %v3504 = vunpack.c.l.b16 %v3492
        %v3505 = vunpack.c.l.b16 %v3493
        %v3506 = vunpack.c.l.b16 %v3494
        %v3507 = vunpack.c.l.b16 %v3495
        %v3508 = vpack.c.b16 %v3505, %v3504
        %v3509 = vpack.c.b16 %v3507, %v3506
        %v3513 = vsel %vm771, %v3491, 0
        %3515 = vmatprep.subr.bf16.mxu0 0
        %3516 = vmatpush1.bf16.msra.mxu0 %v3508
        %3517 = vmatprep.subr.bf16.mxu0 0
        %3518 = vmatpush1.bf16.msra.mxu0 %v3509
        %3519 = vmatprep.subr.bf16.mxu0 0
        %3520 = vmatpush1.bf16.msra.mxu0 0
        %3521 = vmatprep.subr.bf16.mxu0 0
        %3522 = vmatpush1.bf16.msra.mxu0 0
        %3523 = vmatprep.subr.bf16.mxu0 0
        %3524 = vmatpush1.bf16.msra.mxu0 0
        %3525 = vmatprep.subr.bf16.mxu0 0
        %3526 = vmatpush1.bf16.msra.mxu0 0
        %3527 = vmatprep.subr.bf16.mxu0 0
        %3528 = vmatpush1.bf16.msra.mxu0 0
        %3529 = vmatprep.subr.bf16.mxu0 0
        %3530 = vmatpush1.bf16.msra.mxu0 0
        %3531 = vmatprep.subr.bf16.mxu0 0
        %3532 = vmatpush1.bf16.msra.mxu0 0
        %3533 = vmatprep.subr.bf16.mxu0 0
        %3534 = vmatpush1.bf16.msra.mxu0 0
        %3535 = vmatprep.subr.bf16.mxu0 0
        %3536 = vmatpush1.bf16.msra.mxu0 0
        %3537 = vmatprep.subr.bf16.mxu0 0
        %3538 = vmatpush1.bf16.msra.mxu0 0
        %3539 = vmatprep.subr.bf16.mxu0 0
        %3540 = vmatpush1.bf16.msra.mxu0 0
        %3541 = vmatprep.subr.bf16.mxu0 0
        %3542 = vmatpush1.bf16.msra.mxu0 0
        %3543 = vmatprep.subr.bf16.mxu0 0
        %3544 = vmatpush1.bf16.msra.mxu0 0
        %3545 = vmatprep.subr.bf16.mxu0 0
        %3546 = vmatpush1.bf16.msra.mxu0 0
        %3547 = vmatprep.mubr.bf16.mxu0 0
        %3548 = vmatmul.mubr.bf16.gmra.mrb[0].mxu0 %v3513
        %v3549 = vpop.f32.mrb[0].mxu0
        %v3550 = vadd.f32 %v3499, %v3549
        %v3551 = vpop.f32.mrb[0].mxu0
        %v3552 = vpop.f32.mrb[0].mxu0
        %v3553 = vadd.f32 %v3499, %v3552
        %v3554 = vpop.f32.mrb[0].mxu0
        %3555 = vdwg.mxu0
        %v3556 = vadd.f32 %v3550, %v2104
        %v3557 = vadd.f32 %v3553, %v2105
        %v3558 = vsel %vm771, %v3556, 0.0
        %3559 = vadd.xlane.f32.xlu0 %v3558
        %v3560 = vpop.xlane.xlu0 %3559
        %v3561 = vsel %vm771, %v3557, 0.0
        %3562 = vadd.xlane.f32.xlu0 %v3561
        %v3563 = vpop.xlane.xlu0 %3562
        %v3564 = vmul.f32 %v3560, %v2061
        %v3565 = vmul.f32 %v3563, %v2061
        %v3566 = vsub.f32 %v3556, %v3564
        %v3567 = vsub.f32 %v3557, %v3565
        %v3568 = vmul.f32 %v3566, %v3566
        %v3569 = vmul.f32 %v3567, %v3567
        %v3570 = vsel %vm771, %v3568, 0.0
        %3571 = vadd.xlane.f32.xlu0 %v3570
        %v3572 = vpop.xlane.xlu0 %3571
        %v3573 = vsel %vm771, %v3569, 0.0
        %3574 = vadd.xlane.f32.xlu0 %v3573
        %v3575 = vpop.xlane.xlu0 %3574
        %v3576 = vmul.f32 %v3572, %v2061
        %v3577 = vmul.f32 %v3575, %v2061
        %v3578 = vadd.f32 %v3576, 1e-05
        %v3579 = vadd.f32 %v3577, 1e-05
        %v3580 = vrsqrt.pop %v3578
        %v3581 = vrsqrt.pop %v3579
        %v3582 = vmul.f32 %v3566, %v3580
        %v3583 = vmul.f32 %v3567, %v3581
        %v3584 = vlaneseq
        %v3585 = vshrl.u32 %v3584, 7
        %v3586 = vsub.s32 7, %v3585
        %v3587 = vrot.slane %v742, %v3586
        %v3588 = vmul.f32 %v3582, %v3587
        %v3589 = vmul.f32 %v3583, %v3587
        %v3590 = vlaneseq
        %v3591 = vshrl.u32 %v3590, 7
        %v3592 = vsub.s32 0, %v3591
        %v3593 = vrot.slane %v743, %v3592
        %v3594 = vadd.f32 %v3588, %v3593
        %v3595 = vadd.f32 %v3589, %v3593
        %v3596 = vmul.f32 %v3594, %v2097
        %v3597 = vmul.f32 %v3595, %v2102
        %v3598 = vpack.c.bf16 %v3597, %v3596
        %v3599 = vld [vmem:[%s714] sm:$0xf]
        %v3600 = vld [vmem:[%s714 + $0x4] sm:$0xf]
        %v3601 = vld [vmem:[%s714 + $0x8] sm:$0xf]
        %v3602 = vld [vmem:[%s714 + $0xc] sm:$0xf]
        %v3603 = vlaneseq
        %v3604 = vshrl.u32 %v3603, 7
        %v3605 = vsub.s32 1, %v3604
        %v3606 = vrot.slane %v743, %v3605
        %v3611 = vunpack.c.l.b16 %v3599
        %v3612 = vunpack.c.l.b16 %v3600
        %v3613 = vunpack.c.l.b16 %v3601
        %v3614 = vunpack.c.l.b16 %v3602
        %v3615 = vpack.c.b16 %v3612, %v3611
        %v3616 = vpack.c.b16 %v3614, %v3613
        %v3620 = vsel %vm771, %v3598, 0
        %3622 = vmatprep.subr.bf16.mxu0 0
        %3623 = vmatpush1.bf16.msra.mxu0 %v3615
        %3624 = vmatprep.subr.bf16.mxu0 0
        %3625 = vmatpush1.bf16.msra.mxu0 %v3616
        %3626 = vmatprep.subr.bf16.mxu0 0
        %3627 = vmatpush1.bf16.msra.mxu0 0
        %3628 = vmatprep.subr.bf16.mxu0 0
        %3629 = vmatpush1.bf16.msra.mxu0 0
        %3630 = vmatprep.subr.bf16.mxu0 0
        %3631 = vmatpush1.bf16.msra.mxu0 0
        %3632 = vmatprep.subr.bf16.mxu0 0
        %3633 = vmatpush1.bf16.msra.mxu0 0
        %3634 = vmatprep.subr.bf16.mxu0 0
        %3635 = vmatpush1.bf16.msra.mxu0 0
        %3636 = vmatprep.subr.bf16.mxu0 0
        %3637 = vmatpush1.bf16.msra.mxu0 0
        %3638 = vmatprep.subr.bf16.mxu0 0
        %3639 = vmatpush1.bf16.msra.mxu0 0
        %3640 = vmatprep.subr.bf16.mxu0 0
        %3641 = vmatpush1.bf16.msra.mxu0 0
        %3642 = vmatprep.subr.bf16.mxu0 0
        %3643 = vmatpush1.bf16.msra.mxu0 0
        %3644 = vmatprep.subr.bf16.mxu0 0
        %3645 = vmatpush1.bf16.msra.mxu0 0
        %3646 = vmatprep.subr.bf16.mxu0 0
        %3647 = vmatpush1.bf16.msra.mxu0 0
        %3648 = vmatprep.subr.bf16.mxu0 0
        %3649 = vmatpush1.bf16.msra.mxu0 0
        %3650 = vmatprep.subr.bf16.mxu0 0
        %3651 = vmatpush1.bf16.msra.mxu0 0
        %3652 = vmatprep.subr.bf16.mxu0 0
        %3653 = vmatpush1.bf16.msra.mxu0 0
        %3654 = vmatprep.mubr.bf16.mxu0 0
        %3655 = vmatmul.mubr.bf16.gmra.mrb[0].mxu0 %v3620
        %v3656 = vpop.f32.mrb[0].mxu0
        %v3657 = vadd.f32 %v3606, %v3656
        %v3658 = vpop.f32.mrb[0].mxu0
        %v3659 = vpop.f32.mrb[0].mxu0
        %v3660 = vadd.f32 %v3606, %v3659
        %v3661 = vpop.f32.mrb[0].mxu0
        %3662 = vdwg.mxu0
        %v3663 = vmax.f32 %v3657, 0.0
        %v3664 = vmax.f32 %v3660, 0.0
        %v3665 = vpack.c.bf16 %v3664, %v3663
        %v3666 = vld [vmem:[%s719] sm:$0xf]
        %v3667 = vld [vmem:[%s719 + $0x4] sm:$0xf]
        %v3668 = vld [vmem:[%s719 + $0x8] sm:$0xf]
        %v3669 = vld [vmem:[%s719 + $0xc] sm:$0xf]
        %v3670 = vld [vmem:[%s719 + $0x10] sm:$0xf]
        %v3671 = vld [vmem:[%s719 + $0x14] sm:$0xf]
        %v3672 = vld [vmem:[%s719 + $0x18] sm:$0xf]
        %v3673 = vld [vmem:[%s719 + $0x1c] sm:$0xf]
        %v3674 = vlaneseq
        %v3675 = vshrl.u32 %v3674, 7
        %v3676 = vsub.s32 2, %v3675
        %v3677 = vrot.slane %v743, %v3676
        %v3686 = vunpack.c.l.b16 %v3666
        %v3687 = vunpack.c.l.b16 %v3667
        %v3688 = vunpack.c.l.b16 %v3668
        %v3689 = vunpack.c.l.b16 %v3669
        %v3690 = vunpack.c.l.b16 %v3670
        %v3691 = vunpack.c.l.b16 %v3671
        %v3692 = vunpack.c.l.b16 %v3672
        %v3693 = vunpack.c.l.b16 %v3673
        %v3694 = vpack.c.b16 %v3687, %v3686
        %v3695 = vpack.c.b16 %v3689, %v3688
        %v3696 = vpack.c.b16 %v3691, %v3690
        %v3697 = vpack.c.b16 %v3693, %v3692
        %vm3702 = vcmask 523264
        %v3704 = vsel %vm3702, %v3665, 0
        %3706 = vmatprep.subr.bf16.mxu0 0
        %3707 = vmatpush1.bf16.msra.mxu0 %v3694
        %3708 = vmatprep.subr.bf16.mxu0 0
        %3709 = vmatpush1.bf16.msra.mxu0 %v3695
        %3710 = vmatprep.subr.bf16.mxu0 0
        %3711 = vmatpush1.bf16.msra.mxu0 %v3696
        %3712 = vmatprep.subr.bf16.mxu0 0
        %3713 = vmatpush1.bf16.msra.mxu0 %v3697
        %3714 = vmatprep.subr.bf16.mxu0 0
        %3715 = vmatpush1.bf16.msra.mxu0 0
        %3716 = vmatprep.subr.bf16.mxu0 0
        %3717 = vmatpush1.bf16.msra.mxu0 0
        %3718 = vmatprep.subr.bf16.mxu0 0
        %3719 = vmatpush1.bf16.msra.mxu0 0
        %3720 = vmatprep.subr.bf16.mxu0 0
        %3721 = vmatpush1.bf16.msra.mxu0 0
        %3722 = vmatprep.subr.bf16.mxu0 0
        %3723 = vmatpush1.bf16.msra.mxu0 0
        %3724 = vmatprep.subr.bf16.mxu0 0
        %3725 = vmatpush1.bf16.msra.mxu0 0
        %3726 = vmatprep.subr.bf16.mxu0 0
        %3727 = vmatpush1.bf16.msra.mxu0 0
        %3728 = vmatprep.subr.bf16.mxu0 0
        %3729 = vmatpush1.bf16.msra.mxu0 0
        %3730 = vmatprep.subr.bf16.mxu0 0
        %3731 = vmatpush1.bf16.msra.mxu0 0
        %3732 = vmatprep.subr.bf16.mxu0 0
        %3733 = vmatpush1.bf16.msra.mxu0 0
        %3734 = vmatprep.subr.bf16.mxu0 0
        %3735 = vmatpush1.bf16.msra.mxu0 0
        %3736 = vmatprep.subr.bf16.mxu0 0
        %3737 = vmatpush1.bf16.msra.mxu0 0
        %3738 = vmatprep.mubr.bf16.mxu0 0
        %3739 = vmatmul.mubr.bf16.gmra.mrb[0].mxu0 %v3704
        %v3740 = vpop.f32.mrb[0].mxu0
        %v3741 = vadd.f32 %v3677, %v3740
        %v3742 = vpop.f32.mrb[0].mxu0
        %v3743 = vpop.f32.mrb[0].mxu0
        %v3744 = vadd.f32 %v3677, %v3743
        %v3745 = vpop.f32.mrb[0].mxu0
        %3746 = vdwg.mxu0
        %v3747 = vadd.f32 %v3741, %v3596
        %v3748 = vadd.f32 %v3744, %v3597
        %v3749 = vsel %vm771, %v3747, 0.0
        %3750 = vadd.xlane.f32.xlu0 %v3749
        %v3751 = vpop.xlane.xlu0 %3750
        %v3752 = vsel %vm771, %v3748, 0.0
        %3753 = vadd.xlane.f32.xlu0 %v3752
        %v3754 = vpop.xlane.xlu0 %3753
        %v3755 = vmul.f32 %v3751, %v2061
        %v3756 = vmul.f32 %v3754, %v2061
        %v3757 = vsub.f32 %v3747, %v3755
        %v3758 = vsub.f32 %v3748, %v3756
        %v3759 = vmul.f32 %v3757, %v3757
        %v3760 = vmul.f32 %v3758, %v3758
        %v3761 = vsel %vm771, %v3759, 0.0
        %3762 = vadd.xlane.f32.xlu0 %v3761
        %v3763 = vpop.xlane.xlu0 %3762
        %v3764 = vsel %vm771, %v3760, 0.0
        %3765 = vadd.xlane.f32.xlu0 %v3764
        %v3766 = vpop.xlane.xlu0 %3765
        %v3767 = vmul.f32 %v3763, %v2061
        %v3768 = vmul.f32 %v3766, %v2061
        %v3769 = vadd.f32 %v3767, 1e-05
        %v3770 = vadd.f32 %v3768, 1e-05
        %v3771 = vrsqrt.pop %v3769
        %v3772 = vrsqrt.pop %v3770
        %v3773 = vmul.f32 %v3757, %v3771
        %v3774 = vmul.f32 %v3758, %v3772
        %v3775 = vlaneseq
        %v3776 = vshrl.u32 %v3775, 7
        %v3777 = vsub.s32 3, %v3776
        %v3778 = vrot.slane %v743, %v3777
        %v3779 = vmul.f32 %v3773, %v3778
        %v3780 = vmul.f32 %v3774, %v3778
        %v3781 = vlaneseq
        %v3782 = vshrl.u32 %v3781, 7
        %v3783 = vsub.s32 4, %v3782
        %v3784 = vrot.slane %v743, %v3783
        %v3785 = vadd.f32 %v3779, %v3784
        %v3786 = vadd.f32 %v3780, %v3784
        %v3787 = vmul.f32 %v3785, %v2097
        %v3788 = vmul.f32 %v3786, %v2102
        %3789 = vst.msk [vmem:[#allocation2] sm:$0xff] %vm771, %v3787
        %3790 = vst.msk [vmem:[#allocation2 + $0x8] sm:$0xff] %vm771, %v3788
        %p3791 = scmp.eq.s32.totalorder %s33, 1
        // Predicated region
        $region81: #{_lambda_.1} parent=75 // pred_check
          %p3792 = pneg %p3791
        $region82: #{_lambda_.1} parent=75 // pred_check_branch
          %3794 = sbr.rel (%p3792) target = $region84
        $region83: #{_lambda_.1} parent=75 // pred_region
          %v3795 = vld [vmem:[%s13] sm:$0xff]
          %v3796 = vld [vmem:[%s13 + $0x8] sm:$0xff]
          %v3797 = vld [vmem:[%s13 + $0x10] sm:$0xff]
          %v3798 = vld [vmem:[%s13 + $0x18] sm:$0xff]
          %v3800 = vsel %vm771, %v3787, 0
          %v3803 = vsel %vm771, %v3788, 0
          %3805 = vmatprep.subr.mxu0 0.0
          %3806 = vmatpush1.msra.mxu0 %v3795
          %3807 = vmatprep.subr.mxu0 0.0
          %3808 = vmatpush1.msra.mxu0 %v3796
          %3809 = vmatprep.subr.mxu0 0.0
          %3810 = vmatpush1.msra.mxu0 %v3797
          %3811 = vmatprep.subr.mxu0 0.0
          %3812 = vmatpush1.msra.mxu0 %v3798
          %3813 = vmatprep.subr.mxu0 0.0
          %3814 = vmatpush1.msra.mxu0 0.0
          %3815 = vmatprep.subr.mxu0 0.0
          %3816 = vmatpush1.msra.mxu0 0.0
          %3817 = vmatprep.subr.mxu0 0.0
          %3818 = vmatpush1.msra.mxu0 0.0
          %3819 = vmatprep.subr.mxu0 0.0
          %3820 = vmatpush1.msra.mxu0 0.0
          %3821 = vmatprep.subr.mxu0 0.0
          %3822 = vmatpush1.msra.mxu0 0.0
          %3823 = vmatprep.subr.mxu0 0.0
          %3824 = vmatpush1.msra.mxu0 0.0
          %3825 = vmatprep.subr.mxu0 0.0
          %3826 = vmatpush1.msra.mxu0 0.0
          %3827 = vmatprep.subr.mxu0 0.0
          %3828 = vmatpush1.msra.mxu0 0.0
          %3829 = vmatprep.subr.mxu0 0.0
          %3830 = vmatpush1.msra.mxu0 0.0
          %3831 = vmatprep.subr.mxu0 0.0
          %3832 = vmatpush1.msra.mxu0 0.0
          %3833 = vmatprep.subr.mxu0 0.0
          %3834 = vmatpush1.msra.mxu0 0.0
          %3835 = vmatprep.subr.mxu0 0.0
          %3836 = vmatpush1.msra.mxu0 0.0
          %3837 = vmatprep.subr.mxu0 0.0
          %3838 = vmatpush1.msra.mxu0 0.0
          %3839 = vmatprep.subr.mxu0 0.0
          %3840 = vmatpush1.msra.mxu0 0.0
          %3841 = vmatprep.subr.mxu0 0.0
          %3842 = vmatpush1.msra.mxu0 0.0
          %3843 = vmatprep.subr.mxu0 0.0
          %3844 = vmatpush1.msra.mxu0 0.0
          %3845 = vmatprep.subr.mxu0 0.0
          %3846 = vmatpush1.msra.mxu0 0.0
          %3847 = vmatprep.subr.mxu0 0.0
          %3848 = vmatpush1.msra.mxu0 0.0
          %3849 = vmatprep.subr.mxu0 0.0
          %3850 = vmatpush1.msra.mxu0 0.0
          %3851 = vmatprep.subr.mxu0 0.0
          %3852 = vmatpush1.msra.mxu0 0.0
          %3853 = vmatprep.subr.mxu0 0.0
          %3854 = vmatpush1.msra.mxu0 0.0
          %3855 = vmatprep.subr.mxu0 0.0
          %3856 = vmatpush1.msra.mxu0 0.0
          %3857 = vmatprep.subr.mxu0 0.0
          %3858 = vmatpush1.msra.mxu0 0.0
          %3859 = vmatprep.subr.mxu0 0.0
          %3860 = vmatpush1.msra.mxu0 0.0
          %3861 = vmatprep.subr.mxu0 0.0
          %3862 = vmatpush1.msra.mxu0 0.0
          %3863 = vmatprep.subr.mxu0 0.0
          %3864 = vmatpush1.msra.mxu0 0.0
          %3865 = vmatprep.subr.mxu0 0.0
          %3866 = vmatpush1.msra.mxu0 0.0
          %3867 = vmatprep.subr.mxu0 0.0
          %3868 = vmatpush1.msra.mxu0 0.0
          %3869 = vmatprep.mubr.f32.mxu0 0.0
          %3870 = vmatmul.mubr.f32.gmra.mrb[0].mxu0 %v3800
          %v3871 = vpop.f32.mrb[0].mxu0
          %v3872 = vadd.f32 0.0, %v3871
          %v3873 = vpop.f32.mrb[0].mxu0
          %3874 = vmatprep.mubr.f32.mxu0 0.0
          %3875 = vmatmul.mubr.f32.gmra.mrb[0].mxu0 %v3803
          %v3876 = vpop.f32.mrb[0].mxu0
          %v3877 = vadd.f32 0.0, %v3876
          %v3878 = vpop.f32.mrb[0].mxu0
          %3879 = vdwg.mxu0
          %s3880 = scalar_lea.vmem %s13, 32
          %v3881 = vld [vmem:[%s3880] sm:$0xff]
          %v3882 = vld [vmem:[%s3880 + $0x8] sm:$0xff]
          %v3883 = vld [vmem:[%s3880 + $0x10] sm:$0xff]
          %v3884 = vld [vmem:[%s3880 + $0x18] sm:$0xff]
          %3885 = vmatprep.subr.mxu0 0.0
          %3886 = vmatpush1.msra.mxu0 %v3881
          %3887 = vmatprep.subr.mxu0 0.0
          %3888 = vmatpush1.msra.mxu0 %v3882
          %3889 = vmatprep.subr.mxu0 0.0
          %3890 = vmatpush1.msra.mxu0 %v3883
          %3891 = vmatprep.subr.mxu0 0.0
          %3892 = vmatpush1.msra.mxu0 %v3884
          %3893 = vmatprep.subr.mxu0 0.0
          %3894 = vmatpush1.msra.mxu0 0.0
          %3895 = vmatprep.subr.mxu0 0.0
          %3896 = vmatpush1.msra.mxu0 0.0
          %3897 = vmatprep.subr.mxu0 0.0
          %3898 = vmatpush1.msra.mxu0 0.0
          %3899 = vmatprep.subr.mxu0 0.0
          %3900 = vmatpush1.msra.mxu0 0.0
          %3901 = vmatprep.subr.mxu0 0.0
          %3902 = vmatpush1.msra.mxu0 0.0
          %3903 = vmatprep.subr.mxu0 0.0
          %3904 = vmatpush1.msra.mxu0 0.0
          %3905 = vmatprep.subr.mxu0 0.0
          %3906 = vmatpush1.msra.mxu0 0.0
          %3907 = vmatprep.subr.mxu0 0.0
          %3908 = vmatpush1.msra.mxu0 0.0
          %3909 = vmatprep.subr.mxu0 0.0
          %3910 = vmatpush1.msra.mxu0 0.0
          %3911 = vmatprep.subr.mxu0 0.0
          %3912 = vmatpush1.msra.mxu0 0.0
          %3913 = vmatprep.subr.mxu0 0.0
          %3914 = vmatpush1.msra.mxu0 0.0
          %3915 = vmatprep.subr.mxu0 0.0
          %3916 = vmatpush1.msra.mxu0 0.0
          %3917 = vmatprep.subr.mxu0 0.0
          %3918 = vmatpush1.msra.mxu0 0.0
          %3919 = vmatprep.subr.mxu0 0.0
          %3920 = vmatpush1.msra.mxu0 0.0
          %3921 = vmatprep.subr.mxu0 0.0
          %3922 = vmatpush1.msra.mxu0 0.0
          %3923 = vmatprep.subr.mxu0 0.0
          %3924 = vmatpush1.msra.mxu0 0.0
          %3925 = vmatprep.subr.mxu0 0.0
          %3926 = vmatpush1.msra.mxu0 0.0
          %3927 = vmatprep.subr.mxu0 0.0
          %3928 = vmatpush1.msra.mxu0 0.0
          %3929 = vmatprep.subr.mxu0 0.0
          %3930 = vmatpush1.msra.mxu0 0.0
          %3931 = vmatprep.subr.mxu0 0.0
          %3932 = vmatpush1.msra.mxu0 0.0
          %3933 = vmatprep.subr.mxu0 0.0
          %3934 = vmatpush1.msra.mxu0 0.0
          %3935 = vmatprep.subr.mxu0 0.0
          %3936 = vmatpush1.msra.mxu0 0.0
          %3937 = vmatprep.subr.mxu0 0.0
          %3938 = vmatpush1.msra.mxu0 0.0
          %3939 = vmatprep.subr.mxu0 0.0
          %3940 = vmatpush1.msra.mxu0 0.0
          %3941 = vmatprep.subr.mxu0 0.0
          %3942 = vmatpush1.msra.mxu0 0.0
          %3943 = vmatprep.subr.mxu0 0.0
          %3944 = vmatpush1.msra.mxu0 0.0
          %3945 = vmatprep.subr.mxu0 0.0
          %3946 = vmatpush1.msra.mxu0 0.0
          %3947 = vmatprep.subr.mxu0 0.0
          %3948 = vmatpush1.msra.mxu0 0.0
          %3949 = vmatprep.mubr.f32.mxu0 0.0
          %3950 = vmatmul.mubr.f32.gmra.mrb[0].mxu0 %v3800
          %v3951 = vpop.f32.mrb[0].mxu0
          %v3952 = vadd.f32 0.0, %v3951
          %v3953 = vpop.f32.mrb[0].mxu0
          %3954 = vmatprep.mubr.f32.mxu0 0.0
          %3955 = vmatmul.mubr.f32.gmra.mrb[0].mxu0 %v3803
          %v3956 = vpop.f32.mrb[0].mxu0
          %v3957 = vadd.f32 0.0, %v3956
          %v3958 = vpop.f32.mrb[0].mxu0
          %3959 = vdwg.mxu0
          %v3960 = vmax.f32 %v3872, %v3952
          %v3961 = vmax.f32 %v3877, %v3957
          %3962 = vst.msk [vmem:[%s655] sm:$0xff] %vm1401, %v3960
          %s3963 = scalar_lea.vmem %s655, 8 [#allocation3]
          %3964 = vst.msk [vmem:[%s3963] sm:$0xff] %vm1401, %v3961
        $region84: #{_lambda_.1} parent=75 // pred_fallthru
          _
        %s3965 = sand.u32 %s407, 1
        %s3966 = scalar_lea.sflag [#allocation4], %s3965
        %s3967 = sand.u32 %s407, 1
        %s3968 = smul.addr %s3967, 16
        %s3969 = scalar_lea.vmem [#allocation3], %s3968
        // Predicated region
        $region85: #{_lambda_.1} parent=75 // pred_check
          %p3970 = pneg %p417
        $region86: #{_lambda_.1} parent=75 // pred_check_branch
          %3972 = sbr.rel (%p3970) target = $region88
        $region87: #{_lambda_.1} parent=75 // pred_region
          %s3973 = smul.u32 2, %s32
          %s3975 = ssub.s32 256, 256
          %3976 = vsyncadd %s3966, %s3975
          %s3977 = smul.addr %s3973, 128
          %s3978 = scalar_lea.hbm %s14, %s3977
          %s3979 = sshll.u32 %s3969, 4
          %s3980 = int_to_ptr.vmem [resolvable:$true] %s3979
          %3985 = dma.vmem_to_hbm [thread:$0]  %s3980, 256, %s3978, %s3966, 128, 128, 8
        $region88: #{_lambda_.1} parent=75 // pred_fallthru
          _
      $region76: #{_lambda_.1} parent=5 // pred_fallthru
        _
      %p3986 = scmp.le.s32.totalorder 2, %s23
      // Predicated region
      $region89: #{_lambda_.1} parent=5 // pred_check
        %p3987 = pneg %p3986
      $region90: #{_lambda_.1} parent=5 // pred_check_branch
        %3989 = sbr.rel (%p3987) target = $region92
      $region91: #{_lambda_.1} parent=5 // pred_region
        %s3990 = ssub.s32 %s23, 2
        // Predicated region
        $region93: #{_lambda_.1} parent=91 // pred_check
          %p3991 = pneg %p423
        $region94: #{_lambda_.1} parent=91 // pred_check_branch
          %3993 = sbr.rel (%p3991) target = $region96
        $region95: #{_lambda_.1} parent=91 // pred_region
          %s3994 = sand.u32 %s408, 1
          %s3995 = scalar_lea.sflag [#allocation4], %s3994
          %s3996 = sand.u32 %s408, 1
          %s3997 = smul.addr %s3996, 16
          %s3998 = scalar_lea.vmem [#allocation3], %s3997
          %3999 = dma.done %s3995, 256
        $region96: #{_lambda_.1} parent=91 // pred_fallthru
          _
      $region92: #{_lambda_.1} parent=5 // pred_fallthru
        _
    $region6: #{_lambda_.1} parent=1 // loop_footer
      %s27 = sadd.s32 1, %s23
    $region7: #{_lambda_.1} parent=1 // loop_footer_branch
      %22 = sbr.rel target = $region3
    $region8: #{_lambda_.1} parent=1 // loop_exit
      _
    %4000 = vsyncpa [#allocation4], 1
    %s4001 = scalar_lea.sflag [#allocation4], 1
    %4002 = vsyncpa %s4001, 1

</llo_original>
